<compile_context>
chip_gen: v6e
topology: v6e:2x2x1
jax: 0.10.0
libtpu: 0.0.40
codegen_flags: <defaults>
</compile_context>

<pallas_src>
import functools

import jax
import jax.numpy as jnp
from jax.experimental import pallas as pl
from jax.experimental.pallas import tpu as pltpu

EPS = 1e-5
LANE = 128


def _round_up(x, m):
    return (x + m - 1) // m * m


def _tpu_tile_config(cout_p, tile_m_max=None):
    """Per-generation (tile_m target, scoped-VMEM limit)."""
    try:
        vmem_phys = pltpu.get_tpu_info().vmem_capacity_bytes
    except Exception:
        vmem_phys = 64 * 1024 * 1024
    if vmem_phys >= 96 * 1024 * 1024:      # v5e / v6e: 128 MiB physical VMEM
        tile_m_target = 2048
        vmem_limit = 96 * 1024 * 1024
    else:                                  # v7x: 64 MiB physical VMEM per TC
        tile_m_target = 256 if cout_p >= 1024 else 512
        vmem_limit = 48 * 1024 * 1024
    if tile_m_max is not None:
        tile_m_target = min(tile_m_target, int(tile_m_max))
    return tile_m_target, vmem_limit


def _pick_tile_m(m_flat, halo_block, cin, cout_p, tile_m_target, vmem_limit):
    """tile_m = multiple of halo_block, VMEM-feasible, and (when possible)
    giving n_tiles >= 2 so the 'parallel' grid axis feeds both v7x cores."""
    # linear VMEM model: double-buffered a / halo / weight / y / stats blocks
    # plus the im2col scratch and the f32 accumulator temp.
    c0 = (2 * halo_block * cin * 2          # halo blocks (x2 buffers)
          + 2 * 9 * cin * cout_p * 2        # resident weights (x2 buffers)
          + 2 * 8 * cout_p * 4)             # stats blocks
    c1 = (2 * cin * 2                       # a blocks
          + 2 * cout_p * 2                  # y blocks (bf16)
          + 9 * cin * 2                     # im2col LHS scratch
          + cout_p * 4)                     # f32 accumulator
    budget = int(0.75 * vmem_limit)
    max_tm_vmem = max(halo_block, (budget - c0) // max(c1, 1))
    tile_m = min(tile_m_target, max_tm_vmem)
    n_blocks = max(1, tile_m // halo_block)
    if m_flat > halo_block:                 # prefer >= 2 grid steps (megacore)
        n_blocks = min(n_blocks, max(1, (m_flat - 1) // halo_block))
    return n_blocks * halo_block


# ---------------------------------------------------------------------------
# Kernel 1: fused K=9*Cin conv matmul + per-tile raw BN statistics.
# ---------------------------------------------------------------------------
def _conv_stats_kernel(a_ref, halo_ref, w_ref, y_ref, stats_ref, lhs_ref, *,
                       tap_offsets, tile_m, cin, cout_p, wp, hp, ho, wo,
                       stride, m_flat):
    # ---- build the bf16 im2col LHS (tile_m, 9*Cin) in a VMEM scratch -------
    for t, off in enumerate(tap_offsets):                # static unroll (9)
        c0 = t * cin
        if off < tile_m:
            lhs_ref[0:tile_m - off, c0:c0 + cin] = a_ref[off:tile_m, :]
        if off > 0:
            lhs_ref[tile_m - off:tile_m, c0:c0 + cin] = halo_ref[0:off, :]

    # ---- one K = 9*Cin MXU matmul, f32 accumulation -------------------------
    acc = jnp.dot(lhs_ref[...], w_ref[...],
                  preferred_element_type=jnp.float32)     # (tile_m, Cp)

    # ---- validity mask from iota + program_id (no HBM mask stream) ----------
    img_sz = hp * wp
    base = pl.program_id(0) * tile_m                      # scalar i32
    base_in = jax.lax.rem(base, img_sz)                   # scalar rem only
    r_iota = jax.lax.broadcasted_iota(jnp.int32, (tile_m, 1), 0)
    row = base + r_iota                                   # global flat row
    row_in = base_in + r_iota                             # < img_sz + tile_m
    # exact integer floor-div by small constants via f32 (operands << 2^22)
    n_wrap = jnp.floor((row_in.astype(jnp.float32) + 0.5) * (1.0 / img_sz)
                       ).astype(jnp.int32)
    row_img = row_in - n_wrap * img_sz                    # index within image
    h_idx = jnp.floor((row_img.astype(jnp.float32) + 0.5) * (1.0 / wp)
                      ).astype(jnp.int32)
    w_idx = row_img - h_idx * wp
    if stride == 1:
        valid = (row < m_flat) & (h_idx < ho) & (w_idx < wo)
    else:
        hs = jnp.floor((h_idx.astype(jnp.float32) + 0.5) * (1.0 / stride)
                       ).astype(jnp.int32)
        ws = jnp.floor((w_idx.astype(jnp.float32) + 0.5) * (1.0 / stride)
                       ).astype(jnp.int32)
        valid = ((row < m_flat)
                 & (h_idx == hs * stride) & (hs < ho)
                 & (w_idx == ws * stride) & (ws < wo))
    m = valid.astype(jnp.float32)                         # (tile_m, 1)

    # ---- one masked pass -> per-tile raw sums (Chan combine in wrapper) -----
    masked = acc * m
    t_sum = jnp.sum(masked, axis=0, keepdims=True)              # (1, Cp)
    t_sq = jnp.sum(masked * masked, axis=0, keepdims=True)      # (1, Cp)
    cnt = jnp.sum(m)

    y_ref[...] = acc.astype(y_ref.dtype)                  # bf16 conv output
    stats_ref[0:1, :] = t_sum
    stats_ref[1:2, :] = t_sq
    stats_ref[2:3, :] = jnp.zeros((1, cout_p), jnp.float32) + cnt
    stats_ref[3:8, :] = jnp.zeros((5, cout_p), jnp.float32)


# ---------------------------------------------------------------------------
# Kernel 2: cheap elementwise normalize with folded per-channel scale/bias.
# ---------------------------------------------------------------------------
def _bn_apply_kernel(y_ref, scale_ref, bias_ref, o_ref):
    y = y_ref[...].astype(jnp.float32)
    o_ref[...] = (y * scale_ref[...] + bias_ref[...]).astype(o_ref.dtype)


def conv3x3_bn_nhwc(x_nhwc, weight, gamma, beta, *, stride=1, eps=EPS,
                    tile_m_max=None):
    """Conv2d(3x3, pad=1, bias=False) + BatchNorm2d(training stats), NHWC."""
    N, H, W, Cin = x_nhwc.shape
    Cout, cin_w, KH, KW = weight.shape
    assert (KH, KW) == (3, 3) and cin_w == Cin
    s = int(stride)
    Hp, Wp = H + 2, W + 2
    Ho = (Hp - 3) // s + 1
    Wo = (Wp - 3) // s + 1
    Cp = _round_up(Cout, LANE)                   # lane-dense output channels

    # ---- flat-shift formulation: pad spatially, flatten (n, hp, wp) rows ----
    xp = jnp.pad(x_nhwc, ((0, 0), (1, 1), (1, 1), (0, 0)))
    m_flat = N * Hp * Wp
    halo = 2 * Wp + 2                            # largest tap offset (kh*Wp+kw)
    halo_block = _round_up(halo, 16)             # bf16 sublane packing
    tile_m_target, vmem_limit = _tpu_tile_config(Cp, tile_m_max)
    tile_m = _pick_tile_m(m_flat, halo_block, Cin, Cp, tile_m_target,
                          vmem_limit)
    n_tiles = pl.cdiv(m_flat, tile_m)
    m_pad = n_tiles * tile_m
    bpt = tile_m // halo_block                   # halo blocks per main tile

    a = xp.reshape(m_flat, Cin).astype(jnp.bfloat16)
    # pad so the halo window of the last tile stays in bounds (zeros)
    a = jnp.pad(a, ((0, m_pad + halo_block - m_flat), (0, 0)))

    # weights: OIHW -> (9*Cin, Cout_p) so all 9 taps fuse into one K=9*Cin dot
    wk = jnp.transpose(weight, (2, 3, 1, 0)).reshape(9 * Cin, Cout)
    wk = jnp.pad(wk, ((0, 0), (0, Cp - Cout))).astype(jnp.bfloat16)

    tap_offsets = tuple(kh * Wp + kw for kh in range(3) for kw in range(3))
    kernel1 = functools.partial(
        _conv_stats_kernel, tap_offsets=tap_offsets, tile_m=tile_m, cin=Cin,
        cout_p=Cp, wp=Wp, hp=Hp, ho=Ho, wo=Wo, stride=s, m_flat=m_flat)

    flops = 2 * m_pad * 9 * Cin * Cp
    bytes_accessed = int(a.size * 2 + wk.size * 2 + m_pad * Cp * 2
                         + n_tiles * 8 * Cp * 4)

    y, stats = pl.pallas_call(
        kernel1,
        grid=(n_tiles,),
        in_specs=[
            pl.BlockSpec((tile_m, Cin), lambda i: (i, 0)),          # rows
            pl.BlockSpec((halo_block, Cin),
                         lambda i: ((i + 1) * bpt, 0)),             # halo rows
            pl.BlockSpec((9 * Cin, Cp), lambda i: (0, 0)),          # weights
        ],
        out_specs=[
            pl.BlockSpec((tile_m, Cp), lambda i: (i, 0)),           # bf16 conv
            pl.BlockSpec((8, Cp), lambda i: (i, 0)),                # tile stats
        ],
        out_shape=(
            jax.ShapeDtypeStruct((m_pad, Cp), jnp.bfloat16),
            jax.ShapeDtypeStruct((n_tiles * 8, Cp), jnp.float32),
        ),
        scratch_shapes=[pltpu.VMEM((tile_m, 9 * Cin), jnp.bfloat16)],
        compiler_params=pltpu.CompilerParams(
            dimension_semantics=("parallel",),
            vmem_limit_bytes=vmem_limit),
        cost_estimate=pl.CostEstimate(flops=flops, transcendentals=0,
                                      bytes_accessed=bytes_accessed),
    )(a, a, wk)

    # ---- exact tile-level centering + Chan combine -> biased mean / var ----
    stats = stats.reshape(n_tiles, 8, Cp)
    t_sum = stats[:, 0, :]                                   # (T, Cp)
    t_sq = stats[:, 1, :]
    n_t = stats[:, 2, 0]                                     # (T,)
    n_total = float(N * Ho * Wo)
    t_mean = t_sum / jnp.maximum(n_t, 1.0)[:, None]
    t_m2 = jnp.maximum(t_sq - t_sum * t_mean, 0.0)
    mean = t_sum.sum(axis=0) / n_total
    var = (t_m2.sum(axis=0)
           + (n_t[:, None] * (t_mean - mean[None, :]) ** 2).sum(axis=0)
           ) / n_total

    gamma_p = jnp.pad(gamma.astype(jnp.float32), (0, Cp - Cout),
                      constant_values=1.0)
    beta_p = jnp.pad(beta.astype(jnp.float32), (0, Cp - Cout))
    scale_v = gamma_p * jax.lax.rsqrt(var + eps)
    bias_v = beta_p - mean * scale_v
    scale = scale_v.reshape(1, Cp)
    bias = bias_v.reshape(1, Cp)

    # ---- pass 2: elementwise normalize, lane-dense bf16 stores, parallel ----
    out_flat = pl.pallas_call(
        _bn_apply_kernel,
        grid=(n_tiles,),
        in_specs=[
            pl.BlockSpec((tile_m, Cp), lambda i: (i, 0)),
            pl.BlockSpec((1, Cp), lambda i: (0, 0)),
            pl.BlockSpec((1, Cp), lambda i: (0, 0)),
        ],
        out_specs=pl.BlockSpec((tile_m, Cp), lambda i: (i, 0)),
        out_shape=jax.ShapeDtypeStruct((m_pad, Cp), jnp.bfloat16),
        compiler_params=pltpu.CompilerParams(
            dimension_semantics=("parallel",),
            vmem_limit_bytes=vmem_limit),
    )(y, scale, bias)

    # extract the real (strided) output positions and the true channels
    out = out_flat[:m_flat].reshape(N, Hp, Wp, Cp)
    out = out[:, :(Ho - 1) * s + 1:s, :(Wo - 1) * s + 1:s, :Cout]
    return out                                               # NHWC, bf16


def conv3x3_bn_nchw(x_nchw, weight, gamma, beta, *, stride=1, eps=EPS,
                    tile_m_max=None):
    """NCHW adapter matching the PyTorch module interface. In a full network
    you would keep NHWC end-to-end and drop these transposes."""
    x_nhwc = jnp.transpose(x_nchw, (0, 2, 3, 1))
    out = conv3x3_bn_nhwc(x_nhwc, weight, gamma, beta, stride=stride, eps=eps,
                          tile_m_max=tile_m_max)
    return jnp.transpose(out, (0, 3, 1, 2))


def _reference_nchw(x, weight, gamma, beta, stride=1, eps=EPS):
    y = jax.lax.conv_general_dilated(
        x, weight, window_strides=(stride, stride), padding=((1, 1), (1, 1)),
        dimension_numbers=("NCHW", "OIHW", "NCHW"))
    mean = jnp.mean(y, axis=(0, 2, 3), keepdims=True)
    var = jnp.mean((y - mean) ** 2, axis=(0, 2, 3), keepdims=True)  # biased
    return (y - mean) * jax.lax.rsqrt(var + eps) * gamma.reshape(1, -1, 1, 1) \
        + beta.reshape(1, -1, 1, 1)


if __name__ == "__main__":
    key = jax.random.PRNGKey(0)
    kx, kw = jax.random.split(key)

    N, Cin, H, W = 2, 4, 16, 16
    Cout = 8

    x = jax.random.normal(kx, (N, Cin, H, W), dtype=jnp.float32)
    weight = 0.1 * jax.random.normal(kw, (Cout, Cin, 3, 3), dtype=jnp.float32)
    gamma = jnp.ones((Cout,), dtype=jnp.float32)   # BatchNorm2d default weight
    beta = jnp.zeros((Cout,), dtype=jnp.float32)   # BatchNorm2d default bias

    # small tile cap so the demo exercises the multi-tile streaming-stats path
    out = conv3x3_bn_nchw(x, weight, gamma, beta, tile_m_max=256)
    out = jax.block_until_ready(out)

    ref = _reference_nchw(x, weight, gamma, beta)
    assert out.shape == (N, Cout, H, W), out.shape
    out_f32 = out.astype(jnp.float32)
    err = float(jnp.max(jnp.abs(out_f32 - ref)))
    assert jnp.allclose(out_f32, ref, atol=3e-2, rtol=3e-2), err

    print("KERNEL_OK")
</pallas_src>

<mosaic_0001>
module attributes {stable_mosaic.version = 11 : i64} {
  func.func @_conv_stats_kernel(%arg0: i32, %arg1: memref<240x4xbf16, #tpu.memory_space<vmem>>, %arg2: memref<48x4xbf16, #tpu.memory_space<vmem>>, %arg3: memref<36x128xbf16, #tpu.memory_space<vmem>>, %arg4: memref<240x128xbf16, #tpu.memory_space<vmem>>, %arg5: memref<8x128xf32, #tpu.memory_space<vmem>>, %arg6: memref<240x36xbf16, #tpu.memory_space<vmem>>) attributes {dimension_semantics = [#tpu.dimension_semantics<parallel>], iteration_bounds = array<i64: 3>, scalar_prefetch = 0 : i64, scratch_operands = 1 : i64, tpu.core_type = #tpu.core_type<tc>, window_params = [{transform_indices = @transform_0, window_bounds = array<i64: 240, 4>}, {transform_indices = @transform_1, window_bounds = array<i64: 48, 4>}, {pipeline_mode = #tpu.pipeline_mode<synchronous>, transform_indices = @transform_2, window_bounds = array<i64: 36, 128>}, {transform_indices = @transform_3, window_bounds = array<i64: 240, 128>}, {transform_indices = @transform_4, window_bounds = array<i64: 8, 128>}]} {
    %c0 = arith.constant 0 : index
    %c0_0 = arith.constant 0 : index
    %0 = vector.load %arg1[%c0, %c0_0] : memref<240x4xbf16, #tpu.memory_space<vmem>>, vector<240x4xbf16>
    %c0_1 = arith.constant 0 : index
    %c0_2 = arith.constant 0 : index
    %1 = vector.load %arg6[%c0_1, %c0_2] : memref<240x36xbf16, #tpu.memory_space<vmem>>, vector<240x4xbf16>
    tpu.vector_store %arg6[%c0_1, %c0_2], %0 {strides = array<i32>} : memref<240x36xbf16, #tpu.memory_space<vmem>>, vector<240x4xbf16>,
    %c1 = arith.constant 1 : index
    %c0_3 = arith.constant 0 : index
    %2 = vector.load %arg1[%c1, %c0_3] : memref<240x4xbf16, #tpu.memory_space<vmem>>, vector<239x4xbf16>
    %c0_4 = arith.constant 0 : index
    %c4 = arith.constant 4 : index
    %3 = vector.load %arg6[%c0_4, %c4] : memref<240x36xbf16, #tpu.memory_space<vmem>>, vector<239x4xbf16>
    tpu.vector_store %arg6[%c0_4, %c4], %2 {strides = array<i32>} : memref<240x36xbf16, #tpu.memory_space<vmem>>, vector<239x4xbf16>,
    %c0_5 = arith.constant 0 : index
    %c0_6 = arith.constant 0 : index
    %4 = vector.load %arg2[%c0_5, %c0_6] : memref<48x4xbf16, #tpu.memory_space<vmem>>, vector<1x4xbf16>
    %c239 = arith.constant 239 : index
    %c4_7 = arith.constant 4 : index
    %5 = vector.load %arg6[%c239, %c4_7] : memref<240x36xbf16, #tpu.memory_space<vmem>>, vector<1x4xbf16>
    tpu.vector_store %arg6[%c239, %c4_7], %4 {strides = array<i32>} : memref<240x36xbf16, #tpu.memory_space<vmem>>, vector<1x4xbf16>,
    %c2 = arith.constant 2 : index
    %c0_8 = arith.constant 0 : index
    %6 = vector.load %arg1[%c2, %c0_8] : memref<240x4xbf16, #tpu.memory_space<vmem>>, vector<238x4xbf16>
    %c0_9 = arith.constant 0 : index
    %c8 = arith.constant 8 : index
    %7 = vector.load %arg6[%c0_9, %c8] : memref<240x36xbf16, #tpu.memory_space<vmem>>, vector<238x4xbf16>
    tpu.vector_store %arg6[%c0_9, %c8], %6 {strides = array<i32>} : memref<240x36xbf16, #tpu.memory_space<vmem>>, vector<238x4xbf16>,
    %c0_10 = arith.constant 0 : index
    %c0_11 = arith.constant 0 : index
    %8 = vector.load %arg2[%c0_10, %c0_11] : memref<48x4xbf16, #tpu.memory_space<vmem>>, vector<2x4xbf16>
    %c238 = arith.constant 238 : index
    %c8_12 = arith.constant 8 : index
    %9 = vector.load %arg6[%c238, %c8_12] : memref<240x36xbf16, #tpu.memory_space<vmem>>, vector<2x4xbf16>
    tpu.vector_store %arg6[%c238, %c8_12], %8 {strides = array<i32>} : memref<240x36xbf16, #tpu.memory_space<vmem>>, vector<2x4xbf16>,
    %c18 = arith.constant 18 : index
    %c0_13 = arith.constant 0 : index
    %10 = vector.load %arg1[%c18, %c0_13] : memref<240x4xbf16, #tpu.memory_space<vmem>>, vector<222x4xbf16>
    %c0_14 = arith.constant 0 : index
    %c12 = arith.constant 12 : index
    %11 = vector.load %arg6[%c0_14, %c12] : memref<240x36xbf16, #tpu.memory_space<vmem>>, vector<222x4xbf16>
    tpu.vector_store %arg6[%c0_14, %c12], %10 {strides = array<i32>} : memref<240x36xbf16, #tpu.memory_space<vmem>>, vector<222x4xbf16>,
    %c0_15 = arith.constant 0 : index
    %c0_16 = arith.constant 0 : index
    %12 = vector.load %arg2[%c0_15, %c0_16] : memref<48x4xbf16, #tpu.memory_space<vmem>>, vector<18x4xbf16>
    %c222 = arith.constant 222 : index
    %c12_17 = arith.constant 12 : index
    %13 = vector.load %arg6[%c222, %c12_17] : memref<240x36xbf16, #tpu.memory_space<vmem>>, vector<18x4xbf16>
    tpu.vector_store %arg6[%c222, %c12_17], %12 {strides = array<i32>} : memref<240x36xbf16, #tpu.memory_space<vmem>>, vector<18x4xbf16>,
    %c19 = arith.constant 19 : index
    %c0_18 = arith.constant 0 : index
    %14 = vector.load %arg1[%c19, %c0_18] : memref<240x4xbf16, #tpu.memory_space<vmem>>, vector<221x4xbf16>
    %c0_19 = arith.constant 0 : index
    %c16 = arith.constant 16 : index
    %15 = vector.load %arg6[%c0_19, %c16] : memref<240x36xbf16, #tpu.memory_space<vmem>>, vector<221x4xbf16>
    tpu.vector_store %arg6[%c0_19, %c16], %14 {strides = array<i32>} : memref<240x36xbf16, #tpu.memory_space<vmem>>, vector<221x4xbf16>,
    %c0_20 = arith.constant 0 : index
    %c0_21 = arith.constant 0 : index
    %16 = vector.load %arg2[%c0_20, %c0_21] : memref<48x4xbf16, #tpu.memory_space<vmem>>, vector<19x4xbf16>
    %c221 = arith.constant 221 : index
    %c16_22 = arith.constant 16 : index
    %17 = vector.load %arg6[%c221, %c16_22] : memref<240x36xbf16, #tpu.memory_space<vmem>>, vector<19x4xbf16>
    tpu.vector_store %arg6[%c221, %c16_22], %16 {strides = array<i32>} : memref<240x36xbf16, #tpu.memory_space<vmem>>, vector<19x4xbf16>,
    %c20 = arith.constant 20 : index
    %c0_23 = arith.constant 0 : index
    %18 = vector.load %arg1[%c20, %c0_23] : memref<240x4xbf16, #tpu.memory_space<vmem>>, vector<220x4xbf16>
    %c0_24 = arith.constant 0 : index
    %c20_25 = arith.constant 20 : index
    %19 = vector.load %arg6[%c0_24, %c20_25] : memref<240x36xbf16, #tpu.memory_space<vmem>>, vector<220x4xbf16>
    tpu.vector_store %arg6[%c0_24, %c20_25], %18 {strides = array<i32>} : memref<240x36xbf16, #tpu.memory_space<vmem>>, vector<220x4xbf16>,
    %c0_26 = arith.constant 0 : index
    %c0_27 = arith.constant 0 : index
    %20 = vector.load %arg2[%c0_26, %c0_27] : memref<48x4xbf16, #tpu.memory_space<vmem>>, vector<20x4xbf16>
    %c220 = arith.constant 220 : index
    %c20_28 = arith.constant 20 : index
    %21 = vector.load %arg6[%c220, %c20_28] : memref<240x36xbf16, #tpu.memory_space<vmem>>, vector<20x4xbf16>
    tpu.vector_store %arg6[%c220, %c20_28], %20 {strides = array<i32>} : memref<240x36xbf16, #tpu.memory_space<vmem>>, vector<20x4xbf16>,
    %c36 = arith.constant 36 : index
    %c0_29 = arith.constant 0 : index
    %22 = vector.load %arg1[%c36, %c0_29] : memref<240x4xbf16, #tpu.memory_space<vmem>>, vector<204x4xbf16>
    %c0_30 = arith.constant 0 : index
    %c24 = arith.constant 24 : index
    %23 = vector.load %arg6[%c0_30, %c24] : memref<240x36xbf16, #tpu.memory_space<vmem>>, vector<204x4xbf16>
    tpu.vector_store %arg6[%c0_30, %c24], %22 {strides = array<i32>} : memref<240x36xbf16, #tpu.memory_space<vmem>>, vector<204x4xbf16>,
    %c0_31 = arith.constant 0 : index
    %c0_32 = arith.constant 0 : index
    %24 = vector.load %arg2[%c0_31, %c0_32] : memref<48x4xbf16, #tpu.memory_space<vmem>>, vector<36x4xbf16>
    %c204 = arith.constant 204 : index
    %c24_33 = arith.constant 24 : index
    %25 = vector.load %arg6[%c204, %c24_33] : memref<240x36xbf16, #tpu.memory_space<vmem>>, vector<36x4xbf16>
    tpu.vector_store %arg6[%c204, %c24_33], %24 {strides = array<i32>} : memref<240x36xbf16, #tpu.memory_space<vmem>>, vector<36x4xbf16>,
    %c37 = arith.constant 37 : index
    %c0_34 = arith.constant 0 : index
    %26 = vector.load %arg1[%c37, %c0_34] : memref<240x4xbf16, #tpu.memory_space<vmem>>, vector<203x4xbf16>
    %c0_35 = arith.constant 0 : index
    %c28 = arith.constant 28 : index
    %27 = vector.load %arg6[%c0_35, %c28] : memref<240x36xbf16, #tpu.memory_space<vmem>>, vector<203x4xbf16>
    tpu.vector_store %arg6[%c0_35, %c28], %26 {strides = array<i32>} : memref<240x36xbf16, #tpu.memory_space<vmem>>, vector<203x4xbf16>,
    %c0_36 = arith.constant 0 : index
    %c0_37 = arith.constant 0 : index
    %28 = vector.load %arg2[%c0_36, %c0_37] : memref<48x4xbf16, #tpu.memory_space<vmem>>, vector<37x4xbf16>
    %c203 = arith.constant 203 : index
    %c28_38 = arith.constant 28 : index
    %29 = vector.load %arg6[%c203, %c28_38] : memref<240x36xbf16, #tpu.memory_space<vmem>>, vector<37x4xbf16>
    tpu.vector_store %arg6[%c203, %c28_38], %28 {strides = array<i32>} : memref<240x36xbf16, #tpu.memory_space<vmem>>, vector<37x4xbf16>,
    %c38 = arith.constant 38 : index
    %c0_39 = arith.constant 0 : index
    %30 = vector.load %arg1[%c38, %c0_39] : memref<240x4xbf16, #tpu.memory_space<vmem>>, vector<202x4xbf16>
    %c0_40 = arith.constant 0 : index
    %c32 = arith.constant 32 : index
    %31 = vector.load %arg6[%c0_40, %c32] : memref<240x36xbf16, #tpu.memory_space<vmem>>, vector<202x4xbf16>
    tpu.vector_store %arg6[%c0_40, %c32], %30 {strides = array<i32>} : memref<240x36xbf16, #tpu.memory_space<vmem>>, vector<202x4xbf16>,
    %c0_41 = arith.constant 0 : index
    %c0_42 = arith.constant 0 : index
    %32 = vector.load %arg2[%c0_41, %c0_42] : memref<48x4xbf16, #tpu.memory_space<vmem>>, vector<38x4xbf16>
    %c202 = arith.constant 202 : index
    %c32_43 = arith.constant 32 : index
    %33 = vector.load %arg6[%c202, %c32_43] : memref<240x36xbf16, #tpu.memory_space<vmem>>, vector<38x4xbf16>
    tpu.vector_store %arg6[%c202, %c32_43], %32 {strides = array<i32>} : memref<240x36xbf16, #tpu.memory_space<vmem>>, vector<38x4xbf16>,
    %c0_44 = arith.constant 0 : index
    %c0_45 = arith.constant 0 : index
    %34 = vector.load %arg6[%c0_44, %c0_45] : memref<240x36xbf16, #tpu.memory_space<vmem>>, vector<240x36xbf16>
    %c0_46 = arith.constant 0 : index
    %c0_47 = arith.constant 0 : index
    %35 = vector.load %arg3[%c0_46, %c0_47] : memref<36x128xbf16, #tpu.memory_space<vmem>>, vector<36x128xbf16>
    %cst = arith.constant dense<0.000000e+00> : vector<240x128xf32>
    %36 = tpu.matmul %34, %35, %cst {dimension_numbers = #tpu.dot_dimension_numbers<[1], [0], [0], [1], [0, 0, 1, 1], [], []>} : vector<240x36xbf16>, vector<36x128xbf16>, vector<240x128xf32> -> vector<240x128xf32>
    %c240_i32 = arith.constant 240 : i32
    %37 = arith.muli %arg0, %c240_i32 : i32
    %c324_i32 = arith.constant 324 : i32
    %38 = arith.remsi %37, %c324_i32 : i32
    %39 = tpu.iota {dimensions = array<i32: 0>} : vector<240x1xi32>
    %40 = vector.broadcast %37 : i32 to vector<240x1xi32>
    %41 = arith.addi %40, %39 : vector<240x1xi32>
    %42 = vector.broadcast %38 : i32 to vector<240x1xi32>
    %43 = arith.addi %42, %39 : vector<240x1xi32>
    %44 = arith.sitofp %43 : vector<240x1xi32> to vector<240x1xf32>
    %cst_48 = arith.constant 5.000000e-01 : f32
    %45 = vector.broadcast %cst_48 : f32 to vector<240x1xf32>
    %46 = arith.addf %44, %45 : vector<240x1xf32>
    %cst_49 = arith.constant 0.00308641978 : f32
    %47 = vector.broadcast %cst_49 : f32 to vector<240x1xf32>
    %48 = arith.mulf %46, %47 : vector<240x1xf32>
    %49 = math.floor %48 : vector<240x1xf32>
    %50 = arith.fptosi %49 : vector<240x1xf32> to vector<240x1xi32>
    %c324_i32_50 = arith.constant 324 : i32
    %51 = vector.broadcast %c324_i32_50 : i32 to vector<240x1xi32>
    %52 = arith.muli %50, %51 : vector<240x1xi32>
    %53 = arith.subi %43, %52 : vector<240x1xi32>
    %54 = arith.sitofp %53 : vector<240x1xi32> to vector<240x1xf32>
    %cst_51 = arith.constant 5.000000e-01 : f32
    %55 = vector.broadcast %cst_51 : f32 to vector<240x1xf32>
    %56 = arith.addf %54, %55 : vector<240x1xf32>
    %cst_52 = arith.constant 0.055555556 : f32
    %57 = vector.broadcast %cst_52 : f32 to vector<240x1xf32>
    %58 = arith.mulf %56, %57 : vector<240x1xf32>
    %59 = math.floor %58 : vector<240x1xf32>
    %60 = arith.fptosi %59 : vector<240x1xf32> to vector<240x1xi32>
    %c18_i32 = arith.constant 18 : i32
    %61 = vector.broadcast %c18_i32 : i32 to vector<240x1xi32>
    %62 = arith.muli %60, %61 : vector<240x1xi32>
    %63 = arith.subi %53, %62 : vector<240x1xi32>
    %c648_i32 = arith.constant 648 : i32
    %64 = vector.broadcast %c648_i32 : i32 to vector<240x1xi32>
    %65 = arith.cmpi slt, %41, %64 : vector<240x1xi32>
    %c16_i32 = arith.constant 16 : i32
    %66 = vector.broadcast %c16_i32 : i32 to vector<240x1xi32>
    %67 = arith.cmpi slt, %60, %66 : vector<240x1xi32>
    %68 = arith.andi %65, %67 : vector<240x1xi1>
    %c16_i32_53 = arith.constant 16 : i32
    %69 = vector.broadcast %c16_i32_53 : i32 to vector<240x1xi32>
    %70 = arith.cmpi slt, %63, %69 : vector<240x1xi32>
    %71 = arith.andi %68, %70 : vector<240x1xi1>
    %72 = arith.extui %71 : vector<240x1xi1> to vector<240x1xi32>
    %73 = arith.sitofp %72 : vector<240x1xi32> to vector<240x1xf32>
    %74 = vector.broadcast %73 : vector<240x1xf32> to vector<240x128xf32>
    %75 = arith.mulf %36, %74 : vector<240x128xf32>
    %cst_54 = arith.constant dense<0.000000e+00> : vector<128xf32>
    %76 = vector.multi_reduction <add>, %75, %cst_54 [0] : vector<240x128xf32> to vector<128xf32>
    %77 = vector.shape_cast %76 : vector<128xf32> to vector<1x128xf32>
    %78 = arith.mulf %75, %75 : vector<240x128xf32>
    %cst_55 = arith.constant dense<0.000000e+00> : vector<128xf32>
    %79 = vector.multi_reduction <add>, %78, %cst_55 [0] : vector<240x128xf32> to vector<128xf32>
    %80 = vector.shape_cast %79 : vector<128xf32> to vector<1x128xf32>
    %81 = vector.shape_cast %73 : vector<240x1xf32> to vector<1x240x1xf32>
    %cst_56 = arith.constant dense<0.000000e+00> : vector<1xf32>
    %82 = vector.multi_reduction <add>, %81, %cst_56 [1, 2] : vector<1x240x1xf32> to vector<1xf32>
    %83 = vector.shape_cast %82 : vector<1xf32> to vector<1x1x1xf32>
    %84 = vector.extract %83[0, 0, 0] : f32 from vector<1x1x1xf32>
    %85 = arith.truncf %36 : vector<240x128xf32> to vector<240x128xbf16>
    %c0_57 = arith.constant 0 : index
    %c0_58 = arith.constant 0 : index
    %86 = vector.load %arg4[%c0_57, %c0_58] : memref<240x128xbf16, #tpu.memory_space<vmem>>, vector<240x128xbf16>
    tpu.vector_store %arg4[%c0_57, %c0_58], %85 {strides = array<i32>} : memref<240x128xbf16, #tpu.memory_space<vmem>>, vector<240x128xbf16>,
    %c0_59 = arith.constant 0 : index
    %c0_60 = arith.constant 0 : index
    %87 = vector.load %arg5[%c0_59, %c0_60] : memref<8x128xf32, #tpu.memory_space<vmem>>, vector<1x128xf32>
    tpu.vector_store %arg5[%c0_59, %c0_60], %77 {strides = array<i32>} : memref<8x128xf32, #tpu.memory_space<vmem>>, vector<1x128xf32>,
    %c1_61 = arith.constant 1 : index
    %c0_62 = arith.constant 0 : index
    %88 = vector.load %arg5[%c1_61, %c0_62] : memref<8x128xf32, #tpu.memory_space<vmem>>, vector<1x128xf32>
    tpu.vector_store %arg5[%c1_61, %c0_62], %80 {strides = array<i32>} : memref<8x128xf32, #tpu.memory_space<vmem>>, vector<1x128xf32>,
    %cst_63 = arith.constant 0.000000e+00 : f32
    %89 = vector.broadcast %cst_63 : f32 to vector<1x128xf32>
    %90 = vector.broadcast %84 : f32 to vector<1x128xf32>
    %91 = arith.addf %89, %90 : vector<1x128xf32>
    %c2_64 = arith.constant 2 : index
    %c0_65 = arith.constant 0 : index
    %92 = vector.load %arg5[%c2_64, %c0_65] : memref<8x128xf32, #tpu.memory_space<vmem>>, vector<1x128xf32>
    tpu.vector_store %arg5[%c2_64, %c0_65], %91 {strides = array<i32>} : memref<8x128xf32, #tpu.memory_space<vmem>>, vector<1x128xf32>,
    %cst_66 = arith.constant 0.000000e+00 : f32
    %93 = vector.broadcast %cst_66 : f32 to vector<5x128xf32>
    %c3 = arith.constant 3 : index
    %c0_67 = arith.constant 0 : index
    %94 = vector.load %arg5[%c3, %c0_67] : memref<8x128xf32, #tpu.memory_space<vmem>>, vector<5x128xf32>
    tpu.vector_store %arg5[%c3, %c0_67], %93 {strides = array<i32>} : memref<8x128xf32, #tpu.memory_space<vmem>>, vector<5x128xf32>,
    return
  }
  func.func @transform_0(%arg0: i32) -> (i32, i32) {
    %c0_i32 = arith.constant 0 : i32
    %c0_i32_0 = arith.constant 0 : i32
    return %arg0, %c0_i32 : i32, i32
  }
  func.func @transform_1(%arg0: i32) -> (i32, i32) {
    %c1_i32 = arith.constant 1 : i32
    %0 = arith.addi %arg0, %c1_i32 : i32
    %c5_i32 = arith.constant 5 : i32
    %1 = arith.muli %0, %c5_i32 : i32
    %c0_i32 = arith.constant 0 : i32
    %c0_i32_0 = arith.constant 0 : i32
    return %1, %c0_i32 : i32, i32
  }
  func.func @transform_2(%arg0: i32) -> (i32, i32) {
    %c0_i32 = arith.constant 0 : i32
    %c0_i32_0 = arith.constant 0 : i32
    %c0_i32_1 = arith.constant 0 : i32
    return %c0_i32, %c0_i32_0 : i32, i32
  }
  func.func @transform_3(%arg0: i32) -> (i32, i32) {
    %c0_i32 = arith.constant 0 : i32
    %c0_i32_0 = arith.constant 0 : i32
    return %arg0, %c0_i32 : i32, i32
  }
  func.func @transform_4(%arg0: i32) -> (i32, i32) {
    %c0_i32 = arith.constant 0 : i32
    %c0_i32_0 = arith.constant 0 : i32
    return %arg0, %c0_i32 : i32, i32
  }
}

</mosaic_0001>

<llo_original>
// kernel: tpu_custom_call.1
$region0: #{tpu_custom_call.1}
  #allocation0 [shape = 'u32[]', space=smem, size = 0x4, offset = 0x4, fixed_abs, tag = 'smem constant byte address 0x4 - core index']
  #allocation1 [shape = 'u32[144,128]{1,0:T(1,128)}', space=vmem, size = 0x12000, scoped, tag = 'internal scratch']
  #allocation2 [shape = 'bf16[240,36]{1,0:T(8,128)(2,1)}', space=vmem, size = 0xf000, scoped, tag = 'scratch operand']
  %s0 = inlined_call_operand.vmem [shape: bf16[768,4], index: 0, kind: input, shape index: {}]
  %s1 = inlined_call_operand.vmem [shape: bf16[768,4], index: 1, kind: input, shape index: {}]
  %s2 = inlined_call_operand.vmem [shape: bf16[36,128], index: 2, kind: input, shape index: {}]
  %s3 = inlined_call_operand.hbm [shape: bf16[720,128], index: 3, kind: output, shape index: {0}]
  %s4 = inlined_call_operand.hbm [shape: f32[24,128], index: 4, kind: output, shape index: {1}]
  %5 = xla_tuple %s3, %s4
  %s6 = sld [smem:[#allocation0]]
  $region53: #{tpu_custom_call.1} parent=0
    _
  %s8 = ssub.s32 1, %s6
  %s9 = scalar_select 0, %s8, %s6
  $region1: #{tpu_custom_call.1} parent=0
    #allocation3 [shape = 'u8[122880]{0}', space=vmem, size = 0x1e000, scoped, tag = 'output window, operand 0']
    #allocation4 [shape = 's32[2]{0}', space=sflag, size = 0x8, scoped, tag = 'scoped memory for tpu_custom_call.1']
    #allocation5 [shape = 'u8[8192]{0}', space=vmem, size = 0x2000, scoped, tag = 'output window, operand 1']
    #allocation6 [shape = 's32[2]{0}', space=sflag, size = 0x8, scoped, tag = 'scoped memory for tpu_custom_call.1']
    %10 = vsyncpa [#allocation4], 0
    %s11 = scalar_lea.sflag [#allocation4], 1
    %12 = vsyncpa %s11, 0
    %13 = vsyncpa [#allocation6], 0
    %s14 = scalar_lea.sflag [#allocation6], 1
    %15 = vsyncpa %s14, 0
    loop: start=0, step=1, limit=5
    $region2: #{tpu_custom_call.1} parent=1 // loop_pre_header
      _
    $region3: #{tpu_custom_call.1} parent=1 // loop_header
      %s17 = sphi 0, %s21
      %p18 = scmp.ge.s32.totalorder %s17, 5
      %s27 = sphi 0, %s29
      %s30 = sphi 0, %s27
      %s31 = sphi 0, %s30
      %s47 = sphi 0, %s31
      %s57 = sphi 0, %s59
      %s60 = sphi 0, %s57
      %s61 = sphi 0, %s60
      %s77 = sphi 0, %s61
      %s81 = sphi 0, %s81
      %s83 = sphi 0, %s81
      %s84 = sphi 0, %s83
      %s98 = sphi 0, %s84
      %s104 = sphi 0, %s106
      %s107 = sphi 0, %s104
      %s108 = sphi 0, %s107
      %s124 = sphi 0, %s108
      %s130 = sphi 0, %s132
      %s133 = sphi 0, %s130
      %s134 = sphi 0, %s133
      %s150 = sphi 0, %s134
    $region4: #{tpu_custom_call.1} parent=1 // loop_header_branch
      %20 = sbr.rel (%p18) target = $region8
    $region5: #{tpu_custom_call.1} parent=1 // loop_body
      %s22 = ssub.s32 %s17, 1
      %s23 = ssub.s32 %s17, 2
      %s24 = sadd.s32 %s17, 1
      %s25 = ssub.s32 %s17, %s24
      %p26 = scmp.eq.s32.totalorder %s25, 0
      %s28 = sadd.s32 %s27, 1
      %s29 = scalar_select %p26, %s27, %s28
      %p32 = pneg %p26
      %p33 = scmp.eq.s32.totalorder %s17, 2
      %p34 = por %p32, %p33
      %p35 = scmp.ne.s32.totalorder %s27, %s30
      %p36 = scmp.eq.s32.totalorder %s17, 0
      %p37 = por %p35, %p36
      %p38 = scmp.ne.s32.totalorder %s27, %s30
      %p39 = scmp.eq.s32.totalorder %s22, 2
      %p40 = por %p38, %p39
      %p41 = scmp.ne.s32.totalorder %s30, %s31
      %p42 = scmp.eq.s32.totalorder %s22, 0
      %p43 = por %p41, %p42
      %p44 = scmp.ne.s32.totalorder %s30, %s31
      %p45 = scmp.eq.s32.totalorder %s23, 2
      %p46 = por %p44, %p45
      %p48 = scmp.ne.s32.totalorder %s31, %s47
      %p49 = scmp.eq.s32.totalorder %s23, 0
      %p50 = por %p48, %p49
      %s51 = sadd.s32 %s17, 1
      %s52 = smul.u32 %s51, 5
      %s53 = sadd.s32 %s24, 1
      %s54 = smul.u32 %s53, 5
      %s55 = ssub.s32 %s52, %s54
      %p56 = scmp.eq.s32.totalorder %s55, 0
      %s58 = sadd.s32 %s57, 1
      %s59 = scalar_select %p56, %s57, %s58
      %p62 = pneg %p56
      %p63 = scmp.eq.s32.totalorder %s17, 2
      %p64 = por %p62, %p63
      %p65 = scmp.ne.s32.totalorder %s57, %s60
      %p66 = scmp.eq.s32.totalorder %s17, 0
      %p67 = por %p65, %p66
      %p68 = scmp.ne.s32.totalorder %s57, %s60
      %p69 = scmp.eq.s32.totalorder %s22, 2
      %p70 = por %p68, %p69
      %p71 = scmp.ne.s32.totalorder %s60, %s61
      %p72 = scmp.eq.s32.totalorder %s22, 0
      %p73 = por %p71, %p72
      %p74 = scmp.ne.s32.totalorder %s60, %s61
      %p75 = scmp.eq.s32.totalorder %s23, 2
      %p76 = por %p74, %p75
      %p78 = scmp.ne.s32.totalorder %s61, %s77
      %p79 = scmp.eq.s32.totalorder %s23, 0
      %p80 = por %p78, %p79
      %s82 = sadd.s32 %s81, 1
      %p85 = scmp.eq.s32.totalorder %s17, 2
      %p86 = scmp.ne.s32.totalorder %s81, %s83
      %p87 = scmp.eq.s32.totalorder %s17, 0
      %p88 = por %p86, %p87
      %p89 = scmp.ne.s32.totalorder %s81, %s83
      %p90 = scmp.eq.s32.totalorder %s22, 2
      %p91 = por %p89, %p90
      %p92 = scmp.ne.s32.totalorder %s83, %s84
      %p93 = scmp.eq.s32.totalorder %s22, 0
      %p94 = por %p92, %p93
      %p95 = scmp.ne.s32.totalorder %s83, %s84
      %p96 = scmp.eq.s32.totalorder %s23, 2
      %p97 = por %p95, %p96
      %p99 = scmp.ne.s32.totalorder %s84, %s98
      %p100 = scmp.eq.s32.totalorder %s23, 0
      %p101 = por %p99, %p100
      %s102 = ssub.s32 %s17, %s24
      %p103 = scmp.eq.s32.totalorder %s102, 0
      %s105 = sadd.s32 %s104, 1
      %s106 = scalar_select %p103, %s104, %s105
      %p109 = pneg %p103
      %p110 = scmp.eq.s32.totalorder %s17, 2
      %p111 = por %p109, %p110
      %p112 = scmp.ne.s32.totalorder %s104, %s107
      %p113 = scmp.eq.s32.totalorder %s17, 0
      %p114 = por %p112, %p113
      %p115 = scmp.ne.s32.totalorder %s104, %s107
      %p116 = scmp.eq.s32.totalorder %s22, 2
      %p117 = por %p115, %p116
      %p118 = scmp.ne.s32.totalorder %s107, %s108
      %p119 = scmp.eq.s32.totalorder %s22, 0
      %p120 = por %p118, %p119
      %p121 = scmp.ne.s32.totalorder %s107, %s108
      %p122 = scmp.eq.s32.totalorder %s23, 2
      %p123 = por %p121, %p122
      %p125 = scmp.ne.s32.totalorder %s108, %s124
      %p126 = scmp.eq.s32.totalorder %s23, 0
      %p127 = por %p125, %p126
      %s128 = ssub.s32 %s17, %s24
      %p129 = scmp.eq.s32.totalorder %s128, 0
      %s131 = sadd.s32 %s130, 1
      %s132 = scalar_select %p129, %s130, %s131
      %p135 = pneg %p129
      %p136 = scmp.eq.s32.totalorder %s17, 2
      %p137 = por %p135, %p136
      %p138 = scmp.ne.s32.totalorder %s130, %s133
      %p139 = scmp.eq.s32.totalorder %s17, 0
      %p140 = por %p138, %p139
      %p141 = scmp.ne.s32.totalorder %s130, %s133
      %p142 = scmp.eq.s32.totalorder %s22, 2
      %p143 = por %p141, %p142
      %p144 = scmp.ne.s32.totalorder %s133, %s134
      %p145 = scmp.eq.s32.totalorder %s22, 0
      %p146 = por %p144, %p145
      %p147 = scmp.ne.s32.totalorder %s133, %s134
      %p148 = scmp.eq.s32.totalorder %s23, 2
      %p149 = por %p147, %p148
      %p151 = scmp.ne.s32.totalorder %s134, %s150
      %p152 = scmp.eq.s32.totalorder %s23, 0
      %p153 = por %p151, %p152
      %p154 = scmp.le.s32.totalorder 1, %s17
      %p155 = scmp.lt.s32.totalorder %s17, 4
      %p156 = pnand %p154, %p155
      %p157 = pneg %p156
      // Predicated region
      $region9: #{tpu_custom_call.1} parent=5 // pred_check
        _
      $region10: #{tpu_custom_call.1} parent=5 // pred_check_branch
        %159 = sbr.rel (%p156) target = $region12
      $region11: #{tpu_custom_call.1} parent=5 // pred_region
        %s160 = ssub.s32 %s17, 1
        // Predicated region
        $region13: #{tpu_custom_call.1} parent=11 // pred_check
          %p161 = pneg %p94
        $region14: #{tpu_custom_call.1} parent=11 // pred_check_branch
          %163 = sbr.rel (%p161) target = $region16
        $region15: #{tpu_custom_call.1} parent=11 // pred_region
          _
        $region16: #{tpu_custom_call.1} parent=11 // pred_fallthru
          _
      $region12: #{tpu_custom_call.1} parent=5 // pred_fallthru
        _
      %p164 = scmp.lt.s32.totalorder %s17, 3
      // Predicated region
      $region17: #{tpu_custom_call.1} parent=5 // pred_check
        %p165 = pneg %p164
      $region18: #{tpu_custom_call.1} parent=5 // pred_check_branch
        %167 = sbr.rel (%p165) target = $region20
      $region19: #{tpu_custom_call.1} parent=5 // pred_region
        // Predicated region
        $region21: #{tpu_custom_call.1} parent=19 // pred_check
          %p168 = pneg %p37
        $region22: #{tpu_custom_call.1} parent=19 // pred_check_branch
          %170 = sbr.rel (%p168) target = $region24
        $region23: #{tpu_custom_call.1} parent=19 // pred_region
          %s171 = smul.u32 30, %s17
          %s172 = ssub.s32 96, %s171
          %p173 = scmp.lt.s32.totalorder %s172, 30
          %s174 = scalar_select %p173, %s172, 30
          %s175 = smul.u32 64, %s174
          %p176 = scmp.lt.s32.totalorder %s171, 95
          %s177 = scalar_select %p176, %s171, 95
          %s178 = smul.addr %s177, 4
          %s179 = scalar_lea.vmem %s0, %s178
          %s180 = smul.u32 30, %s17
          %s181 = ssub.s32 96, %s180
          %p182 = scmp.lt.s32.totalorder %s181, 30
          %s183 = scalar_select %p182, %s181, 30
          %s184 = smul.u32 64, %s183
        $region24: #{tpu_custom_call.1} parent=19 // pred_fallthru
          _
        // Predicated region
        $region25: #{tpu_custom_call.1} parent=19 // pred_check
          %p185 = pneg %p67
        $region26: #{tpu_custom_call.1} parent=19 // pred_check_branch
          %187 = sbr.rel (%p185) target = $region28
        $region27: #{tpu_custom_call.1} parent=19 // pred_region
          %s188 = sadd.s32 %s17, 1
          %s189 = smul.u32 %s188, 5
          %s190 = smul.u32 6, %s189
          %p191 = scmp.lt.s32.totalorder %s190, 95
          %s192 = scalar_select %p191, %s190, 95
          %s193 = smul.addr %s192, 4
          %s194 = scalar_lea.vmem %s1, %s193
          %s195 = sadd.s32 %s17, 1
          %s196 = smul.u32 %s195, 5
          %s197 = smul.u32 6, %s196
        $region28: #{tpu_custom_call.1} parent=19 // pred_fallthru
          _
      $region20: #{tpu_custom_call.1} parent=5 // pred_fallthru
        _
      %p198 = scmp.le.s32.totalorder 1, %s17
      %p199 = scmp.lt.s32.totalorder %s17, 4
      %p200 = pnand %p198, %p199
      %p201 = pneg %p200
      // Predicated region
      $region29: #{tpu_custom_call.1} parent=5 // pred_check
        _
      $region30: #{tpu_custom_call.1} parent=5 // pred_check_branch
        %203 = sbr.rel (%p200) target = $region32
      $region31: #{tpu_custom_call.1} parent=5 // pred_region
        %s204 = ssub.s32 %s17, 1
        %s205 = smul.u32 30, %s22
        %s206 = ssub.s32 96, %s205
        %p207 = scmp.lt.s32.totalorder %s206, 30
        %s208 = scalar_select %p207, %s206, 30
        %s209 = smul.u32 64, %s208
        %p210 = scmp.lt.s32.totalorder %s205, 95
        %s211 = scalar_select %p210, %s205, 95
        %s212 = smul.addr %s211, 4
        %s213 = scalar_lea.vmem %s0, %s212
        %p214 = pneg %p43
        %p215 = pneg %p40
        %s216 = sadd.s32 %s22, 1
        %s217 = smul.u32 %s216, 5
        %s218 = smul.u32 6, %s217
        %p219 = scmp.lt.s32.totalorder %s218, 95
        %s220 = scalar_select %p219, %s218, 95
        %s221 = smul.addr %s220, 4
        %s222 = scalar_lea.vmem %s1, %s221
        %p223 = pneg %p73
        %p224 = pneg %p70
        %p225 = pneg %p94
        %p226 = pneg %p91
        %p227 = pneg %p120
        %p228 = pneg %p117
        %s229 = sand.u32 %s107, 1
        %s230 = scalar_lea.sflag [#allocation4], %s229
        %s231 = sand.u32 %s107, 1
        %s232 = smul.addr %s231, 120
        %s233 = scalar_lea.vmem [#allocation3], %s232
        %p234 = pneg %p146
        %p235 = pneg %p143
        %s236 = sand.u32 %s133, 1
        %s237 = scalar_lea.sflag [#allocation6], %s236
        %s238 = sand.u32 %s133, 1
        %s239 = smul.addr %s238, 8
        %s240 = scalar_lea.vmem [#allocation5], %s239
        %s241 = smul.u32 30, %s22
        %s242 = ssub.s32 96, %s241
        %p243 = scmp.lt.s32.totalorder %s242, 30
        %s244 = scalar_select %p243, %s242, 30
        %s245 = smul.u32 64, %s244
        %p246 = scmp.lt.s32.totalorder %s241, 95
        %s247 = scalar_select %p246, %s241, 95
        %s248 = smul.addr %s247, 4
        %s249 = scalar_lea.vmem %s0, %s248
        %s250 = smul.u32 30, %s22
        %s251 = ssub.s32 96, %s250
        %p252 = scmp.lt.s32.totalorder %s251, 30
        %s253 = scalar_select %p252, %s251, 30
        %s254 = smul.u32 64, %s253
        %s255 = sadd.s32 %s22, 1
        %s256 = smul.u32 %s255, 5
        %s257 = smul.u32 6, %s256
        %p258 = scmp.lt.s32.totalorder %s257, 95
        %s259 = scalar_select %p258, %s257, 95
        %s260 = smul.addr %s259, 4
        %s261 = scalar_lea.vmem %s1, %s260
        %s262 = sadd.s32 %s22, 1
        %s263 = smul.u32 %s262, 5
        %s264 = smul.u32 6, %s263
        %s265 = smul.u32 30, %s22
        %v267 = vld [vmem:[%s249] sm:$0xf]
        %v268 = vld [vmem:[%s249 + $0x4] sm:$0xf]
        %v269 = vld [vmem:[%s249 + $0x8] sm:$0xf]
        %v270 = vld [vmem:[%s249 + $0xc] sm:$0xf]
        %v271 = vld [vmem:[%s249 + $0x10] sm:$0xf]
        %v272 = vld [vmem:[%s249 + $0x14] sm:$0xf]
        %v273 = vld [vmem:[%s249 + $0x18] sm:$0xf]
        %v274 = vld [vmem:[%s249 + $0x1c] sm:$0xf]
        %v275 = vld [vmem:[%s249 + $0x20] sm:$0xf]
        %v276 = vld [vmem:[%s249 + $0x24] sm:$0xf]
        %v277 = vld [vmem:[%s249 + $0x28] sm:$0xf]
        %v278 = vld [vmem:[%s249 + $0x2c] sm:$0xf]
        %v279 = vld [vmem:[%s249 + $0x30] sm:$0xf]
        %v280 = vld [vmem:[%s249 + $0x34] sm:$0xf]
        %v281 = vld [vmem:[%s249 + $0x38] sm:$0xf]
        %v282 = vld [vmem:[%s249 + $0x3c] sm:$0xf]
        %v283 = vld [vmem:[%s249 + $0x40] sm:$0xf]
        %v284 = vld [vmem:[%s249 + $0x44] sm:$0xf]
        %v285 = vld [vmem:[%s249 + $0x48] sm:$0xf]
        %v286 = vld [vmem:[%s249 + $0x4c] sm:$0xf]
        %v287 = vld [vmem:[%s249 + $0x50] sm:$0xf]
        %v288 = vld [vmem:[%s249 + $0x54] sm:$0xf]
        %v289 = vld [vmem:[%s249 + $0x58] sm:$0xf]
        %v290 = vld [vmem:[%s249 + $0x5c] sm:$0xf]
        %v291 = vld [vmem:[%s249 + $0x60] sm:$0xf]
        %v292 = vld [vmem:[%s249 + $0x64] sm:$0xf]
        %v293 = vld [vmem:[%s249 + $0x68] sm:$0xf]
        %v294 = vld [vmem:[%s249 + $0x6c] sm:$0xf]
        %v295 = vld [vmem:[%s249 + $0x70] sm:$0xf]
        %v296 = vld [vmem:[%s249 + $0x74] sm:$0xf]
        %vm297 = vcmask 27648
        %298 = vst.msk [vmem:[#allocation2] sm:$0xf] %vm297, %v267
        %299 = vst.msk [vmem:[#allocation2 + $0x4] sm:$0xf] %vm297, %v268
        %300 = vst.msk [vmem:[#allocation2 + $0x8] sm:$0xf] %vm297, %v269
        %301 = vst.msk [vmem:[#allocation2 + $0xc] sm:$0xf] %vm297, %v270
        %302 = vst.msk [vmem:[#allocation2 + $0x10] sm:$0xf] %vm297, %v271
        %303 = vst.msk [vmem:[#allocation2 + $0x14] sm:$0xf] %vm297, %v272
        %304 = vst.msk [vmem:[#allocation2 + $0x18] sm:$0xf] %vm297, %v273
        %305 = vst.msk [vmem:[#allocation2 + $0x1c] sm:$0xf] %vm297, %v274
        %306 = vst.msk [vmem:[#allocation2 + $0x20] sm:$0xf] %vm297, %v275
        %307 = vst.msk [vmem:[#allocation2 + $0x24] sm:$0xf] %vm297, %v276
        %308 = vst.msk [vmem:[#allocation2 + $0x28] sm:$0xf] %vm297, %v277
        %309 = vst.msk [vmem:[#allocation2 + $0x2c] sm:$0xf] %vm297, %v278
        %310 = vst.msk [vmem:[#allocation2 + $0x30] sm:$0xf] %vm297, %v279
        %311 = vst.msk [vmem:[#allocation2 + $0x34] sm:$0xf] %vm297, %v280
        %312 = vst.msk [vmem:[#allocation2 + $0x38] sm:$0xf] %vm297, %v281
        %313 = vst.msk [vmem:[#allocation2 + $0x3c] sm:$0xf] %vm297, %v282
        %314 = vst.msk [vmem:[#allocation2 + $0x40] sm:$0xf] %vm297, %v283
        %315 = vst.msk [vmem:[#allocation2 + $0x44] sm:$0xf] %vm297, %v284
        %316 = vst.msk [vmem:[#allocation2 + $0x48] sm:$0xf] %vm297, %v285
        %317 = vst.msk [vmem:[#allocation2 + $0x4c] sm:$0xf] %vm297, %v286
        %318 = vst.msk [vmem:[#allocation2 + $0x50] sm:$0xf] %vm297, %v287
        %319 = vst.msk [vmem:[#allocation2 + $0x54] sm:$0xf] %vm297, %v288
        %320 = vst.msk [vmem:[#allocation2 + $0x58] sm:$0xf] %vm297, %v289
        %321 = vst.msk [vmem:[#allocation2 + $0x5c] sm:$0xf] %vm297, %v290
        %322 = vst.msk [vmem:[#allocation2 + $0x60] sm:$0xf] %vm297, %v291
        %323 = vst.msk [vmem:[#allocation2 + $0x64] sm:$0xf] %vm297, %v292
        %324 = vst.msk [vmem:[#allocation2 + $0x68] sm:$0xf] %vm297, %v293
        %325 = vst.msk [vmem:[#allocation2 + $0x6c] sm:$0xf] %vm297, %v294
        %326 = vst.msk [vmem:[#allocation2 + $0x70] sm:$0xf] %vm297, %v295
        %327 = vst.msk [vmem:[#allocation2 + $0x74] sm:$0xf] %vm297, %v296
        %v328 = vld [vmem:[%s249] sm:$0xf]
        %v329 = vld [vmem:[%s249 + $0x4] sm:$0xf]
        %v330 = vld [vmem:[%s249 + $0x8] sm:$0xf]
        %v331 = vld [vmem:[%s249 + $0xc] sm:$0xf]
        %v332 = vld [vmem:[%s249 + $0x10] sm:$0xf]
        %v333 = vld [vmem:[%s249 + $0x14] sm:$0xf]
        %v334 = vld [vmem:[%s249 + $0x18] sm:$0xf]
        %v335 = vld [vmem:[%s249 + $0x1c] sm:$0xf]
        %v336 = vld [vmem:[%s249 + $0x20] sm:$0xf]
        %v337 = vld [vmem:[%s249 + $0x24] sm:$0xf]
        %v338 = vld [vmem:[%s249 + $0x28] sm:$0xf]
        %v339 = vld [vmem:[%s249 + $0x2c] sm:$0xf]
        %v340 = vld [vmem:[%s249 + $0x30] sm:$0xf]
        %v341 = vld [vmem:[%s249 + $0x34] sm:$0xf]
        %v342 = vld [vmem:[%s249 + $0x38] sm:$0xf]
        %v343 = vld [vmem:[%s249 + $0x3c] sm:$0xf]
        %v344 = vld [vmem:[%s249 + $0x40] sm:$0xf]
        %v345 = vld [vmem:[%s249 + $0x44] sm:$0xf]
        %v346 = vld [vmem:[%s249 + $0x48] sm:$0xf]
        %v347 = vld [vmem:[%s249 + $0x4c] sm:$0xf]
        %v348 = vld [vmem:[%s249 + $0x50] sm:$0xf]
        %v349 = vld [vmem:[%s249 + $0x54] sm:$0xf]
        %v350 = vld [vmem:[%s249 + $0x58] sm:$0xf]
        %v351 = vld [vmem:[%s249 + $0x5c] sm:$0xf]
        %v352 = vld [vmem:[%s249 + $0x60] sm:$0xf]
        %v353 = vld [vmem:[%s249 + $0x64] sm:$0xf]
        %v354 = vld [vmem:[%s249 + $0x68] sm:$0xf]
        %v355 = vld [vmem:[%s249 + $0x6c] sm:$0xf]
        %v356 = vld [vmem:[%s249 + $0x70] sm:$0xf]
        %v357 = vld [vmem:[%s249 + $0x74] sm:$0xf]
        %vm358 = vsmask.f32 3328
        %vm359 = vsmask.f32 7440
        %vm360 = vmor %vm358, %vm359
        %v362 = vshrl.u32 %v328, 16
        %v364 = vrot.slane %v362, 4
        %v365 = vshll.u32 %v328, 16
        %v367 = vrot.slane %v365, 5
        %v368 = vor.u32 %v364, %v367
        %v369 = vrot.slane %v368, 4
        %v371 = vshll.u32 %v329, 16
        %v373 = vrot.slane %v371, 5
        %v374 = vsel %vm360, %v369, %v373
        %v375 = vshrl.u32 %v329, 16
        %v377 = vrot.slane %v375, 4
        %v378 = vor.u32 %v377, %v373
        %v379 = vrot.slane %v378, 4
        %v381 = vshll.u32 %v330, 16
        %v383 = vrot.slane %v381, 5
        %v384 = vsel %vm360, %v379, %v383
        %v385 = vshrl.u32 %v330, 16
        %v387 = vrot.slane %v385, 4
        %v388 = vor.u32 %v387, %v383
        %v389 = vrot.slane %v388, 4
        %v391 = vshll.u32 %v331, 16
        %v393 = vrot.slane %v391, 5
        %v394 = vsel %vm360, %v389, %v393
        %v395 = vshrl.u32 %v331, 16
        %v397 = vrot.slane %v395, 4
        %v398 = vor.u32 %v397, %v393
        %v399 = vrot.slane %v398, 4
        %v401 = vshll.u32 %v332, 16
        %v403 = vrot.slane %v401, 5
        %v404 = vsel %vm360, %v399, %v403
        %v405 = vshrl.u32 %v332, 16
        %v407 = vrot.slane %v405, 4
        %v408 = vor.u32 %v407, %v403
        %v409 = vrot.slane %v408, 4
        %v411 = vshll.u32 %v333, 16
        %v413 = vrot.slane %v411, 5
        %v414 = vsel %vm360, %v409, %v413
        %v415 = vshrl.u32 %v333, 16
        %v417 = vrot.slane %v415, 4
        %v418 = vor.u32 %v417, %v413
        %v419 = vrot.slane %v418, 4
        %v421 = vshll.u32 %v334, 16
        %v423 = vrot.slane %v421, 5
        %v424 = vsel %vm360, %v419, %v423
        %v425 = vshrl.u32 %v334, 16
        %v427 = vrot.slane %v425, 4
        %v428 = vor.u32 %v427, %v423
        %v429 = vrot.slane %v428, 4
        %v431 = vshll.u32 %v335, 16
        %v433 = vrot.slane %v431, 5
        %v434 = vsel %vm360, %v429, %v433
        %v435 = vshrl.u32 %v335, 16
        %v437 = vrot.slane %v435, 4
        %v438 = vor.u32 %v437, %v433
        %v439 = vrot.slane %v438, 4
        %v441 = vshll.u32 %v336, 16
        %v443 = vrot.slane %v441, 5
        %v444 = vsel %vm360, %v439, %v443
        %v445 = vshrl.u32 %v336, 16
        %v447 = vrot.slane %v445, 4
        %v448 = vor.u32 %v447, %v443
        %v449 = vrot.slane %v448, 4
        %v451 = vshll.u32 %v337, 16
        %v453 = vrot.slane %v451, 5
        %v454 = vsel %vm360, %v449, %v453
        %v455 = vshrl.u32 %v337, 16
        %v457 = vrot.slane %v455, 4
        %v458 = vor.u32 %v457, %v453
        %v459 = vrot.slane %v458, 4
        %v461 = vshll.u32 %v338, 16
        %v463 = vrot.slane %v461, 5
        %v464 = vsel %vm360, %v459, %v463
        %v465 = vshrl.u32 %v338, 16
        %v467 = vrot.slane %v465, 4
        %v468 = vor.u32 %v467, %v463
        %v469 = vrot.slane %v468, 4
        %v471 = vshll.u32 %v339, 16
        %v473 = vrot.slane %v471, 5
        %v474 = vsel %vm360, %v469, %v473
        %v475 = vshrl.u32 %v339, 16
        %v477 = vrot.slane %v475, 4
        %v478 = vor.u32 %v477, %v473
        %v479 = vrot.slane %v478, 4
        %v481 = vshll.u32 %v340, 16
        %v483 = vrot.slane %v481, 5
        %v484 = vsel %vm360, %v479, %v483
        %v485 = vshrl.u32 %v340, 16
        %v487 = vrot.slane %v485, 4
        %v488 = vor.u32 %v487, %v483
        %v489 = vrot.slane %v488, 4
        %v491 = vshll.u32 %v341, 16
        %v493 = vrot.slane %v491, 5
        %v494 = vsel %vm360, %v489, %v493
        %v495 = vshrl.u32 %v341, 16
        %v497 = vrot.slane %v495, 4
        %v498 = vor.u32 %v497, %v493
        %v499 = vrot.slane %v498, 4
        %v501 = vshll.u32 %v342, 16
        %v503 = vrot.slane %v501, 5
        %v504 = vsel %vm360, %v499, %v503
        %v505 = vshrl.u32 %v342, 16
        %v507 = vrot.slane %v505, 4
        %v508 = vor.u32 %v507, %v503
        %v509 = vrot.slane %v508, 4
        %v511 = vshll.u32 %v343, 16
        %v513 = vrot.slane %v511, 5
        %v514 = vsel %vm360, %v509, %v513
        %v515 = vshrl.u32 %v343, 16
        %v517 = vrot.slane %v515, 4
        %v518 = vor.u32 %v517, %v513
        %v519 = vrot.slane %v518, 4
        %v521 = vshll.u32 %v344, 16
        %v523 = vrot.slane %v521, 5
        %v524 = vsel %vm360, %v519, %v523
        %v525 = vshrl.u32 %v344, 16
        %v527 = vrot.slane %v525, 4
        %v528 = vor.u32 %v527, %v523
        %v529 = vrot.slane %v528, 4
        %v531 = vshll.u32 %v345, 16
        %v533 = vrot.slane %v531, 5
        %v534 = vsel %vm360, %v529, %v533
        %v535 = vshrl.u32 %v345, 16
        %v537 = vrot.slane %v535, 4
        %v538 = vor.u32 %v537, %v533
        %v539 = vrot.slane %v538, 4
        %v541 = vshll.u32 %v346, 16
        %v543 = vrot.slane %v541, 5
        %v544 = vsel %vm360, %v539, %v543
        %v545 = vshrl.u32 %v346, 16
        %v547 = vrot.slane %v545, 4
        %v548 = vor.u32 %v547, %v543
        %v549 = vrot.slane %v548, 4
        %v551 = vshll.u32 %v347, 16
        %v553 = vrot.slane %v551, 5
        %v554 = vsel %vm360, %v549, %v553
        %v555 = vshrl.u32 %v347, 16
        %v557 = vrot.slane %v555, 4
        %v558 = vor.u32 %v557, %v553
        %v559 = vrot.slane %v558, 4
        %v561 = vshll.u32 %v348, 16
        %v563 = vrot.slane %v561, 5
        %v564 = vsel %vm360, %v559, %v563
        %v565 = vshrl.u32 %v348, 16
        %v567 = vrot.slane %v565, 4
        %v568 = vor.u32 %v567, %v563
        %v569 = vrot.slane %v568, 4
        %v571 = vshll.u32 %v349, 16
        %v573 = vrot.slane %v571, 5
        %v574 = vsel %vm360, %v569, %v573
        %v575 = vshrl.u32 %v349, 16
        %v577 = vrot.slane %v575, 4
        %v578 = vor.u32 %v577, %v573
        %v579 = vrot.slane %v578, 4
        %v581 = vshll.u32 %v350, 16
        %v583 = vrot.slane %v581, 5
        %v584 = vsel %vm360, %v579, %v583
        %v585 = vshrl.u32 %v350, 16
        %v587 = vrot.slane %v585, 4
        %v588 = vor.u32 %v587, %v583
        %v589 = vrot.slane %v588, 4
        %v591 = vshll.u32 %v351, 16
        %v593 = vrot.slane %v591, 5
        %v594 = vsel %vm360, %v589, %v593
        %v595 = vshrl.u32 %v351, 16
        %v597 = vrot.slane %v595, 4
        %v598 = vor.u32 %v597, %v593
        %v599 = vrot.slane %v598, 4
        %v601 = vshll.u32 %v352, 16
        %v603 = vrot.slane %v601, 5
        %v604 = vsel %vm360, %v599, %v603
        %v605 = vshrl.u32 %v352, 16
        %v607 = vrot.slane %v605, 4
        %v608 = vor.u32 %v607, %v603
        %v609 = vrot.slane %v608, 4
        %v611 = vshll.u32 %v353, 16
        %v613 = vrot.slane %v611, 5
        %v614 = vsel %vm360, %v609, %v613
        %v615 = vshrl.u32 %v353, 16
        %v617 = vrot.slane %v615, 4
        %v618 = vor.u32 %v617, %v613
        %v619 = vrot.slane %v618, 4
        %v621 = vshll.u32 %v354, 16
        %v623 = vrot.slane %v621, 5
        %v624 = vsel %vm360, %v619, %v623
        %v625 = vshrl.u32 %v354, 16
        %v627 = vrot.slane %v625, 4
        %v628 = vor.u32 %v627, %v623
        %v629 = vrot.slane %v628, 4
        %v631 = vshll.u32 %v355, 16
        %v633 = vrot.slane %v631, 5
        %v634 = vsel %vm360, %v629, %v633
        %v635 = vshrl.u32 %v355, 16
        %v637 = vrot.slane %v635, 4
        %v638 = vor.u32 %v637, %v633
        %v639 = vrot.slane %v638, 4
        %v641 = vshll.u32 %v356, 16
        %v643 = vrot.slane %v641, 5
        %v644 = vsel %vm360, %v639, %v643
        %v645 = vshrl.u32 %v356, 16
        %v647 = vrot.slane %v645, 4
        %v648 = vor.u32 %v647, %v643
        %v649 = vrot.slane %v648, 4
        %v651 = vshll.u32 %v357, 16
        %v653 = vrot.slane %v651, 5
        %v654 = vsel %vm360, %v649, %v653
        %v655 = vshrl.u32 %v357, 16
        %v657 = vrot.slane %v655, 4
        %v658 = vor.u32 %v657, %v653
        %v659 = vrot.slane %v658, 4
        %660 = vrot.lane.b32.xlu0 %v374, 4
        %v661 = vpop.permute.xlu0 %660
        %662 = vrot.lane.b32.xlu0 %v384, 4
        %v663 = vpop.permute.xlu0 %662
        %664 = vrot.lane.b32.xlu0 %v394, 4
        %v665 = vpop.permute.xlu0 %664
        %666 = vrot.lane.b32.xlu0 %v404, 4
        %v667 = vpop.permute.xlu0 %666
        %668 = vrot.lane.b32.xlu0 %v414, 4
        %v669 = vpop.permute.xlu0 %668
        %670 = vrot.lane.b32.xlu0 %v424, 4
        %v671 = vpop.permute.xlu0 %670
        %672 = vrot.lane.b32.xlu0 %v434, 4
        %v673 = vpop.permute.xlu0 %672
        %674 = vrot.lane.b32.xlu0 %v444, 4
        %v675 = vpop.permute.xlu0 %674
        %676 = vrot.lane.b32.xlu0 %v454, 4
        %v677 = vpop.permute.xlu0 %676
        %678 = vrot.lane.b32.xlu0 %v464, 4
        %v679 = vpop.permute.xlu0 %678
        %680 = vrot.lane.b32.xlu0 %v474, 4
        %v681 = vpop.permute.xlu0 %680
        %682 = vrot.lane.b32.xlu0 %v484, 4
        %v683 = vpop.permute.xlu0 %682
        %684 = vrot.lane.b32.xlu0 %v494, 4
        %v685 = vpop.permute.xlu0 %684
        %686 = vrot.lane.b32.xlu0 %v504, 4
        %v687 = vpop.permute.xlu0 %686
        %688 = vrot.lane.b32.xlu0 %v514, 4
        %v689 = vpop.permute.xlu0 %688
        %690 = vrot.lane.b32.xlu0 %v524, 4
        %v691 = vpop.permute.xlu0 %690
        %692 = vrot.lane.b32.xlu0 %v534, 4
        %v693 = vpop.permute.xlu0 %692
        %694 = vrot.lane.b32.xlu0 %v544, 4
        %v695 = vpop.permute.xlu0 %694
        %696 = vrot.lane.b32.xlu0 %v554, 4
        %v697 = vpop.permute.xlu0 %696
        %698 = vrot.lane.b32.xlu0 %v564, 4
        %v699 = vpop.permute.xlu0 %698
        %700 = vrot.lane.b32.xlu0 %v574, 4
        %v701 = vpop.permute.xlu0 %700
        %702 = vrot.lane.b32.xlu0 %v584, 4
        %v703 = vpop.permute.xlu0 %702
        %704 = vrot.lane.b32.xlu0 %v594, 4
        %v705 = vpop.permute.xlu0 %704
        %706 = vrot.lane.b32.xlu0 %v604, 4
        %v707 = vpop.permute.xlu0 %706
        %708 = vrot.lane.b32.xlu0 %v614, 4
        %v709 = vpop.permute.xlu0 %708
        %710 = vrot.lane.b32.xlu0 %v624, 4
        %v711 = vpop.permute.xlu0 %710
        %712 = vrot.lane.b32.xlu0 %v634, 4
        %v713 = vpop.permute.xlu0 %712
        %714 = vrot.lane.b32.xlu0 %v644, 4
        %v715 = vpop.permute.xlu0 %714
        %716 = vrot.lane.b32.xlu0 %v654, 4
        %v717 = vpop.permute.xlu0 %716
        %718 = vrot.lane.b32.xlu0 %v659, 4
        %v719 = vpop.permute.xlu0 %718
        %vm750 = vcmask 60448
        %751 = vst.msk [vmem:[#allocation2] sm:$0xf] %vm750, %v661
        %752 = vst.msk [vmem:[#allocation2 + $0x4] sm:$0xf] %vm750, %v663
        %753 = vst.msk [vmem:[#allocation2 + $0x8] sm:$0xf] %vm750, %v665
        %754 = vst.msk [vmem:[#allocation2 + $0xc] sm:$0xf] %vm750, %v667
        %755 = vst.msk [vmem:[#allocation2 + $0x10] sm:$0xf] %vm750, %v669
        %756 = vst.msk [vmem:[#allocation2 + $0x14] sm:$0xf] %vm750, %v671
        %757 = vst.msk [vmem:[#allocation2 + $0x18] sm:$0xf] %vm750, %v673
        %758 = vst.msk [vmem:[#allocation2 + $0x1c] sm:$0xf] %vm750, %v675
        %759 = vst.msk [vmem:[#allocation2 + $0x20] sm:$0xf] %vm750, %v677
        %760 = vst.msk [vmem:[#allocation2 + $0x24] sm:$0xf] %vm750, %v679
        %761 = vst.msk [vmem:[#allocation2 + $0x28] sm:$0xf] %vm750, %v681
        %762 = vst.msk [vmem:[#allocation2 + $0x2c] sm:$0xf] %vm750, %v683
        %763 = vst.msk [vmem:[#allocation2 + $0x30] sm:$0xf] %vm750, %v685
        %764 = vst.msk [vmem:[#allocation2 + $0x34] sm:$0xf] %vm750, %v687
        %765 = vst.msk [vmem:[#allocation2 + $0x38] sm:$0xf] %vm750, %v689
        %766 = vst.msk [vmem:[#allocation2 + $0x3c] sm:$0xf] %vm750, %v691
        %767 = vst.msk [vmem:[#allocation2 + $0x40] sm:$0xf] %vm750, %v693
        %768 = vst.msk [vmem:[#allocation2 + $0x44] sm:$0xf] %vm750, %v695
        %769 = vst.msk [vmem:[#allocation2 + $0x48] sm:$0xf] %vm750, %v697
        %770 = vst.msk [vmem:[#allocation2 + $0x4c] sm:$0xf] %vm750, %v699
        %771 = vst.msk [vmem:[#allocation2 + $0x50] sm:$0xf] %vm750, %v701
        %772 = vst.msk [vmem:[#allocation2 + $0x54] sm:$0xf] %vm750, %v703
        %773 = vst.msk [vmem:[#allocation2 + $0x58] sm:$0xf] %vm750, %v705
        %774 = vst.msk [vmem:[#allocation2 + $0x5c] sm:$0xf] %vm750, %v707
        %775 = vst.msk [vmem:[#allocation2 + $0x60] sm:$0xf] %vm750, %v709
        %776 = vst.msk [vmem:[#allocation2 + $0x64] sm:$0xf] %vm750, %v711
        %777 = vst.msk [vmem:[#allocation2 + $0x68] sm:$0xf] %vm750, %v713
        %778 = vst.msk [vmem:[#allocation2 + $0x6c] sm:$0xf] %vm750, %v715
        %779 = vst.msk [vmem:[#allocation2 + $0x70] sm:$0xf] %vm750, %v717
        %vm780 = vcmask 60448
        %vm781 = vmand %vm780, %vm358
        %v782 = vld [vmem:[#allocation2 + $0x74] sm:$0xf]
        %v783 = vsel %vm781, %v719, %v782
        %784 = vst [vmem:[#allocation2 + $0x74] sm:$0xf] %v783
        %v785 = vld [vmem:[%s261] sm:$0x1]
        %v787 = vshll.u32 %v785, 16
        %v789 = vrot.slane %v787, 5
        %790 = vrot.lane.b32.xlu0 %v789, 4
        %v791 = vpop.permute.xlu0 %790
        %vm793 = vcmask 60451
        %vm794 = vsmask.f32 7950
        %vm795 = vmand %vm793, %vm794
        %v796 = vld [vmem:[#allocation2 + $0x74] sm:$0x8]
        %v797 = vsel %vm795, %v791, %v796
        %798 = vst [vmem:[#allocation2 + $0x74] sm:$0x8] %v797
        %v799 = vld [vmem:[%s249] sm:$0xe]
        %v800 = vld [vmem:[%s249 + $0x4] sm:$0xf]
        %v801 = vld [vmem:[%s249 + $0x8] sm:$0xf]
        %v802 = vld [vmem:[%s249 + $0xc] sm:$0xf]
        %v803 = vld [vmem:[%s249 + $0x10] sm:$0xf]
        %v804 = vld [vmem:[%s249 + $0x14] sm:$0xf]
        %v805 = vld [vmem:[%s249 + $0x18] sm:$0xf]
        %v806 = vld [vmem:[%s249 + $0x1c] sm:$0xf]
        %v807 = vld [vmem:[%s249 + $0x20] sm:$0xf]
        %v808 = vld [vmem:[%s249 + $0x24] sm:$0xf]
        %v809 = vld [vmem:[%s249 + $0x28] sm:$0xf]
        %v810 = vld [vmem:[%s249 + $0x2c] sm:$0xf]
        %v811 = vld [vmem:[%s249 + $0x30] sm:$0xf]
        %v812 = vld [vmem:[%s249 + $0x34] sm:$0xf]
        %v813 = vld [vmem:[%s249 + $0x38] sm:$0xf]
        %v814 = vld [vmem:[%s249 + $0x3c] sm:$0xf]
        %v815 = vld [vmem:[%s249 + $0x40] sm:$0xf]
        %v816 = vld [vmem:[%s249 + $0x44] sm:$0xf]
        %v817 = vld [vmem:[%s249 + $0x48] sm:$0xf]
        %v818 = vld [vmem:[%s249 + $0x4c] sm:$0xf]
        %v819 = vld [vmem:[%s249 + $0x50] sm:$0xf]
        %v820 = vld [vmem:[%s249 + $0x54] sm:$0xf]
        %v821 = vld [vmem:[%s249 + $0x58] sm:$0xf]
        %v822 = vld [vmem:[%s249 + $0x5c] sm:$0xf]
        %v823 = vld [vmem:[%s249 + $0x60] sm:$0xf]
        %v824 = vld [vmem:[%s249 + $0x64] sm:$0xf]
        %v825 = vld [vmem:[%s249 + $0x68] sm:$0xf]
        %v826 = vld [vmem:[%s249 + $0x6c] sm:$0xf]
        %v827 = vld [vmem:[%s249 + $0x70] sm:$0xf]
        %v828 = vld [vmem:[%s249 + $0x74] sm:$0xf]
        %vm859 = vcmask 1042432
        %vm860 = vcmask 1046532
        %vm861 = vmor %vm859, %vm860
        %v862 = vrot.slane %v799, 5
        %v863 = vrot.slane %v862, 4
        %v864 = vrot.slane %v800, 5
        %v865 = vsel %vm861, %v863, %v864
        %v866 = vrot.slane %v864, 4
        %v867 = vrot.slane %v801, 5
        %v868 = vsel %vm861, %v866, %v867
        %v869 = vrot.slane %v867, 4
        %v870 = vrot.slane %v802, 5
        %v871 = vsel %vm861, %v869, %v870
        %v872 = vrot.slane %v870, 4
        %v873 = vrot.slane %v803, 5
        %v874 = vsel %vm861, %v872, %v873
        %v875 = vrot.slane %v873, 4
        %v876 = vrot.slane %v804, 5
        %v877 = vsel %vm861, %v875, %v876
        %v878 = vrot.slane %v876, 4
        %v879 = vrot.slane %v805, 5
        %v880 = vsel %vm861, %v878, %v879
        %v881 = vrot.slane %v879, 4
        %v882 = vrot.slane %v806, 5
        %v883 = vsel %vm861, %v881, %v882
        %v884 = vrot.slane %v882, 4
        %v885 = vrot.slane %v807, 5
        %v886 = vsel %vm861, %v884, %v885
        %v887 = vrot.slane %v885, 4
        %v888 = vrot.slane %v808, 5
        %v889 = vsel %vm861, %v887, %v888
        %v890 = vrot.slane %v888, 4
        %v891 = vrot.slane %v809, 5
        %v892 = vsel %vm861, %v890, %v891
        %v893 = vrot.slane %v891, 4
        %v894 = vrot.slane %v810, 5
        %v895 = vsel %vm861, %v893, %v894
        %v896 = vrot.slane %v894, 4
        %v897 = vrot.slane %v811, 5
        %v898 = vsel %vm861, %v896, %v897
        %v899 = vrot.slane %v897, 4
        %v900 = vrot.slane %v812, 5
        %v901 = vsel %vm861, %v899, %v900
        %v902 = vrot.slane %v900, 4
        %v903 = vrot.slane %v813, 5
        %v904 = vsel %vm861, %v902, %v903
        %v905 = vrot.slane %v903, 4
        %v906 = vrot.slane %v814, 5
        %v907 = vsel %vm861, %v905, %v906
        %v908 = vrot.slane %v906, 4
        %v909 = vrot.slane %v815, 5
        %v910 = vsel %vm861, %v908, %v909
        %v911 = vrot.slane %v909, 4
        %v912 = vrot.slane %v816, 5
        %v913 = vsel %vm861, %v911, %v912
        %v914 = vrot.slane %v912, 4
        %v915 = vrot.slane %v817, 5
        %v916 = vsel %vm861, %v914, %v915
        %v917 = vrot.slane %v915, 4
        %v918 = vrot.slane %v818, 5
        %v919 = vsel %vm861, %v917, %v918
        %v920 = vrot.slane %v918, 4
        %v921 = vrot.slane %v819, 5
        %v922 = vsel %vm861, %v920, %v921
        %v923 = vrot.slane %v921, 4
        %v924 = vrot.slane %v820, 5
        %v925 = vsel %vm861, %v923, %v924
        %v926 = vrot.slane %v924, 4
        %v927 = vrot.slane %v821, 5
        %v928 = vsel %vm861, %v926, %v927
        %v929 = vrot.slane %v927, 4
        %v930 = vrot.slane %v822, 5
        %v931 = vsel %vm861, %v929, %v930
        %v932 = vrot.slane %v930, 4
        %v933 = vrot.slane %v823, 5
        %v934 = vsel %vm861, %v932, %v933
        %v935 = vrot.slane %v933, 4
        %v936 = vrot.slane %v824, 5
        %v937 = vsel %vm861, %v935, %v936
        %v938 = vrot.slane %v936, 4
        %v939 = vrot.slane %v825, 5
        %v940 = vsel %vm861, %v938, %v939
        %v941 = vrot.slane %v939, 4
        %v942 = vrot.slane %v826, 5
        %v943 = vsel %vm861, %v941, %v942
        %v944 = vrot.slane %v942, 4
        %v945 = vrot.slane %v827, 5
        %v946 = vsel %vm861, %v944, %v945
        %v947 = vrot.slane %v945, 4
        %v948 = vrot.slane %v828, 5
        %v949 = vsel %vm861, %v947, %v948
        %v950 = vrot.slane %v948, 4
        %951 = vrot.lane.b32.xlu0 %v865, 8
        %v952 = vpop.permute.xlu0 %951
        %953 = vrot.lane.b32.xlu0 %v868, 8
        %v954 = vpop.permute.xlu0 %953
        %955 = vrot.lane.b32.xlu0 %v871, 8
        %v956 = vpop.permute.xlu0 %955
        %957 = vrot.lane.b32.xlu0 %v874, 8
        %v958 = vpop.permute.xlu0 %957
        %959 = vrot.lane.b32.xlu0 %v877, 8
        %v960 = vpop.permute.xlu0 %959
        %961 = vrot.lane.b32.xlu0 %v880, 8
        %v962 = vpop.permute.xlu0 %961
        %963 = vrot.lane.b32.xlu0 %v883, 8
        %v964 = vpop.permute.xlu0 %963
        %965 = vrot.lane.b32.xlu0 %v886, 8
        %v966 = vpop.permute.xlu0 %965
        %967 = vrot.lane.b32.xlu0 %v889, 8
        %v968 = vpop.permute.xlu0 %967
        %969 = vrot.lane.b32.xlu0 %v892, 8
        %v970 = vpop.permute.xlu0 %969
        %971 = vrot.lane.b32.xlu0 %v895, 8
        %v972 = vpop.permute.xlu0 %971
        %973 = vrot.lane.b32.xlu0 %v898, 8
        %v974 = vpop.permute.xlu0 %973
        %975 = vrot.lane.b32.xlu0 %v901, 8
        %v976 = vpop.permute.xlu0 %975
        %977 = vrot.lane.b32.xlu0 %v904, 8
        %v978 = vpop.permute.xlu0 %977
        %979 = vrot.lane.b32.xlu0 %v907, 8
        %v980 = vpop.permute.xlu0 %979
        %981 = vrot.lane.b32.xlu0 %v910, 8
        %v982 = vpop.permute.xlu0 %981
        %983 = vrot.lane.b32.xlu0 %v913, 8
        %v984 = vpop.permute.xlu0 %983
        %985 = vrot.lane.b32.xlu0 %v916, 8
        %v986 = vpop.permute.xlu0 %985
        %987 = vrot.lane.b32.xlu0 %v919, 8
        %v988 = vpop.permute.xlu0 %987
        %989 = vrot.lane.b32.xlu0 %v922, 8
        %v990 = vpop.permute.xlu0 %989
        %991 = vrot.lane.b32.xlu0 %v925, 8
        %v992 = vpop.permute.xlu0 %991
        %993 = vrot.lane.b32.xlu0 %v928, 8
        %v994 = vpop.permute.xlu0 %993
        %995 = vrot.lane.b32.xlu0 %v931, 8
        %v996 = vpop.permute.xlu0 %995
        %997 = vrot.lane.b32.xlu0 %v934, 8
        %v998 = vpop.permute.xlu0 %997
        %999 = vrot.lane.b32.xlu0 %v937, 8
        %v1000 = vpop.permute.xlu0 %999
        %1001 = vrot.lane.b32.xlu0 %v940, 8
        %v1002 = vpop.permute.xlu0 %1001
        %1003 = vrot.lane.b32.xlu0 %v943, 8
        %v1004 = vpop.permute.xlu0 %1003
        %1005 = vrot.lane.b32.xlu0 %v946, 8
        %v1006 = vpop.permute.xlu0 %1005
        %1007 = vrot.lane.b32.xlu0 %v949, 8
        %v1008 = vpop.permute.xlu0 %1007
        %1009 = vrot.lane.b32.xlu0 %v950, 8
        %v1010 = vpop.permute.xlu0 %1009
        %vm1041 = vcmask 93248
        %1042 = vst.msk [vmem:[#allocation2] sm:$0xf] %vm1041, %v952
        %1043 = vst.msk [vmem:[#allocation2 + $0x4] sm:$0xf] %vm1041, %v954
        %1044 = vst.msk [vmem:[#allocation2 + $0x8] sm:$0xf] %vm1041, %v956
        %1045 = vst.msk [vmem:[#allocation2 + $0xc] sm:$0xf] %vm1041, %v958
        %1046 = vst.msk [vmem:[#allocation2 + $0x10] sm:$0xf] %vm1041, %v960
        %1047 = vst.msk [vmem:[#allocation2 + $0x14] sm:$0xf] %vm1041, %v962
        %1048 = vst.msk [vmem:[#allocation2 + $0x18] sm:$0xf] %vm1041, %v964
        %1049 = vst.msk [vmem:[#allocation2 + $0x1c] sm:$0xf] %vm1041, %v966
        %1050 = vst.msk [vmem:[#allocation2 + $0x20] sm:$0xf] %vm1041, %v968
        %1051 = vst.msk [vmem:[#allocation2 + $0x24] sm:$0xf] %vm1041, %v970
        %1052 = vst.msk [vmem:[#allocation2 + $0x28] sm:$0xf] %vm1041, %v972
        %1053 = vst.msk [vmem:[#allocation2 + $0x2c] sm:$0xf] %vm1041, %v974
        %1054 = vst.msk [vmem:[#allocation2 + $0x30] sm:$0xf] %vm1041, %v976
        %1055 = vst.msk [vmem:[#allocation2 + $0x34] sm:$0xf] %vm1041, %v978
        %1056 = vst.msk [vmem:[#allocation2 + $0x38] sm:$0xf] %vm1041, %v980
        %1057 = vst.msk [vmem:[#allocation2 + $0x3c] sm:$0xf] %vm1041, %v982
        %1058 = vst.msk [vmem:[#allocation2 + $0x40] sm:$0xf] %vm1041, %v984
        %1059 = vst.msk [vmem:[#allocation2 + $0x44] sm:$0xf] %vm1041, %v986
        %1060 = vst.msk [vmem:[#allocation2 + $0x48] sm:$0xf] %vm1041, %v988
        %1061 = vst.msk [vmem:[#allocation2 + $0x4c] sm:$0xf] %vm1041, %v990
        %1062 = vst.msk [vmem:[#allocation2 + $0x50] sm:$0xf] %vm1041, %v992
        %1063 = vst.msk [vmem:[#allocation2 + $0x54] sm:$0xf] %vm1041, %v994
        %1064 = vst.msk [vmem:[#allocation2 + $0x58] sm:$0xf] %vm1041, %v996
        %1065 = vst.msk [vmem:[#allocation2 + $0x5c] sm:$0xf] %vm1041, %v998
        %1066 = vst.msk [vmem:[#allocation2 + $0x60] sm:$0xf] %vm1041, %v1000
        %1067 = vst.msk [vmem:[#allocation2 + $0x64] sm:$0xf] %vm1041, %v1002
        %1068 = vst.msk [vmem:[#allocation2 + $0x68] sm:$0xf] %vm1041, %v1004
        %1069 = vst.msk [vmem:[#allocation2 + $0x6c] sm:$0xf] %vm1041, %v1006
        %1070 = vst.msk [vmem:[#allocation2 + $0x70] sm:$0xf] %vm1041, %v1008
        %vm1071 = vcmask 92224
        %1072 = vst.msk [vmem:[#allocation2 + $0x74] sm:$0x7] %vm1071, %v1010
        %v1073 = vld [vmem:[%s261] sm:$0x1]
        %v1075 = vrot.slane %v1073, 5
        %1076 = vrot.lane.b32.xlu0 %v1075, 8
        %v1077 = vpop.permute.xlu0 %1076
        %vm1079 = vcmask 93251
        %1080 = vst.msk [vmem:[#allocation2 + $0x74] sm:$0x8] %vm1079, %v1077
        %v1081 = vld [vmem:[%s249 + $0x8] sm:$0xe]
        %v1082 = vld [vmem:[%s249 + $0xc] sm:$0xf]
        %v1083 = vld [vmem:[%s249 + $0x10] sm:$0xf]
        %v1084 = vld [vmem:[%s249 + $0x14] sm:$0xf]
        %v1085 = vld [vmem:[%s249 + $0x18] sm:$0xf]
        %v1086 = vld [vmem:[%s249 + $0x1c] sm:$0xf]
        %v1087 = vld [vmem:[%s249 + $0x20] sm:$0xf]
        %v1088 = vld [vmem:[%s249 + $0x24] sm:$0xf]
        %v1089 = vld [vmem:[%s249 + $0x28] sm:$0xf]
        %v1090 = vld [vmem:[%s249 + $0x2c] sm:$0xf]
        %v1091 = vld [vmem:[%s249 + $0x30] sm:$0xf]
        %v1092 = vld [vmem:[%s249 + $0x34] sm:$0xf]
        %v1093 = vld [vmem:[%s249 + $0x38] sm:$0xf]
        %v1094 = vld [vmem:[%s249 + $0x3c] sm:$0xf]
        %v1095 = vld [vmem:[%s249 + $0x40] sm:$0xf]
        %v1096 = vld [vmem:[%s249 + $0x44] sm:$0xf]
        %v1097 = vld [vmem:[%s249 + $0x48] sm:$0xf]
        %v1098 = vld [vmem:[%s249 + $0x4c] sm:$0xf]
        %v1099 = vld [vmem:[%s249 + $0x50] sm:$0xf]
        %v1100 = vld [vmem:[%s249 + $0x54] sm:$0xf]
        %v1101 = vld [vmem:[%s249 + $0x58] sm:$0xf]
        %v1102 = vld [vmem:[%s249 + $0x5c] sm:$0xf]
        %v1103 = vld [vmem:[%s249 + $0x60] sm:$0xf]
        %v1104 = vld [vmem:[%s249 + $0x64] sm:$0xf]
        %v1105 = vld [vmem:[%s249 + $0x68] sm:$0xf]
        %v1106 = vld [vmem:[%s249 + $0x6c] sm:$0xf]
        %v1107 = vld [vmem:[%s249 + $0x70] sm:$0xf]
        %v1108 = vld [vmem:[%s249 + $0x74] sm:$0xf]
        %v1137 = vrot.slane %v1081, 5
        %v1138 = vrot.slane %v1137, 4
        %v1139 = vrot.slane %v1082, 5
        %v1140 = vsel %vm861, %v1138, %v1139
        %v1141 = vrot.slane %v1139, 4
        %v1142 = vrot.slane %v1083, 5
        %v1143 = vsel %vm861, %v1141, %v1142
        %v1144 = vrot.slane %v1142, 4
        %v1145 = vrot.slane %v1084, 5
        %v1146 = vsel %vm861, %v1144, %v1145
        %v1147 = vrot.slane %v1145, 4
        %v1148 = vrot.slane %v1085, 5
        %v1149 = vsel %vm861, %v1147, %v1148
        %v1150 = vrot.slane %v1148, 4
        %v1151 = vrot.slane %v1086, 5
        %v1152 = vsel %vm861, %v1150, %v1151
        %v1153 = vrot.slane %v1151, 4
        %v1154 = vrot.slane %v1087, 5
        %v1155 = vsel %vm861, %v1153, %v1154
        %v1156 = vrot.slane %v1154, 4
        %v1157 = vrot.slane %v1088, 5
        %v1158 = vsel %vm861, %v1156, %v1157
        %v1159 = vrot.slane %v1157, 4
        %v1160 = vrot.slane %v1089, 5
        %v1161 = vsel %vm861, %v1159, %v1160
        %v1162 = vrot.slane %v1160, 4
        %v1163 = vrot.slane %v1090, 5
        %v1164 = vsel %vm861, %v1162, %v1163
        %v1165 = vrot.slane %v1163, 4
        %v1166 = vrot.slane %v1091, 5
        %v1167 = vsel %vm861, %v1165, %v1166
        %v1168 = vrot.slane %v1166, 4
        %v1169 = vrot.slane %v1092, 5
        %v1170 = vsel %vm861, %v1168, %v1169
        %v1171 = vrot.slane %v1169, 4
        %v1172 = vrot.slane %v1093, 5
        %v1173 = vsel %vm861, %v1171, %v1172
        %v1174 = vrot.slane %v1172, 4
        %v1175 = vrot.slane %v1094, 5
        %v1176 = vsel %vm861, %v1174, %v1175
        %v1177 = vrot.slane %v1175, 4
        %v1178 = vrot.slane %v1095, 5
        %v1179 = vsel %vm861, %v1177, %v1178
        %v1180 = vrot.slane %v1178, 4
        %v1181 = vrot.slane %v1096, 5
        %v1182 = vsel %vm861, %v1180, %v1181
        %v1183 = vrot.slane %v1181, 4
        %v1184 = vrot.slane %v1097, 5
        %v1185 = vsel %vm861, %v1183, %v1184
        %v1186 = vrot.slane %v1184, 4
        %v1187 = vrot.slane %v1098, 5
        %v1188 = vsel %vm861, %v1186, %v1187
        %v1189 = vrot.slane %v1187, 4
        %v1190 = vrot.slane %v1099, 5
        %v1191 = vsel %vm861, %v1189, %v1190
        %v1192 = vrot.slane %v1190, 4
        %v1193 = vrot.slane %v1100, 5
        %v1194 = vsel %vm861, %v1192, %v1193
        %v1195 = vrot.slane %v1193, 4
        %v1196 = vrot.slane %v1101, 5
        %v1197 = vsel %vm861, %v1195, %v1196
        %v1198 = vrot.slane %v1196, 4
        %v1199 = vrot.slane %v1102, 5
        %v1200 = vsel %vm861, %v1198, %v1199
        %v1201 = vrot.slane %v1199, 4
        %v1202 = vrot.slane %v1103, 5
        %v1203 = vsel %vm861, %v1201, %v1202
        %v1204 = vrot.slane %v1202, 4
        %v1205 = vrot.slane %v1104, 5
        %v1206 = vsel %vm861, %v1204, %v1205
        %v1207 = vrot.slane %v1205, 4
        %v1208 = vrot.slane %v1105, 5
        %v1209 = vsel %vm861, %v1207, %v1208
        %v1210 = vrot.slane %v1208, 4
        %v1211 = vrot.slane %v1106, 5
        %v1212 = vsel %vm861, %v1210, %v1211
        %v1213 = vrot.slane %v1211, 4
        %v1214 = vrot.slane %v1107, 5
        %v1215 = vsel %vm861, %v1213, %v1214
        %v1216 = vrot.slane %v1214, 4
        %v1217 = vrot.slane %v1108, 5
        %v1218 = vsel %vm861, %v1216, %v1217
        %v1219 = vrot.slane %v1217, 4
        %1220 = vrot.lane.b32.xlu0 %v1140, 12
        %v1221 = vpop.permute.xlu0 %1220
        %1222 = vrot.lane.b32.xlu0 %v1143, 12
        %v1223 = vpop.permute.xlu0 %1222
        %1224 = vrot.lane.b32.xlu0 %v1146, 12
        %v1225 = vpop.permute.xlu0 %1224
        %1226 = vrot.lane.b32.xlu0 %v1149, 12
        %v1227 = vpop.permute.xlu0 %1226
        %1228 = vrot.lane.b32.xlu0 %v1152, 12
        %v1229 = vpop.permute.xlu0 %1228
        %1230 = vrot.lane.b32.xlu0 %v1155, 12
        %v1231 = vpop.permute.xlu0 %1230
        %1232 = vrot.lane.b32.xlu0 %v1158, 12
        %v1233 = vpop.permute.xlu0 %1232
        %1234 = vrot.lane.b32.xlu0 %v1161, 12
        %v1235 = vpop.permute.xlu0 %1234
        %1236 = vrot.lane.b32.xlu0 %v1164, 12
        %v1237 = vpop.permute.xlu0 %1236
        %1238 = vrot.lane.b32.xlu0 %v1167, 12
        %v1239 = vpop.permute.xlu0 %1238
        %1240 = vrot.lane.b32.xlu0 %v1170, 12
        %v1241 = vpop.permute.xlu0 %1240
        %1242 = vrot.lane.b32.xlu0 %v1173, 12
        %v1243 = vpop.permute.xlu0 %1242
        %1244 = vrot.lane.b32.xlu0 %v1176, 12
        %v1245 = vpop.permute.xlu0 %1244
        %1246 = vrot.lane.b32.xlu0 %v1179, 12
        %v1247 = vpop.permute.xlu0 %1246
        %1248 = vrot.lane.b32.xlu0 %v1182, 12
        %v1249 = vpop.permute.xlu0 %1248
        %1250 = vrot.lane.b32.xlu0 %v1185, 12
        %v1251 = vpop.permute.xlu0 %1250
        %1252 = vrot.lane.b32.xlu0 %v1188, 12
        %v1253 = vpop.permute.xlu0 %1252
        %1254 = vrot.lane.b32.xlu0 %v1191, 12
        %v1255 = vpop.permute.xlu0 %1254
        %1256 = vrot.lane.b32.xlu0 %v1194, 12
        %v1257 = vpop.permute.xlu0 %1256
        %1258 = vrot.lane.b32.xlu0 %v1197, 12
        %v1259 = vpop.permute.xlu0 %1258
        %1260 = vrot.lane.b32.xlu0 %v1200, 12
        %v1261 = vpop.permute.xlu0 %1260
        %1262 = vrot.lane.b32.xlu0 %v1203, 12
        %v1263 = vpop.permute.xlu0 %1262
        %1264 = vrot.lane.b32.xlu0 %v1206, 12
        %v1265 = vpop.permute.xlu0 %1264
        %1266 = vrot.lane.b32.xlu0 %v1209, 12
        %v1267 = vpop.permute.xlu0 %1266
        %1268 = vrot.lane.b32.xlu0 %v1212, 12
        %v1269 = vpop.permute.xlu0 %1268
        %1270 = vrot.lane.b32.xlu0 %v1215, 12
        %v1271 = vpop.permute.xlu0 %1270
        %1272 = vrot.lane.b32.xlu0 %v1218, 12
        %v1273 = vpop.permute.xlu0 %1272
        %1274 = vrot.lane.b32.xlu0 %v1219, 12
        %v1275 = vpop.permute.xlu0 %1274
        %vm1304 = vcmask 126048
        %1305 = vst.msk [vmem:[#allocation2] sm:$0xf] %vm1304, %v1221
        %1306 = vst.msk [vmem:[#allocation2 + $0x4] sm:$0xf] %vm1304, %v1223
        %1307 = vst.msk [vmem:[#allocation2 + $0x8] sm:$0xf] %vm1304, %v1225
        %1308 = vst.msk [vmem:[#allocation2 + $0xc] sm:$0xf] %vm1304, %v1227
        %1309 = vst.msk [vmem:[#allocation2 + $0x10] sm:$0xf] %vm1304, %v1229
        %1310 = vst.msk [vmem:[#allocation2 + $0x14] sm:$0xf] %vm1304, %v1231
        %1311 = vst.msk [vmem:[#allocation2 + $0x18] sm:$0xf] %vm1304, %v1233
        %1312 = vst.msk [vmem:[#allocation2 + $0x1c] sm:$0xf] %vm1304, %v1235
        %1313 = vst.msk [vmem:[#allocation2 + $0x20] sm:$0xf] %vm1304, %v1237
        %1314 = vst.msk [vmem:[#allocation2 + $0x24] sm:$0xf] %vm1304, %v1239
        %1315 = vst.msk [vmem:[#allocation2 + $0x28] sm:$0xf] %vm1304, %v1241
        %1316 = vst.msk [vmem:[#allocation2 + $0x2c] sm:$0xf] %vm1304, %v1243
        %1317 = vst.msk [vmem:[#allocation2 + $0x30] sm:$0xf] %vm1304, %v1245
        %1318 = vst.msk [vmem:[#allocation2 + $0x34] sm:$0xf] %vm1304, %v1247
        %1319 = vst.msk [vmem:[#allocation2 + $0x38] sm:$0xf] %vm1304, %v1249
        %1320 = vst.msk [vmem:[#allocation2 + $0x3c] sm:$0xf] %vm1304, %v1251
        %1321 = vst.msk [vmem:[#allocation2 + $0x40] sm:$0xf] %vm1304, %v1253
        %1322 = vst.msk [vmem:[#allocation2 + $0x44] sm:$0xf] %vm1304, %v1255
        %1323 = vst.msk [vmem:[#allocation2 + $0x48] sm:$0xf] %vm1304, %v1257
        %1324 = vst.msk [vmem:[#allocation2 + $0x4c] sm:$0xf] %vm1304, %v1259
        %1325 = vst.msk [vmem:[#allocation2 + $0x50] sm:$0xf] %vm1304, %v1261
        %1326 = vst.msk [vmem:[#allocation2 + $0x54] sm:$0xf] %vm1304, %v1263
        %1327 = vst.msk [vmem:[#allocation2 + $0x58] sm:$0xf] %vm1304, %v1265
        %1328 = vst.msk [vmem:[#allocation2 + $0x5c] sm:$0xf] %vm1304, %v1267
        %1329 = vst.msk [vmem:[#allocation2 + $0x60] sm:$0xf] %vm1304, %v1269
        %1330 = vst.msk [vmem:[#allocation2 + $0x64] sm:$0xf] %vm1304, %v1271
        %1331 = vst.msk [vmem:[#allocation2 + $0x68] sm:$0xf] %vm1304, %v1273
        %vm1332 = vcmask 125024
        %1333 = vst.msk [vmem:[#allocation2 + $0x6c] sm:$0x7] %vm1332, %v1275
        %v1334 = vld [vmem:[%s261] sm:$0xf]
        %v1335 = vld [vmem:[%s261 + $0x4] sm:$0xf]
        %v1336 = vld [vmem:[%s261 + $0x8] sm:$0x1]
        %v1340 = vrot.slane %v1334, 5
        %v1341 = vrot.slane %v1340, 4
        %v1342 = vrot.slane %v1335, 5
        %v1343 = vsel %vm861, %v1341, %v1342
        %v1344 = vrot.slane %v1342, 4
        %v1345 = vrot.slane %v1336, 5
        %v1346 = vsel %vm861, %v1344, %v1345
        %1347 = vrot.lane.b32.xlu0 %v1340, 12
        %v1348 = vpop.permute.xlu0 %1347
        %1349 = vrot.lane.b32.xlu0 %v1343, 12
        %v1350 = vpop.permute.xlu0 %1349
        %1351 = vrot.lane.b32.xlu0 %v1346, 12
        %v1352 = vpop.permute.xlu0 %1351
        %vm1356 = vcmask 126051
        %1357 = vst.msk [vmem:[#allocation2 + $0x6c] sm:$0x8] %vm1356, %v1348
        %1358 = vst.msk [vmem:[#allocation2 + $0x70] sm:$0xf] %vm1304, %v1350
        %1359 = vst.msk [vmem:[#allocation2 + $0x74] sm:$0xf] %vm1304, %v1352
        %v1360 = vld [vmem:[%s249 + $0x8] sm:$0xe]
        %v1361 = vld [vmem:[%s249 + $0xc] sm:$0xf]
        %v1362 = vld [vmem:[%s249 + $0x10] sm:$0xf]
        %v1363 = vld [vmem:[%s249 + $0x14] sm:$0xf]
        %v1364 = vld [vmem:[%s249 + $0x18] sm:$0xf]
        %v1365 = vld [vmem:[%s249 + $0x1c] sm:$0xf]
        %v1366 = vld [vmem:[%s249 + $0x20] sm:$0xf]
        %v1367 = vld [vmem:[%s249 + $0x24] sm:$0xf]
        %v1368 = vld [vmem:[%s249 + $0x28] sm:$0xf]
        %v1369 = vld [vmem:[%s249 + $0x2c] sm:$0xf]
        %v1370 = vld [vmem:[%s249 + $0x30] sm:$0xf]
        %v1371 = vld [vmem:[%s249 + $0x34] sm:$0xf]
        %v1372 = vld [vmem:[%s249 + $0x38] sm:$0xf]
        %v1373 = vld [vmem:[%s249 + $0x3c] sm:$0xf]
        %v1374 = vld [vmem:[%s249 + $0x40] sm:$0xf]
        %v1375 = vld [vmem:[%s249 + $0x44] sm:$0xf]
        %v1376 = vld [vmem:[%s249 + $0x48] sm:$0xf]
        %v1377 = vld [vmem:[%s249 + $0x4c] sm:$0xf]
        %v1378 = vld [vmem:[%s249 + $0x50] sm:$0xf]
        %v1379 = vld [vmem:[%s249 + $0x54] sm:$0xf]
        %v1380 = vld [vmem:[%s249 + $0x58] sm:$0xf]
        %v1381 = vld [vmem:[%s249 + $0x5c] sm:$0xf]
        %v1382 = vld [vmem:[%s249 + $0x60] sm:$0xf]
        %v1383 = vld [vmem:[%s249 + $0x64] sm:$0xf]
        %v1384 = vld [vmem:[%s249 + $0x68] sm:$0xf]
        %v1385 = vld [vmem:[%s249 + $0x6c] sm:$0xf]
        %v1386 = vld [vmem:[%s249 + $0x70] sm:$0xf]
        %v1387 = vld [vmem:[%s249 + $0x74] sm:$0xf]
        %vm1388 = vsmask.f32 2304
        %vm1389 = vsmask.f32 6416
        %vm1390 = vmor %vm1388, %vm1389
        %v1392 = vshrl.u32 %v1360, 16
        %v1394 = vrot.slane %v1392, 5
        %v1395 = vshll.u32 %v1360, 16
        %v1397 = vrot.slane %v1395, 6
        %v1398 = vor.u32 %v1394, %v1397
        %v1399 = vrot.slane %v1398, 4
        %v1401 = vshrl.u32 %v1361, 16
        %v1403 = vrot.slane %v1401, 5
        %v1404 = vshll.u32 %v1361, 16
        %v1406 = vrot.slane %v1404, 6
        %v1407 = vor.u32 %v1403, %v1406
        %v1408 = vsel %vm1390, %v1399, %v1407
        %v1409 = vrot.slane %v1407, 4
        %v1411 = vshrl.u32 %v1362, 16
        %v1413 = vrot.slane %v1411, 5
        %v1414 = vshll.u32 %v1362, 16
        %v1416 = vrot.slane %v1414, 6
        %v1417 = vor.u32 %v1413, %v1416
        %v1418 = vsel %vm1390, %v1409, %v1417
        %v1419 = vrot.slane %v1417, 4
        %v1421 = vshrl.u32 %v1363, 16
        %v1423 = vrot.slane %v1421, 5
        %v1424 = vshll.u32 %v1363, 16
        %v1426 = vrot.slane %v1424, 6
        %v1427 = vor.u32 %v1423, %v1426
        %v1428 = vsel %vm1390, %v1419, %v1427
        %v1429 = vrot.slane %v1427, 4
        %v1431 = vshrl.u32 %v1364, 16
        %v1433 = vrot.slane %v1431, 5
        %v1434 = vshll.u32 %v1364, 16
        %v1436 = vrot.slane %v1434, 6
        %v1437 = vor.u32 %v1433, %v1436
        %v1438 = vsel %vm1390, %v1429, %v1437
        %v1439 = vrot.slane %v1437, 4
        %v1441 = vshrl.u32 %v1365, 16
        %v1443 = vrot.slane %v1441, 5
        %v1444 = vshll.u32 %v1365, 16
        %v1446 = vrot.slane %v1444, 6
        %v1447 = vor.u32 %v1443, %v1446
        %v1448 = vsel %vm1390, %v1439, %v1447
        %v1449 = vrot.slane %v1447, 4
        %v1451 = vshrl.u32 %v1366, 16
        %v1453 = vrot.slane %v1451, 5
        %v1454 = vshll.u32 %v1366, 16
        %v1456 = vrot.slane %v1454, 6
        %v1457 = vor.u32 %v1453, %v1456
        %v1458 = vsel %vm1390, %v1449, %v1457
        %v1459 = vrot.slane %v1457, 4
        %v1461 = vshrl.u32 %v1367, 16
        %v1463 = vrot.slane %v1461, 5
        %v1464 = vshll.u32 %v1367, 16
        %v1466 = vrot.slane %v1464, 6
        %v1467 = vor.u32 %v1463, %v1466
        %v1468 = vsel %vm1390, %v1459, %v1467
        %v1469 = vrot.slane %v1467, 4
        %v1471 = vshrl.u32 %v1368, 16
        %v1473 = vrot.slane %v1471, 5
        %v1474 = vshll.u32 %v1368, 16
        %v1476 = vrot.slane %v1474, 6
        %v1477 = vor.u32 %v1473, %v1476
        %v1478 = vsel %vm1390, %v1469, %v1477
        %v1479 = vrot.slane %v1477, 4
        %v1481 = vshrl.u32 %v1369, 16
        %v1483 = vrot.slane %v1481, 5
        %v1484 = vshll.u32 %v1369, 16
        %v1486 = vrot.slane %v1484, 6
        %v1487 = vor.u32 %v1483, %v1486
        %v1488 = vsel %vm1390, %v1479, %v1487
        %v1489 = vrot.slane %v1487, 4
        %v1491 = vshrl.u32 %v1370, 16
        %v1493 = vrot.slane %v1491, 5
        %v1494 = vshll.u32 %v1370, 16
        %v1496 = vrot.slane %v1494, 6
        %v1497 = vor.u32 %v1493, %v1496
        %v1498 = vsel %vm1390, %v1489, %v1497
        %v1499 = vrot.slane %v1497, 4
        %v1501 = vshrl.u32 %v1371, 16
        %v1503 = vrot.slane %v1501, 5
        %v1504 = vshll.u32 %v1371, 16
        %v1506 = vrot.slane %v1504, 6
        %v1507 = vor.u32 %v1503, %v1506
        %v1508 = vsel %vm1390, %v1499, %v1507
        %v1509 = vrot.slane %v1507, 4
        %v1511 = vshrl.u32 %v1372, 16
        %v1513 = vrot.slane %v1511, 5
        %v1514 = vshll.u32 %v1372, 16
        %v1516 = vrot.slane %v1514, 6
        %v1517 = vor.u32 %v1513, %v1516
        %v1518 = vsel %vm1390, %v1509, %v1517
        %v1519 = vrot.slane %v1517, 4
        %v1521 = vshrl.u32 %v1373, 16
        %v1523 = vrot.slane %v1521, 5
        %v1524 = vshll.u32 %v1373, 16
        %v1526 = vrot.slane %v1524, 6
        %v1527 = vor.u32 %v1523, %v1526
        %v1528 = vsel %vm1390, %v1519, %v1527
        %v1529 = vrot.slane %v1527, 4
        %v1531 = vshrl.u32 %v1374, 16
        %v1533 = vrot.slane %v1531, 5
        %v1534 = vshll.u32 %v1374, 16
        %v1536 = vrot.slane %v1534, 6
        %v1537 = vor.u32 %v1533, %v1536
        %v1538 = vsel %vm1390, %v1529, %v1537
        %v1539 = vrot.slane %v1537, 4
        %v1541 = vshrl.u32 %v1375, 16
        %v1543 = vrot.slane %v1541, 5
        %v1544 = vshll.u32 %v1375, 16
        %v1546 = vrot.slane %v1544, 6
        %v1547 = vor.u32 %v1543, %v1546
        %v1548 = vsel %vm1390, %v1539, %v1547
        %v1549 = vrot.slane %v1547, 4
        %v1551 = vshrl.u32 %v1376, 16
        %v1553 = vrot.slane %v1551, 5
        %v1554 = vshll.u32 %v1376, 16
        %v1556 = vrot.slane %v1554, 6
        %v1557 = vor.u32 %v1553, %v1556
        %v1558 = vsel %vm1390, %v1549, %v1557
        %v1559 = vrot.slane %v1557, 4
        %v1561 = vshrl.u32 %v1377, 16
        %v1563 = vrot.slane %v1561, 5
        %v1564 = vshll.u32 %v1377, 16
        %v1566 = vrot.slane %v1564, 6
        %v1567 = vor.u32 %v1563, %v1566
        %v1568 = vsel %vm1390, %v1559, %v1567
        %v1569 = vrot.slane %v1567, 4
        %v1571 = vshrl.u32 %v1378, 16
        %v1573 = vrot.slane %v1571, 5
        %v1574 = vshll.u32 %v1378, 16
        %v1576 = vrot.slane %v1574, 6
        %v1577 = vor.u32 %v1573, %v1576
        %v1578 = vsel %vm1390, %v1569, %v1577
        %v1579 = vrot.slane %v1577, 4
        %v1581 = vshrl.u32 %v1379, 16
        %v1583 = vrot.slane %v1581, 5
        %v1584 = vshll.u32 %v1379, 16
        %v1586 = vrot.slane %v1584, 6
        %v1587 = vor.u32 %v1583, %v1586
        %v1588 = vsel %vm1390, %v1579, %v1587
        %v1589 = vrot.slane %v1587, 4
        %v1591 = vshrl.u32 %v1380, 16
        %v1593 = vrot.slane %v1591, 5
        %v1594 = vshll.u32 %v1380, 16
        %v1596 = vrot.slane %v1594, 6
        %v1597 = vor.u32 %v1593, %v1596
        %v1598 = vsel %vm1390, %v1589, %v1597
        %v1599 = vrot.slane %v1597, 4
        %v1601 = vshrl.u32 %v1381, 16
        %v1603 = vrot.slane %v1601, 5
        %v1604 = vshll.u32 %v1381, 16
        %v1606 = vrot.slane %v1604, 6
        %v1607 = vor.u32 %v1603, %v1606
        %v1608 = vsel %vm1390, %v1599, %v1607
        %v1609 = vrot.slane %v1607, 4
        %v1611 = vshrl.u32 %v1382, 16
        %v1613 = vrot.slane %v1611, 5
        %v1614 = vshll.u32 %v1382, 16
        %v1616 = vrot.slane %v1614, 6
        %v1617 = vor.u32 %v1613, %v1616
        %v1618 = vsel %vm1390, %v1609, %v1617
        %v1619 = vrot.slane %v1617, 4
        %v1621 = vshrl.u32 %v1383, 16
        %v1623 = vrot.slane %v1621, 5
        %v1624 = vshll.u32 %v1383, 16
        %v1626 = vrot.slane %v1624, 6
        %v1627 = vor.u32 %v1623, %v1626
        %v1628 = vsel %vm1390, %v1619, %v1627
        %v1629 = vrot.slane %v1627, 4
        %v1631 = vshrl.u32 %v1384, 16
        %v1633 = vrot.slane %v1631, 5
        %v1634 = vshll.u32 %v1384, 16
        %v1636 = vrot.slane %v1634, 6
        %v1637 = vor.u32 %v1633, %v1636
        %v1638 = vsel %vm1390, %v1629, %v1637
        %v1639 = vrot.slane %v1637, 4
        %v1641 = vshrl.u32 %v1385, 16
        %v1643 = vrot.slane %v1641, 5
        %v1644 = vshll.u32 %v1385, 16
        %v1646 = vrot.slane %v1644, 6
        %v1647 = vor.u32 %v1643, %v1646
        %v1648 = vsel %vm1390, %v1639, %v1647
        %v1649 = vrot.slane %v1647, 4
        %v1651 = vshrl.u32 %v1386, 16
        %v1653 = vrot.slane %v1651, 5
        %v1654 = vshll.u32 %v1386, 16
        %v1656 = vrot.slane %v1654, 6
        %v1657 = vor.u32 %v1653, %v1656
        %v1658 = vsel %vm1390, %v1649, %v1657
        %v1659 = vrot.slane %v1657, 4
        %v1661 = vshrl.u32 %v1387, 16
        %v1663 = vrot.slane %v1661, 5
        %v1664 = vshll.u32 %v1387, 16
        %v1666 = vrot.slane %v1664, 6
        %v1667 = vor.u32 %v1663, %v1666
        %v1668 = vsel %vm1390, %v1659, %v1667
        %v1669 = vrot.slane %v1667, 4
        %1670 = vrot.lane.b32.xlu0 %v1408, 16
        %v1671 = vpop.permute.xlu0 %1670
        %1672 = vrot.lane.b32.xlu0 %v1418, 16
        %v1673 = vpop.permute.xlu0 %1672
        %1674 = vrot.lane.b32.xlu0 %v1428, 16
        %v1675 = vpop.permute.xlu0 %1674
        %1676 = vrot.lane.b32.xlu0 %v1438, 16
        %v1677 = vpop.permute.xlu0 %1676
        %1678 = vrot.lane.b32.xlu0 %v1448, 16
        %v1679 = vpop.permute.xlu0 %1678
        %1680 = vrot.lane.b32.xlu0 %v1458, 16
        %v1681 = vpop.permute.xlu0 %1680
        %1682 = vrot.lane.b32.xlu0 %v1468, 16
        %v1683 = vpop.permute.xlu0 %1682
        %1684 = vrot.lane.b32.xlu0 %v1478, 16
        %v1685 = vpop.permute.xlu0 %1684
        %1686 = vrot.lane.b32.xlu0 %v1488, 16
        %v1687 = vpop.permute.xlu0 %1686
        %1688 = vrot.lane.b32.xlu0 %v1498, 16
        %v1689 = vpop.permute.xlu0 %1688
        %1690 = vrot.lane.b32.xlu0 %v1508, 16
        %v1691 = vpop.permute.xlu0 %1690
        %1692 = vrot.lane.b32.xlu0 %v1518, 16
        %v1693 = vpop.permute.xlu0 %1692
        %1694 = vrot.lane.b32.xlu0 %v1528, 16
        %v1695 = vpop.permute.xlu0 %1694
        %1696 = vrot.lane.b32.xlu0 %v1538, 16
        %v1697 = vpop.permute.xlu0 %1696
        %1698 = vrot.lane.b32.xlu0 %v1548, 16
        %v1699 = vpop.permute.xlu0 %1698
        %1700 = vrot.lane.b32.xlu0 %v1558, 16
        %v1701 = vpop.permute.xlu0 %1700
        %1702 = vrot.lane.b32.xlu0 %v1568, 16
        %v1703 = vpop.permute.xlu0 %1702
        %1704 = vrot.lane.b32.xlu0 %v1578, 16
        %v1705 = vpop.permute.xlu0 %1704
        %1706 = vrot.lane.b32.xlu0 %v1588, 16
        %v1707 = vpop.permute.xlu0 %1706
        %1708 = vrot.lane.b32.xlu0 %v1598, 16
        %v1709 = vpop.permute.xlu0 %1708
        %1710 = vrot.lane.b32.xlu0 %v1608, 16
        %v1711 = vpop.permute.xlu0 %1710
        %1712 = vrot.lane.b32.xlu0 %v1618, 16
        %v1713 = vpop.permute.xlu0 %1712
        %1714 = vrot.lane.b32.xlu0 %v1628, 16
        %v1715 = vpop.permute.xlu0 %1714
        %1716 = vrot.lane.b32.xlu0 %v1638, 16
        %v1717 = vpop.permute.xlu0 %1716
        %1718 = vrot.lane.b32.xlu0 %v1648, 16
        %v1719 = vpop.permute.xlu0 %1718
        %1720 = vrot.lane.b32.xlu0 %v1658, 16
        %v1721 = vpop.permute.xlu0 %1720
        %1722 = vrot.lane.b32.xlu0 %v1668, 16
        %v1723 = vpop.permute.xlu0 %1722
        %1724 = vrot.lane.b32.xlu0 %v1669, 16
        %v1725 = vpop.permute.xlu0 %1724
        %vm1754 = vcmask 158848
        %1755 = vst.msk [vmem:[#allocation2] sm:$0xf] %vm1754, %v1671
        %1756 = vst.msk [vmem:[#allocation2 + $0x4] sm:$0xf] %vm1754, %v1673
        %1757 = vst.msk [vmem:[#allocation2 + $0x8] sm:$0xf] %vm1754, %v1675
        %1758 = vst.msk [vmem:[#allocation2 + $0xc] sm:$0xf] %vm1754, %v1677
        %1759 = vst.msk [vmem:[#allocation2 + $0x10] sm:$0xf] %vm1754, %v1679
        %1760 = vst.msk [vmem:[#allocation2 + $0x14] sm:$0xf] %vm1754, %v1681
        %1761 = vst.msk [vmem:[#allocation2 + $0x18] sm:$0xf] %vm1754, %v1683
        %1762 = vst.msk [vmem:[#allocation2 + $0x1c] sm:$0xf] %vm1754, %v1685
        %1763 = vst.msk [vmem:[#allocation2 + $0x20] sm:$0xf] %vm1754, %v1687
        %1764 = vst.msk [vmem:[#allocation2 + $0x24] sm:$0xf] %vm1754, %v1689
        %1765 = vst.msk [vmem:[#allocation2 + $0x28] sm:$0xf] %vm1754, %v1691
        %1766 = vst.msk [vmem:[#allocation2 + $0x2c] sm:$0xf] %vm1754, %v1693
        %1767 = vst.msk [vmem:[#allocation2 + $0x30] sm:$0xf] %vm1754, %v1695
        %1768 = vst.msk [vmem:[#allocation2 + $0x34] sm:$0xf] %vm1754, %v1697
        %1769 = vst.msk [vmem:[#allocation2 + $0x38] sm:$0xf] %vm1754, %v1699
        %1770 = vst.msk [vmem:[#allocation2 + $0x3c] sm:$0xf] %vm1754, %v1701
        %1771 = vst.msk [vmem:[#allocation2 + $0x40] sm:$0xf] %vm1754, %v1703
        %1772 = vst.msk [vmem:[#allocation2 + $0x44] sm:$0xf] %vm1754, %v1705
        %1773 = vst.msk [vmem:[#allocation2 + $0x48] sm:$0xf] %vm1754, %v1707
        %1774 = vst.msk [vmem:[#allocation2 + $0x4c] sm:$0xf] %vm1754, %v1709
        %1775 = vst.msk [vmem:[#allocation2 + $0x50] sm:$0xf] %vm1754, %v1711
        %1776 = vst.msk [vmem:[#allocation2 + $0x54] sm:$0xf] %vm1754, %v1713
        %1777 = vst.msk [vmem:[#allocation2 + $0x58] sm:$0xf] %vm1754, %v1715
        %1778 = vst.msk [vmem:[#allocation2 + $0x5c] sm:$0xf] %vm1754, %v1717
        %1779 = vst.msk [vmem:[#allocation2 + $0x60] sm:$0xf] %vm1754, %v1719
        %1780 = vst.msk [vmem:[#allocation2 + $0x64] sm:$0xf] %vm1754, %v1721
        %1781 = vst.msk [vmem:[#allocation2 + $0x68] sm:$0xf] %vm1754, %v1723
        %vm1782 = vcmask 157824
        %vm1783 = vmand %vm1782, %vm1388
        %v1784 = vld [vmem:[#allocation2 + $0x6c] sm:$0x7]
        %v1785 = vsel %vm1783, %v1725, %v1784
        %1786 = vst [vmem:[#allocation2 + $0x6c] sm:$0x7] %v1785
        %v1787 = vld [vmem:[%s261] sm:$0xf]
        %v1788 = vld [vmem:[%s261 + $0x4] sm:$0xf]
        %v1789 = vld [vmem:[%s261 + $0x8] sm:$0x3]
        %v1791 = vshrl.u32 %v1787, 16
        %v1793 = vrot.slane %v1791, 5
        %v1794 = vshll.u32 %v1787, 16
        %v1796 = vrot.slane %v1794, 6
        %v1797 = vor.u32 %v1793, %v1796
        %v1798 = vrot.slane %v1797, 4
        %v1800 = vshrl.u32 %v1788, 16
        %v1802 = vrot.slane %v1800, 5
        %v1803 = vshll.u32 %v1788, 16
        %v1805 = vrot.slane %v1803, 6
        %v1806 = vor.u32 %v1802, %v1805
        %v1807 = vsel %vm1390, %v1798, %v1806
        %v1808 = vrot.slane %v1806, 4
        %v1810 = vshrl.u32 %v1789, 16
        %v1812 = vrot.slane %v1810, 5
        %v1813 = vshll.u32 %v1789, 16
        %v1815 = vrot.slane %v1813, 6
        %v1816 = vor.u32 %v1812, %v1815
        %v1817 = vsel %vm1390, %v1808, %v1816
        %1818 = vrot.lane.b32.xlu0 %v1797, 16
        %v1819 = vpop.permute.xlu0 %1818
        %1820 = vrot.lane.b32.xlu0 %v1807, 16
        %v1821 = vpop.permute.xlu0 %1820
        %1822 = vrot.lane.b32.xlu0 %v1817, 16
        %v1823 = vpop.permute.xlu0 %1822
        %vm1827 = vcmask 158850
        %vm1828 = vsmask.f32 7946
        %vm1829 = vmand %vm1827, %vm1828
        %v1830 = vld [vmem:[#allocation2 + $0x6c] sm:$0xc]
        %v1831 = vsel %vm1829, %v1819, %v1830
        %1832 = vst [vmem:[#allocation2 + $0x6c] sm:$0xc] %v1831
        %1833 = vst.msk [vmem:[#allocation2 + $0x70] sm:$0xf] %vm1754, %v1821
        %1834 = vst.msk [vmem:[#allocation2 + $0x74] sm:$0xf] %vm1754, %v1823
        %v1835 = vld [vmem:[%s249 + $0x8] sm:$0xc]
        %v1836 = vld [vmem:[%s249 + $0xc] sm:$0xf]
        %v1837 = vld [vmem:[%s249 + $0x10] sm:$0xf]
        %v1838 = vld [vmem:[%s249 + $0x14] sm:$0xf]
        %v1839 = vld [vmem:[%s249 + $0x18] sm:$0xf]
        %v1840 = vld [vmem:[%s249 + $0x1c] sm:$0xf]
        %v1841 = vld [vmem:[%s249 + $0x20] sm:$0xf]
        %v1842 = vld [vmem:[%s249 + $0x24] sm:$0xf]
        %v1843 = vld [vmem:[%s249 + $0x28] sm:$0xf]
        %v1844 = vld [vmem:[%s249 + $0x2c] sm:$0xf]
        %v1845 = vld [vmem:[%s249 + $0x30] sm:$0xf]
        %v1846 = vld [vmem:[%s249 + $0x34] sm:$0xf]
        %v1847 = vld [vmem:[%s249 + $0x38] sm:$0xf]
        %v1848 = vld [vmem:[%s249 + $0x3c] sm:$0xf]
        %v1849 = vld [vmem:[%s249 + $0x40] sm:$0xf]
        %v1850 = vld [vmem:[%s249 + $0x44] sm:$0xf]
        %v1851 = vld [vmem:[%s249 + $0x48] sm:$0xf]
        %v1852 = vld [vmem:[%s249 + $0x4c] sm:$0xf]
        %v1853 = vld [vmem:[%s249 + $0x50] sm:$0xf]
        %v1854 = vld [vmem:[%s249 + $0x54] sm:$0xf]
        %v1855 = vld [vmem:[%s249 + $0x58] sm:$0xf]
        %v1856 = vld [vmem:[%s249 + $0x5c] sm:$0xf]
        %v1857 = vld [vmem:[%s249 + $0x60] sm:$0xf]
        %v1858 = vld [vmem:[%s249 + $0x64] sm:$0xf]
        %v1859 = vld [vmem:[%s249 + $0x68] sm:$0xf]
        %v1860 = vld [vmem:[%s249 + $0x6c] sm:$0xf]
        %v1861 = vld [vmem:[%s249 + $0x70] sm:$0xf]
        %v1862 = vld [vmem:[%s249 + $0x74] sm:$0xf]
        %vm1891 = vcmask 1041408
        %vm1892 = vcmask 1045508
        %vm1893 = vmor %vm1891, %vm1892
        %v1894 = vrot.slane %v1835, 6
        %v1895 = vrot.slane %v1894, 4
        %v1896 = vrot.slane %v1836, 6
        %v1897 = vsel %vm1893, %v1895, %v1896
        %v1898 = vrot.slane %v1896, 4
        %v1899 = vrot.slane %v1837, 6
        %v1900 = vsel %vm1893, %v1898, %v1899
        %v1901 = vrot.slane %v1899, 4
        %v1902 = vrot.slane %v1838, 6
        %v1903 = vsel %vm1893, %v1901, %v1902
        %v1904 = vrot.slane %v1902, 4
        %v1905 = vrot.slane %v1839, 6
        %v1906 = vsel %vm1893, %v1904, %v1905
        %v1907 = vrot.slane %v1905, 4
        %v1908 = vrot.slane %v1840, 6
        %v1909 = vsel %vm1893, %v1907, %v1908
        %v1910 = vrot.slane %v1908, 4
        %v1911 = vrot.slane %v1841, 6
        %v1912 = vsel %vm1893, %v1910, %v1911
        %v1913 = vrot.slane %v1911, 4
        %v1914 = vrot.slane %v1842, 6
        %v1915 = vsel %vm1893, %v1913, %v1914
        %v1916 = vrot.slane %v1914, 4
        %v1917 = vrot.slane %v1843, 6
        %v1918 = vsel %vm1893, %v1916, %v1917
        %v1919 = vrot.slane %v1917, 4
        %v1920 = vrot.slane %v1844, 6
        %v1921 = vsel %vm1893, %v1919, %v1920
        %v1922 = vrot.slane %v1920, 4
        %v1923 = vrot.slane %v1845, 6
        %v1924 = vsel %vm1893, %v1922, %v1923
        %v1925 = vrot.slane %v1923, 4
        %v1926 = vrot.slane %v1846, 6
        %v1927 = vsel %vm1893, %v1925, %v1926
        %v1928 = vrot.slane %v1926, 4
        %v1929 = vrot.slane %v1847, 6
        %v1930 = vsel %vm1893, %v1928, %v1929
        %v1931 = vrot.slane %v1929, 4
        %v1932 = vrot.slane %v1848, 6
        %v1933 = vsel %vm1893, %v1931, %v1932
        %v1934 = vrot.slane %v1932, 4
        %v1935 = vrot.slane %v1849, 6
        %v1936 = vsel %vm1893, %v1934, %v1935
        %v1937 = vrot.slane %v1935, 4
        %v1938 = vrot.slane %v1850, 6
        %v1939 = vsel %vm1893, %v1937, %v1938
        %v1940 = vrot.slane %v1938, 4
        %v1941 = vrot.slane %v1851, 6
        %v1942 = vsel %vm1893, %v1940, %v1941
        %v1943 = vrot.slane %v1941, 4
        %v1944 = vrot.slane %v1852, 6
        %v1945 = vsel %vm1893, %v1943, %v1944
        %v1946 = vrot.slane %v1944, 4
        %v1947 = vrot.slane %v1853, 6
        %v1948 = vsel %vm1893, %v1946, %v1947
        %v1949 = vrot.slane %v1947, 4
        %v1950 = vrot.slane %v1854, 6
        %v1951 = vsel %vm1893, %v1949, %v1950
        %v1952 = vrot.slane %v1950, 4
        %v1953 = vrot.slane %v1855, 6
        %v1954 = vsel %vm1893, %v1952, %v1953
        %v1955 = vrot.slane %v1953, 4
        %v1956 = vrot.slane %v1856, 6
        %v1957 = vsel %vm1893, %v1955, %v1956
        %v1958 = vrot.slane %v1956, 4
        %v1959 = vrot.slane %v1857, 6
        %v1960 = vsel %vm1893, %v1958, %v1959
        %v1961 = vrot.slane %v1959, 4
        %v1962 = vrot.slane %v1858, 6
        %v1963 = vsel %vm1893, %v1961, %v1962
        %v1964 = vrot.slane %v1962, 4
        %v1965 = vrot.slane %v1859, 6
        %v1966 = vsel %vm1893, %v1964, %v1965
        %v1967 = vrot.slane %v1965, 4
        %v1968 = vrot.slane %v1860, 6
        %v1969 = vsel %vm1893, %v1967, %v1968
        %v1970 = vrot.slane %v1968, 4
        %v1971 = vrot.slane %v1861, 6
        %v1972 = vsel %vm1893, %v1970, %v1971
        %v1973 = vrot.slane %v1971, 4
        %v1974 = vrot.slane %v1862, 6
        %v1975 = vsel %vm1893, %v1973, %v1974
        %v1976 = vrot.slane %v1974, 4
        %1977 = vrot.lane.b32.xlu0 %v1897, 20
        %v1978 = vpop.permute.xlu0 %1977
        %1979 = vrot.lane.b32.xlu0 %v1900, 20
        %v1980 = vpop.permute.xlu0 %1979
        %1981 = vrot.lane.b32.xlu0 %v1903, 20
        %v1982 = vpop.permute.xlu0 %1981
        %1983 = vrot.lane.b32.xlu0 %v1906, 20
        %v1984 = vpop.permute.xlu0 %1983
        %1985 = vrot.lane.b32.xlu0 %v1909, 20
        %v1986 = vpop.permute.xlu0 %1985
        %1987 = vrot.lane.b32.xlu0 %v1912, 20
        %v1988 = vpop.permute.xlu0 %1987
        %1989 = vrot.lane.b32.xlu0 %v1915, 20
        %v1990 = vpop.permute.xlu0 %1989
        %1991 = vrot.lane.b32.xlu0 %v1918, 20
        %v1992 = vpop.permute.xlu0 %1991
        %1993 = vrot.lane.b32.xlu0 %v1921, 20
        %v1994 = vpop.permute.xlu0 %1993
        %1995 = vrot.lane.b32.xlu0 %v1924, 20
        %v1996 = vpop.permute.xlu0 %1995
        %1997 = vrot.lane.b32.xlu0 %v1927, 20
        %v1998 = vpop.permute.xlu0 %1997
        %1999 = vrot.lane.b32.xlu0 %v1930, 20
        %v2000 = vpop.permute.xlu0 %1999
        %2001 = vrot.lane.b32.xlu0 %v1933, 20
        %v2002 = vpop.permute.xlu0 %2001
        %2003 = vrot.lane.b32.xlu0 %v1936, 20
        %v2004 = vpop.permute.xlu0 %2003
        %2005 = vrot.lane.b32.xlu0 %v1939, 20
        %v2006 = vpop.permute.xlu0 %2005
        %2007 = vrot.lane.b32.xlu0 %v1942, 20
        %v2008 = vpop.permute.xlu0 %2007
        %2009 = vrot.lane.b32.xlu0 %v1945, 20
        %v2010 = vpop.permute.xlu0 %2009
        %2011 = vrot.lane.b32.xlu0 %v1948, 20
        %v2012 = vpop.permute.xlu0 %2011
        %2013 = vrot.lane.b32.xlu0 %v1951, 20
        %v2014 = vpop.permute.xlu0 %2013
        %2015 = vrot.lane.b32.xlu0 %v1954, 20
        %v2016 = vpop.permute.xlu0 %2015
        %2017 = vrot.lane.b32.xlu0 %v1957, 20
        %v2018 = vpop.permute.xlu0 %2017
        %2019 = vrot.lane.b32.xlu0 %v1960, 20
        %v2020 = vpop.permute.xlu0 %2019
        %2021 = vrot.lane.b32.xlu0 %v1963, 20
        %v2022 = vpop.permute.xlu0 %2021
        %2023 = vrot.lane.b32.xlu0 %v1966, 20
        %v2024 = vpop.permute.xlu0 %2023
        %2025 = vrot.lane.b32.xlu0 %v1969, 20
        %v2026 = vpop.permute.xlu0 %2025
        %2027 = vrot.lane.b32.xlu0 %v1972, 20
        %v2028 = vpop.permute.xlu0 %2027
        %2029 = vrot.lane.b32.xlu0 %v1975, 20
        %v2030 = vpop.permute.xlu0 %2029
        %2031 = vrot.lane.b32.xlu0 %v1976, 20
        %v2032 = vpop.permute.xlu0 %2031
        %vm2061 = vcmask 191648
        %2062 = vst.msk [vmem:[#allocation2] sm:$0xf] %vm2061, %v1978
        %2063 = vst.msk [vmem:[#allocation2 + $0x4] sm:$0xf] %vm2061, %v1980
        %2064 = vst.msk [vmem:[#allocation2 + $0x8] sm:$0xf] %vm2061, %v1982
        %2065 = vst.msk [vmem:[#allocation2 + $0xc] sm:$0xf] %vm2061, %v1984
        %2066 = vst.msk [vmem:[#allocation2 + $0x10] sm:$0xf] %vm2061, %v1986
        %2067 = vst.msk [vmem:[#allocation2 + $0x14] sm:$0xf] %vm2061, %v1988
        %2068 = vst.msk [vmem:[#allocation2 + $0x18] sm:$0xf] %vm2061, %v1990
        %2069 = vst.msk [vmem:[#allocation2 + $0x1c] sm:$0xf] %vm2061, %v1992
        %2070 = vst.msk [vmem:[#allocation2 + $0x20] sm:$0xf] %vm2061, %v1994
        %2071 = vst.msk [vmem:[#allocation2 + $0x24] sm:$0xf] %vm2061, %v1996
        %2072 = vst.msk [vmem:[#allocation2 + $0x28] sm:$0xf] %vm2061, %v1998
        %2073 = vst.msk [vmem:[#allocation2 + $0x2c] sm:$0xf] %vm2061, %v2000
        %2074 = vst.msk [vmem:[#allocation2 + $0x30] sm:$0xf] %vm2061, %v2002
        %2075 = vst.msk [vmem:[#allocation2 + $0x34] sm:$0xf] %vm2061, %v2004
        %2076 = vst.msk [vmem:[#allocation2 + $0x38] sm:$0xf] %vm2061, %v2006
        %2077 = vst.msk [vmem:[#allocation2 + $0x3c] sm:$0xf] %vm2061, %v2008
        %2078 = vst.msk [vmem:[#allocation2 + $0x40] sm:$0xf] %vm2061, %v2010
        %2079 = vst.msk [vmem:[#allocation2 + $0x44] sm:$0xf] %vm2061, %v2012
        %2080 = vst.msk [vmem:[#allocation2 + $0x48] sm:$0xf] %vm2061, %v2014
        %2081 = vst.msk [vmem:[#allocation2 + $0x4c] sm:$0xf] %vm2061, %v2016
        %2082 = vst.msk [vmem:[#allocation2 + $0x50] sm:$0xf] %vm2061, %v2018
        %2083 = vst.msk [vmem:[#allocation2 + $0x54] sm:$0xf] %vm2061, %v2020
        %2084 = vst.msk [vmem:[#allocation2 + $0x58] sm:$0xf] %vm2061, %v2022
        %2085 = vst.msk [vmem:[#allocation2 + $0x5c] sm:$0xf] %vm2061, %v2024
        %2086 = vst.msk [vmem:[#allocation2 + $0x60] sm:$0xf] %vm2061, %v2026
        %2087 = vst.msk [vmem:[#allocation2 + $0x64] sm:$0xf] %vm2061, %v2028
        %2088 = vst.msk [vmem:[#allocation2 + $0x68] sm:$0xf] %vm2061, %v2030
        %vm2089 = vcmask 189600
        %2090 = vst.msk [vmem:[#allocation2 + $0x6c] sm:$0x3] %vm2089, %v2032
        %v2091 = vld [vmem:[%s261] sm:$0xf]
        %v2092 = vld [vmem:[%s261 + $0x4] sm:$0xf]
        %v2093 = vld [vmem:[%s261 + $0x8] sm:$0x3]
        %v2097 = vrot.slane %v2091, 6
        %v2098 = vrot.slane %v2097, 4
        %v2099 = vrot.slane %v2092, 6
        %v2100 = vsel %vm1893, %v2098, %v2099
        %v2101 = vrot.slane %v2099, 4
        %v2102 = vrot.slane %v2093, 6
        %v2103 = vsel %vm1893, %v2101, %v2102
        %2104 = vrot.lane.b32.xlu0 %v2097, 20
        %v2105 = vpop.permute.xlu0 %2104
        %2106 = vrot.lane.b32.xlu0 %v2100, 20
        %v2107 = vpop.permute.xlu0 %2106
        %2108 = vrot.lane.b32.xlu0 %v2103, 20
        %v2109 = vpop.permute.xlu0 %2108
        %vm2113 = vcmask 191650
        %2114 = vst.msk [vmem:[#allocation2 + $0x6c] sm:$0xc] %vm2113, %v2105
        %2115 = vst.msk [vmem:[#allocation2 + $0x70] sm:$0xf] %vm2061, %v2107
        %2116 = vst.msk [vmem:[#allocation2 + $0x74] sm:$0xf] %vm2061, %v2109
        %v2117 = vld [vmem:[%s249 + $0x10] sm:$0xc]
        %v2118 = vld [vmem:[%s249 + $0x14] sm:$0xf]
        %v2119 = vld [vmem:[%s249 + $0x18] sm:$0xf]
        %v2120 = vld [vmem:[%s249 + $0x1c] sm:$0xf]
        %v2121 = vld [vmem:[%s249 + $0x20] sm:$0xf]
        %v2122 = vld [vmem:[%s249 + $0x24] sm:$0xf]
        %v2123 = vld [vmem:[%s249 + $0x28] sm:$0xf]
        %v2124 = vld [vmem:[%s249 + $0x2c] sm:$0xf]
        %v2125 = vld [vmem:[%s249 + $0x30] sm:$0xf]
        %v2126 = vld [vmem:[%s249 + $0x34] sm:$0xf]
        %v2127 = vld [vmem:[%s249 + $0x38] sm:$0xf]
        %v2128 = vld [vmem:[%s249 + $0x3c] sm:$0xf]
        %v2129 = vld [vmem:[%s249 + $0x40] sm:$0xf]
        %v2130 = vld [vmem:[%s249 + $0x44] sm:$0xf]
        %v2131 = vld [vmem:[%s249 + $0x48] sm:$0xf]
        %v2132 = vld [vmem:[%s249 + $0x4c] sm:$0xf]
        %v2133 = vld [vmem:[%s249 + $0x50] sm:$0xf]
        %v2134 = vld [vmem:[%s249 + $0x54] sm:$0xf]
        %v2135 = vld [vmem:[%s249 + $0x58] sm:$0xf]
        %v2136 = vld [vmem:[%s249 + $0x5c] sm:$0xf]
        %v2137 = vld [vmem:[%s249 + $0x60] sm:$0xf]
        %v2138 = vld [vmem:[%s249 + $0x64] sm:$0xf]
        %v2139 = vld [vmem:[%s249 + $0x68] sm:$0xf]
        %v2140 = vld [vmem:[%s249 + $0x6c] sm:$0xf]
        %v2141 = vld [vmem:[%s249 + $0x70] sm:$0xf]
        %v2142 = vld [vmem:[%s249 + $0x74] sm:$0xf]
        %v2169 = vrot.slane %v2117, 6
        %v2170 = vrot.slane %v2169, 4
        %v2171 = vrot.slane %v2118, 6
        %v2172 = vsel %vm1893, %v2170, %v2171
        %v2173 = vrot.slane %v2171, 4
        %v2174 = vrot.slane %v2119, 6
        %v2175 = vsel %vm1893, %v2173, %v2174
        %v2176 = vrot.slane %v2174, 4
        %v2177 = vrot.slane %v2120, 6
        %v2178 = vsel %vm1893, %v2176, %v2177
        %v2179 = vrot.slane %v2177, 4
        %v2180 = vrot.slane %v2121, 6
        %v2181 = vsel %vm1893, %v2179, %v2180
        %v2182 = vrot.slane %v2180, 4
        %v2183 = vrot.slane %v2122, 6
        %v2184 = vsel %vm1893, %v2182, %v2183
        %v2185 = vrot.slane %v2183, 4
        %v2186 = vrot.slane %v2123, 6
        %v2187 = vsel %vm1893, %v2185, %v2186
        %v2188 = vrot.slane %v2186, 4
        %v2189 = vrot.slane %v2124, 6
        %v2190 = vsel %vm1893, %v2188, %v2189
        %v2191 = vrot.slane %v2189, 4
        %v2192 = vrot.slane %v2125, 6
        %v2193 = vsel %vm1893, %v2191, %v2192
        %v2194 = vrot.slane %v2192, 4
        %v2195 = vrot.slane %v2126, 6
        %v2196 = vsel %vm1893, %v2194, %v2195
        %v2197 = vrot.slane %v2195, 4
        %v2198 = vrot.slane %v2127, 6
        %v2199 = vsel %vm1893, %v2197, %v2198
        %v2200 = vrot.slane %v2198, 4
        %v2201 = vrot.slane %v2128, 6
        %v2202 = vsel %vm1893, %v2200, %v2201
        %v2203 = vrot.slane %v2201, 4
        %v2204 = vrot.slane %v2129, 6
        %v2205 = vsel %vm1893, %v2203, %v2204
        %v2206 = vrot.slane %v2204, 4
        %v2207 = vrot.slane %v2130, 6
        %v2208 = vsel %vm1893, %v2206, %v2207
        %v2209 = vrot.slane %v2207, 4
        %v2210 = vrot.slane %v2131, 6
        %v2211 = vsel %vm1893, %v2209, %v2210
        %v2212 = vrot.slane %v2210, 4
        %v2213 = vrot.slane %v2132, 6
        %v2214 = vsel %vm1893, %v2212, %v2213
        %v2215 = vrot.slane %v2213, 4
        %v2216 = vrot.slane %v2133, 6
        %v2217 = vsel %vm1893, %v2215, %v2216
        %v2218 = vrot.slane %v2216, 4
        %v2219 = vrot.slane %v2134, 6
        %v2220 = vsel %vm1893, %v2218, %v2219
        %v2221 = vrot.slane %v2219, 4
        %v2222 = vrot.slane %v2135, 6
        %v2223 = vsel %vm1893, %v2221, %v2222
        %v2224 = vrot.slane %v2222, 4
        %v2225 = vrot.slane %v2136, 6
        %v2226 = vsel %vm1893, %v2224, %v2225
        %v2227 = vrot.slane %v2225, 4
        %v2228 = vrot.slane %v2137, 6
        %v2229 = vsel %vm1893, %v2227, %v2228
        %v2230 = vrot.slane %v2228, 4
        %v2231 = vrot.slane %v2138, 6
        %v2232 = vsel %vm1893, %v2230, %v2231
        %v2233 = vrot.slane %v2231, 4
        %v2234 = vrot.slane %v2139, 6
        %v2235 = vsel %vm1893, %v2233, %v2234
        %v2236 = vrot.slane %v2234, 4
        %v2237 = vrot.slane %v2140, 6
        %v2238 = vsel %vm1893, %v2236, %v2237
        %v2239 = vrot.slane %v2237, 4
        %v2240 = vrot.slane %v2141, 6
        %v2241 = vsel %vm1893, %v2239, %v2240
        %v2242 = vrot.slane %v2240, 4
        %v2243 = vrot.slane %v2142, 6
        %v2244 = vsel %vm1893, %v2242, %v2243
        %v2245 = vrot.slane %v2243, 4
        %2246 = vrot.lane.b32.xlu0 %v2172, 24
        %v2247 = vpop.permute.xlu0 %2246
        %2248 = vrot.lane.b32.xlu0 %v2175, 24
        %v2249 = vpop.permute.xlu0 %2248
        %2250 = vrot.lane.b32.xlu0 %v2178, 24
        %v2251 = vpop.permute.xlu0 %2250
        %2252 = vrot.lane.b32.xlu0 %v2181, 24
        %v2253 = vpop.permute.xlu0 %2252
        %2254 = vrot.lane.b32.xlu0 %v2184, 24
        %v2255 = vpop.permute.xlu0 %2254
        %2256 = vrot.lane.b32.xlu0 %v2187, 24
        %v2257 = vpop.permute.xlu0 %2256
        %2258 = vrot.lane.b32.xlu0 %v2190, 24
        %v2259 = vpop.permute.xlu0 %2258
        %2260 = vrot.lane.b32.xlu0 %v2193, 24
        %v2261 = vpop.permute.xlu0 %2260
        %2262 = vrot.lane.b32.xlu0 %v2196, 24
        %v2263 = vpop.permute.xlu0 %2262
        %2264 = vrot.lane.b32.xlu0 %v2199, 24
        %v2265 = vpop.permute.xlu0 %2264
        %2266 = vrot.lane.b32.xlu0 %v2202, 24
        %v2267 = vpop.permute.xlu0 %2266
        %2268 = vrot.lane.b32.xlu0 %v2205, 24
        %v2269 = vpop.permute.xlu0 %2268
        %2270 = vrot.lane.b32.xlu0 %v2208, 24
        %v2271 = vpop.permute.xlu0 %2270
        %2272 = vrot.lane.b32.xlu0 %v2211, 24
        %v2273 = vpop.permute.xlu0 %2272
        %2274 = vrot.lane.b32.xlu0 %v2214, 24
        %v2275 = vpop.permute.xlu0 %2274
        %2276 = vrot.lane.b32.xlu0 %v2217, 24
        %v2277 = vpop.permute.xlu0 %2276
        %2278 = vrot.lane.b32.xlu0 %v2220, 24
        %v2279 = vpop.permute.xlu0 %2278
        %2280 = vrot.lane.b32.xlu0 %v2223, 24
        %v2281 = vpop.permute.xlu0 %2280
        %2282 = vrot.lane.b32.xlu0 %v2226, 24
        %v2283 = vpop.permute.xlu0 %2282
        %2284 = vrot.lane.b32.xlu0 %v2229, 24
        %v2285 = vpop.permute.xlu0 %2284
        %2286 = vrot.lane.b32.xlu0 %v2232, 24
        %v2287 = vpop.permute.xlu0 %2286
        %2288 = vrot.lane.b32.xlu0 %v2235, 24
        %v2289 = vpop.permute.xlu0 %2288
        %2290 = vrot.lane.b32.xlu0 %v2238, 24
        %v2291 = vpop.permute.xlu0 %2290
        %2292 = vrot.lane.b32.xlu0 %v2241, 24
        %v2293 = vpop.permute.xlu0 %2292
        %2294 = vrot.lane.b32.xlu0 %v2244, 24
        %v2295 = vpop.permute.xlu0 %2294
        %2296 = vrot.lane.b32.xlu0 %v2245, 24
        %v2297 = vpop.permute.xlu0 %2296
        %vm2324 = vcmask 224448
        %2325 = vst.msk [vmem:[#allocation2] sm:$0xf] %vm2324, %v2247
        %2326 = vst.msk [vmem:[#allocation2 + $0x4] sm:$0xf] %vm2324, %v2249
        %2327 = vst.msk [vmem:[#allocation2 + $0x8] sm:$0xf] %vm2324, %v2251
        %2328 = vst.msk [vmem:[#allocation2 + $0xc] sm:$0xf] %vm2324, %v2253
        %2329 = vst.msk [vmem:[#allocation2 + $0x10] sm:$0xf] %vm2324, %v2255
        %2330 = vst.msk [vmem:[#allocation2 + $0x14] sm:$0xf] %vm2324, %v2257
        %2331 = vst.msk [vmem:[#allocation2 + $0x18] sm:$0xf] %vm2324, %v2259
        %2332 = vst.msk [vmem:[#allocation2 + $0x1c] sm:$0xf] %vm2324, %v2261
        %2333 = vst.msk [vmem:[#allocation2 + $0x20] sm:$0xf] %vm2324, %v2263
        %2334 = vst.msk [vmem:[#allocation2 + $0x24] sm:$0xf] %vm2324, %v2265
        %2335 = vst.msk [vmem:[#allocation2 + $0x28] sm:$0xf] %vm2324, %v2267
        %2336 = vst.msk [vmem:[#allocation2 + $0x2c] sm:$0xf] %vm2324, %v2269
        %2337 = vst.msk [vmem:[#allocation2 + $0x30] sm:$0xf] %vm2324, %v2271
        %2338 = vst.msk [vmem:[#allocation2 + $0x34] sm:$0xf] %vm2324, %v2273
        %2339 = vst.msk [vmem:[#allocation2 + $0x38] sm:$0xf] %vm2324, %v2275
        %2340 = vst.msk [vmem:[#allocation2 + $0x3c] sm:$0xf] %vm2324, %v2277
        %2341 = vst.msk [vmem:[#allocation2 + $0x40] sm:$0xf] %vm2324, %v2279
        %2342 = vst.msk [vmem:[#allocation2 + $0x44] sm:$0xf] %vm2324, %v2281
        %2343 = vst.msk [vmem:[#allocation2 + $0x48] sm:$0xf] %vm2324, %v2283
        %2344 = vst.msk [vmem:[#allocation2 + $0x4c] sm:$0xf] %vm2324, %v2285
        %2345 = vst.msk [vmem:[#allocation2 + $0x50] sm:$0xf] %vm2324, %v2287
        %2346 = vst.msk [vmem:[#allocation2 + $0x54] sm:$0xf] %vm2324, %v2289
        %2347 = vst.msk [vmem:[#allocation2 + $0x58] sm:$0xf] %vm2324, %v2291
        %2348 = vst.msk [vmem:[#allocation2 + $0x5c] sm:$0xf] %vm2324, %v2293
        %2349 = vst.msk [vmem:[#allocation2 + $0x60] sm:$0xf] %vm2324, %v2295
        %vm2350 = vcmask 222400
        %2351 = vst.msk [vmem:[#allocation2 + $0x64] sm:$0x3] %vm2350, %v2297
        %v2352 = vld [vmem:[%s261] sm:$0xf]
        %v2353 = vld [vmem:[%s261 + $0x4] sm:$0xf]
        %v2354 = vld [vmem:[%s261 + $0x8] sm:$0xf]
        %v2355 = vld [vmem:[%s261 + $0xc] sm:$0xf]
        %v2356 = vld [vmem:[%s261 + $0x10] sm:$0x3]
        %v2362 = vrot.slane %v2352, 6
        %v2363 = vrot.slane %v2362, 4
        %v2364 = vrot.slane %v2353, 6
        %v2365 = vsel %vm1893, %v2363, %v2364
        %v2366 = vrot.slane %v2364, 4
        %v2367 = vrot.slane %v2354, 6
        %v2368 = vsel %vm1893, %v2366, %v2367
        %v2369 = vrot.slane %v2367, 4
        %v2370 = vrot.slane %v2355, 6
        %v2371 = vsel %vm1893, %v2369, %v2370
        %v2372 = vrot.slane %v2370, 4
        %v2373 = vrot.slane %v2356, 6
        %v2374 = vsel %vm1893, %v2372, %v2373
        %2375 = vrot.lane.b32.xlu0 %v2362, 24
        %v2376 = vpop.permute.xlu0 %2375
        %2377 = vrot.lane.b32.xlu0 %v2365, 24
        %v2378 = vpop.permute.xlu0 %2377
        %2379 = vrot.lane.b32.xlu0 %v2368, 24
        %v2380 = vpop.permute.xlu0 %2379
        %2381 = vrot.lane.b32.xlu0 %v2371, 24
        %v2382 = vpop.permute.xlu0 %2381
        %2383 = vrot.lane.b32.xlu0 %v2374, 24
        %v2384 = vpop.permute.xlu0 %2383
        %vm2390 = vcmask 224450
        %2391 = vst.msk [vmem:[#allocation2 + $0x64] sm:$0xc] %vm2390, %v2376
        %2392 = vst.msk [vmem:[#allocation2 + $0x68] sm:$0xf] %vm2324, %v2378
        %2393 = vst.msk [vmem:[#allocation2 + $0x6c] sm:$0xf] %vm2324, %v2380
        %2394 = vst.msk [vmem:[#allocation2 + $0x70] sm:$0xf] %vm2324, %v2382
        %2395 = vst.msk [vmem:[#allocation2 + $0x74] sm:$0xf] %vm2324, %v2384
        %v2396 = vld [vmem:[%s249 + $0x10] sm:$0xc]
        %v2397 = vld [vmem:[%s249 + $0x14] sm:$0xf]
        %v2398 = vld [vmem:[%s249 + $0x18] sm:$0xf]
        %v2399 = vld [vmem:[%s249 + $0x1c] sm:$0xf]
        %v2400 = vld [vmem:[%s249 + $0x20] sm:$0xf]
        %v2401 = vld [vmem:[%s249 + $0x24] sm:$0xf]
        %v2402 = vld [vmem:[%s249 + $0x28] sm:$0xf]
        %v2403 = vld [vmem:[%s249 + $0x2c] sm:$0xf]
        %v2404 = vld [vmem:[%s249 + $0x30] sm:$0xf]
        %v2405 = vld [vmem:[%s249 + $0x34] sm:$0xf]
        %v2406 = vld [vmem:[%s249 + $0x38] sm:$0xf]
        %v2407 = vld [vmem:[%s249 + $0x3c] sm:$0xf]
        %v2408 = vld [vmem:[%s249 + $0x40] sm:$0xf]
        %v2409 = vld [vmem:[%s249 + $0x44] sm:$0xf]
        %v2410 = vld [vmem:[%s249 + $0x48] sm:$0xf]
        %v2411 = vld [vmem:[%s249 + $0x4c] sm:$0xf]
        %v2412 = vld [vmem:[%s249 + $0x50] sm:$0xf]
        %v2413 = vld [vmem:[%s249 + $0x54] sm:$0xf]
        %v2414 = vld [vmem:[%s249 + $0x58] sm:$0xf]
        %v2415 = vld [vmem:[%s249 + $0x5c] sm:$0xf]
        %v2416 = vld [vmem:[%s249 + $0x60] sm:$0xf]
        %v2417 = vld [vmem:[%s249 + $0x64] sm:$0xf]
        %v2418 = vld [vmem:[%s249 + $0x68] sm:$0xf]
        %v2419 = vld [vmem:[%s249 + $0x6c] sm:$0xf]
        %v2420 = vld [vmem:[%s249 + $0x70] sm:$0xf]
        %v2421 = vld [vmem:[%s249 + $0x74] sm:$0xf]
        %vm2422 = vsmask.f32 1280
        %vm2423 = vsmask.f32 5392
        %vm2424 = vmor %vm2422, %vm2423
        %v2426 = vshrl.u32 %v2396, 16
        %v2428 = vrot.slane %v2426, 6
        %v2429 = vshll.u32 %v2396, 16
        %v2431 = vrot.slane %v2429, 7
        %v2432 = vor.u32 %v2428, %v2431
        %v2433 = vrot.slane %v2432, 4
        %v2435 = vshrl.u32 %v2397, 16
        %v2437 = vrot.slane %v2435, 6
        %v2438 = vshll.u32 %v2397, 16
        %v2440 = vrot.slane %v2438, 7
        %v2441 = vor.u32 %v2437, %v2440
        %v2442 = vsel %vm2424, %v2433, %v2441
        %v2443 = vrot.slane %v2441, 4
        %v2445 = vshrl.u32 %v2398, 16
        %v2447 = vrot.slane %v2445, 6
        %v2448 = vshll.u32 %v2398, 16
        %v2450 = vrot.slane %v2448, 7
        %v2451 = vor.u32 %v2447, %v2450
        %v2452 = vsel %vm2424, %v2443, %v2451
        %v2453 = vrot.slane %v2451, 4
        %v2455 = vshrl.u32 %v2399, 16
        %v2457 = vrot.slane %v2455, 6
        %v2458 = vshll.u32 %v2399, 16
        %v2460 = vrot.slane %v2458, 7
        %v2461 = vor.u32 %v2457, %v2460
        %v2462 = vsel %vm2424, %v2453, %v2461
        %v2463 = vrot.slane %v2461, 4
        %v2465 = vshrl.u32 %v2400, 16
        %v2467 = vrot.slane %v2465, 6
        %v2468 = vshll.u32 %v2400, 16
        %v2470 = vrot.slane %v2468, 7
        %v2471 = vor.u32 %v2467, %v2470
        %v2472 = vsel %vm2424, %v2463, %v2471
        %v2473 = vrot.slane %v2471, 4
        %v2475 = vshrl.u32 %v2401, 16
        %v2477 = vrot.slane %v2475, 6
        %v2478 = vshll.u32 %v2401, 16
        %v2480 = vrot.slane %v2478, 7
        %v2481 = vor.u32 %v2477, %v2480
        %v2482 = vsel %vm2424, %v2473, %v2481
        %v2483 = vrot.slane %v2481, 4
        %v2485 = vshrl.u32 %v2402, 16
        %v2487 = vrot.slane %v2485, 6
        %v2488 = vshll.u32 %v2402, 16
        %v2490 = vrot.slane %v2488, 7
        %v2491 = vor.u32 %v2487, %v2490
        %v2492 = vsel %vm2424, %v2483, %v2491
        %v2493 = vrot.slane %v2491, 4
        %v2495 = vshrl.u32 %v2403, 16
        %v2497 = vrot.slane %v2495, 6
        %v2498 = vshll.u32 %v2403, 16
        %v2500 = vrot.slane %v2498, 7
        %v2501 = vor.u32 %v2497, %v2500
        %v2502 = vsel %vm2424, %v2493, %v2501
        %v2503 = vrot.slane %v2501, 4
        %v2505 = vshrl.u32 %v2404, 16
        %v2507 = vrot.slane %v2505, 6
        %v2508 = vshll.u32 %v2404, 16
        %v2510 = vrot.slane %v2508, 7
        %v2511 = vor.u32 %v2507, %v2510
        %v2512 = vsel %vm2424, %v2503, %v2511
        %v2513 = vrot.slane %v2511, 4
        %v2515 = vshrl.u32 %v2405, 16
        %v2517 = vrot.slane %v2515, 6
        %v2518 = vshll.u32 %v2405, 16
        %v2520 = vrot.slane %v2518, 7
        %v2521 = vor.u32 %v2517, %v2520
        %v2522 = vsel %vm2424, %v2513, %v2521
        %v2523 = vrot.slane %v2521, 4
        %v2525 = vshrl.u32 %v2406, 16
        %v2527 = vrot.slane %v2525, 6
        %v2528 = vshll.u32 %v2406, 16
        %v2530 = vrot.slane %v2528, 7
        %v2531 = vor.u32 %v2527, %v2530
        %v2532 = vsel %vm2424, %v2523, %v2531
        %v2533 = vrot.slane %v2531, 4
        %v2535 = vshrl.u32 %v2407, 16
        %v2537 = vrot.slane %v2535, 6
        %v2538 = vshll.u32 %v2407, 16
        %v2540 = vrot.slane %v2538, 7
        %v2541 = vor.u32 %v2537, %v2540
        %v2542 = vsel %vm2424, %v2533, %v2541
        %v2543 = vrot.slane %v2541, 4
        %v2545 = vshrl.u32 %v2408, 16
        %v2547 = vrot.slane %v2545, 6
        %v2548 = vshll.u32 %v2408, 16
        %v2550 = vrot.slane %v2548, 7
        %v2551 = vor.u32 %v2547, %v2550
        %v2552 = vsel %vm2424, %v2543, %v2551
        %v2553 = vrot.slane %v2551, 4
        %v2555 = vshrl.u32 %v2409, 16
        %v2557 = vrot.slane %v2555, 6
        %v2558 = vshll.u32 %v2409, 16
        %v2560 = vrot.slane %v2558, 7
        %v2561 = vor.u32 %v2557, %v2560
        %v2562 = vsel %vm2424, %v2553, %v2561
        %v2563 = vrot.slane %v2561, 4
        %v2565 = vshrl.u32 %v2410, 16
        %v2567 = vrot.slane %v2565, 6
        %v2568 = vshll.u32 %v2410, 16
        %v2570 = vrot.slane %v2568, 7
        %v2571 = vor.u32 %v2567, %v2570
        %v2572 = vsel %vm2424, %v2563, %v2571
        %v2573 = vrot.slane %v2571, 4
        %v2575 = vshrl.u32 %v2411, 16
        %v2577 = vrot.slane %v2575, 6
        %v2578 = vshll.u32 %v2411, 16
        %v2580 = vrot.slane %v2578, 7
        %v2581 = vor.u32 %v2577, %v2580
        %v2582 = vsel %vm2424, %v2573, %v2581
        %v2583 = vrot.slane %v2581, 4
        %v2585 = vshrl.u32 %v2412, 16
        %v2587 = vrot.slane %v2585, 6
        %v2588 = vshll.u32 %v2412, 16
        %v2590 = vrot.slane %v2588, 7
        %v2591 = vor.u32 %v2587, %v2590
        %v2592 = vsel %vm2424, %v2583, %v2591
        %v2593 = vrot.slane %v2591, 4
        %v2595 = vshrl.u32 %v2413, 16
        %v2597 = vrot.slane %v2595, 6
        %v2598 = vshll.u32 %v2413, 16
        %v2600 = vrot.slane %v2598, 7
        %v2601 = vor.u32 %v2597, %v2600
        %v2602 = vsel %vm2424, %v2593, %v2601
        %v2603 = vrot.slane %v2601, 4
        %v2605 = vshrl.u32 %v2414, 16
        %v2607 = vrot.slane %v2605, 6
        %v2608 = vshll.u32 %v2414, 16
        %v2610 = vrot.slane %v2608, 7
        %v2611 = vor.u32 %v2607, %v2610
        %v2612 = vsel %vm2424, %v2603, %v2611
        %v2613 = vrot.slane %v2611, 4
        %v2615 = vshrl.u32 %v2415, 16
        %v2617 = vrot.slane %v2615, 6
        %v2618 = vshll.u32 %v2415, 16
        %v2620 = vrot.slane %v2618, 7
        %v2621 = vor.u32 %v2617, %v2620
        %v2622 = vsel %vm2424, %v2613, %v2621
        %v2623 = vrot.slane %v2621, 4
        %v2625 = vshrl.u32 %v2416, 16
        %v2627 = vrot.slane %v2625, 6
        %v2628 = vshll.u32 %v2416, 16
        %v2630 = vrot.slane %v2628, 7
        %v2631 = vor.u32 %v2627, %v2630
        %v2632 = vsel %vm2424, %v2623, %v2631
        %v2633 = vrot.slane %v2631, 4
        %v2635 = vshrl.u32 %v2417, 16
        %v2637 = vrot.slane %v2635, 6
        %v2638 = vshll.u32 %v2417, 16
        %v2640 = vrot.slane %v2638, 7
        %v2641 = vor.u32 %v2637, %v2640
        %v2642 = vsel %vm2424, %v2633, %v2641
        %v2643 = vrot.slane %v2641, 4
        %v2645 = vshrl.u32 %v2418, 16
        %v2647 = vrot.slane %v2645, 6
        %v2648 = vshll.u32 %v2418, 16
        %v2650 = vrot.slane %v2648, 7
        %v2651 = vor.u32 %v2647, %v2650
        %v2652 = vsel %vm2424, %v2643, %v2651
        %v2653 = vrot.slane %v2651, 4
        %v2655 = vshrl.u32 %v2419, 16
        %v2657 = vrot.slane %v2655, 6
        %v2658 = vshll.u32 %v2419, 16
        %v2660 = vrot.slane %v2658, 7
        %v2661 = vor.u32 %v2657, %v2660
        %v2662 = vsel %vm2424, %v2653, %v2661
        %v2663 = vrot.slane %v2661, 4
        %v2665 = vshrl.u32 %v2420, 16
        %v2667 = vrot.slane %v2665, 6
        %v2668 = vshll.u32 %v2420, 16
        %v2670 = vrot.slane %v2668, 7
        %v2671 = vor.u32 %v2667, %v2670
        %v2672 = vsel %vm2424, %v2663, %v2671
        %v2673 = vrot.slane %v2671, 4
        %v2675 = vshrl.u32 %v2421, 16
        %v2677 = vrot.slane %v2675, 6
        %v2678 = vshll.u32 %v2421, 16
        %v2680 = vrot.slane %v2678, 7
        %v2681 = vor.u32 %v2677, %v2680
        %v2682 = vsel %vm2424, %v2673, %v2681
        %v2683 = vrot.slane %v2681, 4
        %2684 = vrot.lane.b32.xlu0 %v2442, 28
        %v2685 = vpop.permute.xlu0 %2684
        %2686 = vrot.lane.b32.xlu0 %v2452, 28
        %v2687 = vpop.permute.xlu0 %2686
        %2688 = vrot.lane.b32.xlu0 %v2462, 28
        %v2689 = vpop.permute.xlu0 %2688
        %2690 = vrot.lane.b32.xlu0 %v2472, 28
        %v2691 = vpop.permute.xlu0 %2690
        %2692 = vrot.lane.b32.xlu0 %v2482, 28
        %v2693 = vpop.permute.xlu0 %2692
        %2694 = vrot.lane.b32.xlu0 %v2492, 28
        %v2695 = vpop.permute.xlu0 %2694
        %2696 = vrot.lane.b32.xlu0 %v2502, 28
        %v2697 = vpop.permute.xlu0 %2696
        %2698 = vrot.lane.b32.xlu0 %v2512, 28
        %v2699 = vpop.permute.xlu0 %2698
        %2700 = vrot.lane.b32.xlu0 %v2522, 28
        %v2701 = vpop.permute.xlu0 %2700
        %2702 = vrot.lane.b32.xlu0 %v2532, 28
        %v2703 = vpop.permute.xlu0 %2702
        %2704 = vrot.lane.b32.xlu0 %v2542, 28
        %v2705 = vpop.permute.xlu0 %2704
        %2706 = vrot.lane.b32.xlu0 %v2552, 28
        %v2707 = vpop.permute.xlu0 %2706
        %2708 = vrot.lane.b32.xlu0 %v2562, 28
        %v2709 = vpop.permute.xlu0 %2708
        %2710 = vrot.lane.b32.xlu0 %v2572, 28
        %v2711 = vpop.permute.xlu0 %2710
        %2712 = vrot.lane.b32.xlu0 %v2582, 28
        %v2713 = vpop.permute.xlu0 %2712
        %2714 = vrot.lane.b32.xlu0 %v2592, 28
        %v2715 = vpop.permute.xlu0 %2714
        %2716 = vrot.lane.b32.xlu0 %v2602, 28
        %v2717 = vpop.permute.xlu0 %2716
        %2718 = vrot.lane.b32.xlu0 %v2612, 28
        %v2719 = vpop.permute.xlu0 %2718
        %2720 = vrot.lane.b32.xlu0 %v2622, 28
        %v2721 = vpop.permute.xlu0 %2720
        %2722 = vrot.lane.b32.xlu0 %v2632, 28
        %v2723 = vpop.permute.xlu0 %2722
        %2724 = vrot.lane.b32.xlu0 %v2642, 28
        %v2725 = vpop.permute.xlu0 %2724
        %2726 = vrot.lane.b32.xlu0 %v2652, 28
        %v2727 = vpop.permute.xlu0 %2726
        %2728 = vrot.lane.b32.xlu0 %v2662, 28
        %v2729 = vpop.permute.xlu0 %2728
        %2730 = vrot.lane.b32.xlu0 %v2672, 28
        %v2731 = vpop.permute.xlu0 %2730
        %2732 = vrot.lane.b32.xlu0 %v2682, 28
        %v2733 = vpop.permute.xlu0 %2732
        %2734 = vrot.lane.b32.xlu0 %v2683, 28
        %v2735 = vpop.permute.xlu0 %2734
        %vm2762 = vcmask 257248
        %2763 = vst.msk [vmem:[#allocation2] sm:$0xf] %vm2762, %v2685
        %2764 = vst.msk [vmem:[#allocation2 + $0x4] sm:$0xf] %vm2762, %v2687
        %2765 = vst.msk [vmem:[#allocation2 + $0x8] sm:$0xf] %vm2762, %v2689
        %2766 = vst.msk [vmem:[#allocation2 + $0xc] sm:$0xf] %vm2762, %v2691
        %2767 = vst.msk [vmem:[#allocation2 + $0x10] sm:$0xf] %vm2762, %v2693
        %2768 = vst.msk [vmem:[#allocation2 + $0x14] sm:$0xf] %vm2762, %v2695
        %2769 = vst.msk [vmem:[#allocation2 + $0x18] sm:$0xf] %vm2762, %v2697
        %2770 = vst.msk [vmem:[#allocation2 + $0x1c] sm:$0xf] %vm2762, %v2699
        %2771 = vst.msk [vmem:[#allocation2 + $0x20] sm:$0xf] %vm2762, %v2701
        %2772 = vst.msk [vmem:[#allocation2 + $0x24] sm:$0xf] %vm2762, %v2703
        %2773 = vst.msk [vmem:[#allocation2 + $0x28] sm:$0xf] %vm2762, %v2705
        %2774 = vst.msk [vmem:[#allocation2 + $0x2c] sm:$0xf] %vm2762, %v2707
        %2775 = vst.msk [vmem:[#allocation2 + $0x30] sm:$0xf] %vm2762, %v2709
        %2776 = vst.msk [vmem:[#allocation2 + $0x34] sm:$0xf] %vm2762, %v2711
        %2777 = vst.msk [vmem:[#allocation2 + $0x38] sm:$0xf] %vm2762, %v2713
        %2778 = vst.msk [vmem:[#allocation2 + $0x3c] sm:$0xf] %vm2762, %v2715
        %2779 = vst.msk [vmem:[#allocation2 + $0x40] sm:$0xf] %vm2762, %v2717
        %2780 = vst.msk [vmem:[#allocation2 + $0x44] sm:$0xf] %vm2762, %v2719
        %2781 = vst.msk [vmem:[#allocation2 + $0x48] sm:$0xf] %vm2762, %v2721
        %2782 = vst.msk [vmem:[#allocation2 + $0x4c] sm:$0xf] %vm2762, %v2723
        %2783 = vst.msk [vmem:[#allocation2 + $0x50] sm:$0xf] %vm2762, %v2725
        %2784 = vst.msk [vmem:[#allocation2 + $0x54] sm:$0xf] %vm2762, %v2727
        %2785 = vst.msk [vmem:[#allocation2 + $0x58] sm:$0xf] %vm2762, %v2729
        %2786 = vst.msk [vmem:[#allocation2 + $0x5c] sm:$0xf] %vm2762, %v2731
        %2787 = vst.msk [vmem:[#allocation2 + $0x60] sm:$0xf] %vm2762, %v2733
        %vm2788 = vcmask 255200
        %vm2789 = vmand %vm2788, %vm2422
        %v2790 = vld [vmem:[#allocation2 + $0x64] sm:$0x3]
        %v2791 = vsel %vm2789, %v2735, %v2790
        %2792 = vst [vmem:[#allocation2 + $0x64] sm:$0x3] %v2791
        %v2793 = vld [vmem:[%s261] sm:$0xf]
        %v2794 = vld [vmem:[%s261 + $0x4] sm:$0xf]
        %v2795 = vld [vmem:[%s261 + $0x8] sm:$0xf]
        %v2796 = vld [vmem:[%s261 + $0xc] sm:$0xf]
        %v2797 = vld [vmem:[%s261 + $0x10] sm:$0x7]
        %v2799 = vshrl.u32 %v2793, 16
        %v2801 = vrot.slane %v2799, 6
        %v2802 = vshll.u32 %v2793, 16
        %v2804 = vrot.slane %v2802, 7
        %v2805 = vor.u32 %v2801, %v2804
        %v2806 = vrot.slane %v2805, 4
        %v2808 = vshrl.u32 %v2794, 16
        %v2810 = vrot.slane %v2808, 6
        %v2811 = vshll.u32 %v2794, 16
        %v2813 = vrot.slane %v2811, 7
        %v2814 = vor.u32 %v2810, %v2813
        %v2815 = vsel %vm2424, %v2806, %v2814
        %v2816 = vrot.slane %v2814, 4
        %v2818 = vshrl.u32 %v2795, 16
        %v2820 = vrot.slane %v2818, 6
        %v2821 = vshll.u32 %v2795, 16
        %v2823 = vrot.slane %v2821, 7
        %v2824 = vor.u32 %v2820, %v2823
        %v2825 = vsel %vm2424, %v2816, %v2824
        %v2826 = vrot.slane %v2824, 4
        %v2828 = vshrl.u32 %v2796, 16
        %v2830 = vrot.slane %v2828, 6
        %v2831 = vshll.u32 %v2796, 16
        %v2833 = vrot.slane %v2831, 7
        %v2834 = vor.u32 %v2830, %v2833
        %v2835 = vsel %vm2424, %v2826, %v2834
        %v2836 = vrot.slane %v2834, 4
        %v2838 = vshrl.u32 %v2797, 16
        %v2840 = vrot.slane %v2838, 6
        %v2841 = vshll.u32 %v2797, 16
        %v2843 = vrot.slane %v2841, 7
        %v2844 = vor.u32 %v2840, %v2843
        %v2845 = vsel %vm2424, %v2836, %v2844
        %2846 = vrot.lane.b32.xlu0 %v2805, 28
        %v2847 = vpop.permute.xlu0 %2846
        %2848 = vrot.lane.b32.xlu0 %v2815, 28
        %v2849 = vpop.permute.xlu0 %2848
        %2850 = vrot.lane.b32.xlu0 %v2825, 28
        %v2851 = vpop.permute.xlu0 %2850
        %2852 = vrot.lane.b32.xlu0 %v2835, 28
        %v2853 = vpop.permute.xlu0 %2852
        %2854 = vrot.lane.b32.xlu0 %v2845, 28
        %v2855 = vpop.permute.xlu0 %2854
        %vm2861 = vcmask 257249
        %vm2862 = vsmask.f32 7942
        %vm2863 = vmand %vm2861, %vm2862
        %v2864 = vld [vmem:[#allocation2 + $0x64] sm:$0xe]
        %v2865 = vsel %vm2863, %v2847, %v2864
        %2866 = vst [vmem:[#allocation2 + $0x64] sm:$0xe] %v2865
        %2867 = vst.msk [vmem:[#allocation2 + $0x68] sm:$0xf] %vm2762, %v2849
        %2868 = vst.msk [vmem:[#allocation2 + $0x6c] sm:$0xf] %vm2762, %v2851
        %2869 = vst.msk [vmem:[#allocation2 + $0x70] sm:$0xf] %vm2762, %v2853
        %2870 = vst.msk [vmem:[#allocation2 + $0x74] sm:$0xf] %vm2762, %v2855
        %v2871 = vld [vmem:[%s249 + $0x10] sm:$0x8]
        %v2872 = vld [vmem:[%s249 + $0x14] sm:$0xf]
        %v2873 = vld [vmem:[%s249 + $0x18] sm:$0xf]
        %v2874 = vld [vmem:[%s249 + $0x1c] sm:$0xf]
        %v2875 = vld [vmem:[%s249 + $0x20] sm:$0xf]
        %v2876 = vld [vmem:[%s249 + $0x24] sm:$0xf]
        %v2877 = vld [vmem:[%s249 + $0x28] sm:$0xf]
        %v2878 = vld [vmem:[%s249 + $0x2c] sm:$0xf]
        %v2879 = vld [vmem:[%s249 + $0x30] sm:$0xf]
        %v2880 = vld [vmem:[%s249 + $0x34] sm:$0xf]
        %v2881 = vld [vmem:[%s249 + $0x38] sm:$0xf]
        %v2882 = vld [vmem:[%s249 + $0x3c] sm:$0xf]
        %v2883 = vld [vmem:[%s249 + $0x40] sm:$0xf]
        %v2884 = vld [vmem:[%s249 + $0x44] sm:$0xf]
        %v2885 = vld [vmem:[%s249 + $0x48] sm:$0xf]
        %v2886 = vld [vmem:[%s249 + $0x4c] sm:$0xf]
        %v2887 = vld [vmem:[%s249 + $0x50] sm:$0xf]
        %v2888 = vld [vmem:[%s249 + $0x54] sm:$0xf]
        %v2889 = vld [vmem:[%s249 + $0x58] sm:$0xf]
        %v2890 = vld [vmem:[%s249 + $0x5c] sm:$0xf]
        %v2891 = vld [vmem:[%s249 + $0x60] sm:$0xf]
        %v2892 = vld [vmem:[%s249 + $0x64] sm:$0xf]
        %v2893 = vld [vmem:[%s249 + $0x68] sm:$0xf]
        %v2894 = vld [vmem:[%s249 + $0x6c] sm:$0xf]
        %v2895 = vld [vmem:[%s249 + $0x70] sm:$0xf]
        %v2896 = vld [vmem:[%s249 + $0x74] sm:$0xf]
        %vm2923 = vcmask 1040384
        %vm2924 = vcmask 1044484
        %vm2925 = vmor %vm2923, %vm2924
        %v2926 = vrot.slane %v2871, 7
        %v2927 = vrot.slane %v2926, 4
        %v2928 = vrot.slane %v2872, 7
        %v2929 = vsel %vm2925, %v2927, %v2928
        %v2930 = vrot.slane %v2928, 4
        %v2931 = vrot.slane %v2873, 7
        %v2932 = vsel %vm2925, %v2930, %v2931
        %v2933 = vrot.slane %v2931, 4
        %v2934 = vrot.slane %v2874, 7
        %v2935 = vsel %vm2925, %v2933, %v2934
        %v2936 = vrot.slane %v2934, 4
        %v2937 = vrot.slane %v2875, 7
        %v2938 = vsel %vm2925, %v2936, %v2937
        %v2939 = vrot.slane %v2937, 4
        %v2940 = vrot.slane %v2876, 7
        %v2941 = vsel %vm2925, %v2939, %v2940
        %v2942 = vrot.slane %v2940, 4
        %v2943 = vrot.slane %v2877, 7
        %v2944 = vsel %vm2925, %v2942, %v2943
        %v2945 = vrot.slane %v2943, 4
        %v2946 = vrot.slane %v2878, 7
        %v2947 = vsel %vm2925, %v2945, %v2946
        %v2948 = vrot.slane %v2946, 4
        %v2949 = vrot.slane %v2879, 7
        %v2950 = vsel %vm2925, %v2948, %v2949
        %v2951 = vrot.slane %v2949, 4
        %v2952 = vrot.slane %v2880, 7
        %v2953 = vsel %vm2925, %v2951, %v2952
        %v2954 = vrot.slane %v2952, 4
        %v2955 = vrot.slane %v2881, 7
        %v2956 = vsel %vm2925, %v2954, %v2955
        %v2957 = vrot.slane %v2955, 4
        %v2958 = vrot.slane %v2882, 7
        %v2959 = vsel %vm2925, %v2957, %v2958
        %v2960 = vrot.slane %v2958, 4
        %v2961 = vrot.slane %v2883, 7
        %v2962 = vsel %vm2925, %v2960, %v2961
        %v2963 = vrot.slane %v2961, 4
        %v2964 = vrot.slane %v2884, 7
        %v2965 = vsel %vm2925, %v2963, %v2964
        %v2966 = vrot.slane %v2964, 4
        %v2967 = vrot.slane %v2885, 7
        %v2968 = vsel %vm2925, %v2966, %v2967
        %v2969 = vrot.slane %v2967, 4
        %v2970 = vrot.slane %v2886, 7
        %v2971 = vsel %vm2925, %v2969, %v2970
        %v2972 = vrot.slane %v2970, 4
        %v2973 = vrot.slane %v2887, 7
        %v2974 = vsel %vm2925, %v2972, %v2973
        %v2975 = vrot.slane %v2973, 4
        %v2976 = vrot.slane %v2888, 7
        %v2977 = vsel %vm2925, %v2975, %v2976
        %v2978 = vrot.slane %v2976, 4
        %v2979 = vrot.slane %v2889, 7
        %v2980 = vsel %vm2925, %v2978, %v2979
        %v2981 = vrot.slane %v2979, 4
        %v2982 = vrot.slane %v2890, 7
        %v2983 = vsel %vm2925, %v2981, %v2982
        %v2984 = vrot.slane %v2982, 4
        %v2985 = vrot.slane %v2891, 7
        %v2986 = vsel %vm2925, %v2984, %v2985
        %v2987 = vrot.slane %v2985, 4
        %v2988 = vrot.slane %v2892, 7
        %v2989 = vsel %vm2925, %v2987, %v2988
        %v2990 = vrot.slane %v2988, 4
        %v2991 = vrot.slane %v2893, 7
        %v2992 = vsel %vm2925, %v2990, %v2991
        %v2993 = vrot.slane %v2991, 4
        %v2994 = vrot.slane %v2894, 7
        %v2995 = vsel %vm2925, %v2993, %v2994
        %v2996 = vrot.slane %v2994, 4
        %v2997 = vrot.slane %v2895, 7
        %v2998 = vsel %vm2925, %v2996, %v2997
        %v2999 = vrot.slane %v2997, 4
        %v3000 = vrot.slane %v2896, 7
        %v3001 = vsel %vm2925, %v2999, %v3000
        %v3002 = vrot.slane %v3000, 4
        %3003 = vrot.lane.b32.xlu0 %v2929, 32
        %v3004 = vpop.permute.xlu0 %3003
        %3005 = vrot.lane.b32.xlu0 %v2932, 32
        %v3006 = vpop.permute.xlu0 %3005
        %3007 = vrot.lane.b32.xlu0 %v2935, 32
        %v3008 = vpop.permute.xlu0 %3007
        %3009 = vrot.lane.b32.xlu0 %v2938, 32
        %v3010 = vpop.permute.xlu0 %3009
        %3011 = vrot.lane.b32.xlu0 %v2941, 32
        %v3012 = vpop.permute.xlu0 %3011
        %3013 = vrot.lane.b32.xlu0 %v2944, 32
        %v3014 = vpop.permute.xlu0 %3013
        %3015 = vrot.lane.b32.xlu0 %v2947, 32
        %v3016 = vpop.permute.xlu0 %3015
        %3017 = vrot.lane.b32.xlu0 %v2950, 32
        %v3018 = vpop.permute.xlu0 %3017
        %3019 = vrot.lane.b32.xlu0 %v2953, 32
        %v3020 = vpop.permute.xlu0 %3019
        %3021 = vrot.lane.b32.xlu0 %v2956, 32
        %v3022 = vpop.permute.xlu0 %3021
        %3023 = vrot.lane.b32.xlu0 %v2959, 32
        %v3024 = vpop.permute.xlu0 %3023
        %3025 = vrot.lane.b32.xlu0 %v2962, 32
        %v3026 = vpop.permute.xlu0 %3025
        %3027 = vrot.lane.b32.xlu0 %v2965, 32
        %v3028 = vpop.permute.xlu0 %3027
        %3029 = vrot.lane.b32.xlu0 %v2968, 32
        %v3030 = vpop.permute.xlu0 %3029
        %3031 = vrot.lane.b32.xlu0 %v2971, 32
        %v3032 = vpop.permute.xlu0 %3031
        %3033 = vrot.lane.b32.xlu0 %v2974, 32
        %v3034 = vpop.permute.xlu0 %3033
        %3035 = vrot.lane.b32.xlu0 %v2977, 32
        %v3036 = vpop.permute.xlu0 %3035
        %3037 = vrot.lane.b32.xlu0 %v2980, 32
        %v3038 = vpop.permute.xlu0 %3037
        %3039 = vrot.lane.b32.xlu0 %v2983, 32
        %v3040 = vpop.permute.xlu0 %3039
        %3041 = vrot.lane.b32.xlu0 %v2986, 32
        %v3042 = vpop.permute.xlu0 %3041
        %3043 = vrot.lane.b32.xlu0 %v2989, 32
        %v3044 = vpop.permute.xlu0 %3043
        %3045 = vrot.lane.b32.xlu0 %v2992, 32
        %v3046 = vpop.permute.xlu0 %3045
        %3047 = vrot.lane.b32.xlu0 %v2995, 32
        %v3048 = vpop.permute.xlu0 %3047
        %3049 = vrot.lane.b32.xlu0 %v2998, 32
        %v3050 = vpop.permute.xlu0 %3049
        %3051 = vrot.lane.b32.xlu0 %v3001, 32
        %v3052 = vpop.permute.xlu0 %3051
        %3053 = vrot.lane.b32.xlu0 %v3002, 32
        %v3054 = vpop.permute.xlu0 %3053
        %vm3081 = vcmask 290048
        %3082 = vst.msk [vmem:[#allocation2] sm:$0xf] %vm3081, %v3004
        %3083 = vst.msk [vmem:[#allocation2 + $0x4] sm:$0xf] %vm3081, %v3006
        %3084 = vst.msk [vmem:[#allocation2 + $0x8] sm:$0xf] %vm3081, %v3008
        %3085 = vst.msk [vmem:[#allocation2 + $0xc] sm:$0xf] %vm3081, %v3010
        %3086 = vst.msk [vmem:[#allocation2 + $0x10] sm:$0xf] %vm3081, %v3012
        %3087 = vst.msk [vmem:[#allocation2 + $0x14] sm:$0xf] %vm3081, %v3014
        %3088 = vst.msk [vmem:[#allocation2 + $0x18] sm:$0xf] %vm3081, %v3016
        %3089 = vst.msk [vmem:[#allocation2 + $0x1c] sm:$0xf] %vm3081, %v3018
        %3090 = vst.msk [vmem:[#allocation2 + $0x20] sm:$0xf] %vm3081, %v3020
        %3091 = vst.msk [vmem:[#allocation2 + $0x24] sm:$0xf] %vm3081, %v3022
        %3092 = vst.msk [vmem:[#allocation2 + $0x28] sm:$0xf] %vm3081, %v3024
        %3093 = vst.msk [vmem:[#allocation2 + $0x2c] sm:$0xf] %vm3081, %v3026
        %3094 = vst.msk [vmem:[#allocation2 + $0x30] sm:$0xf] %vm3081, %v3028
        %3095 = vst.msk [vmem:[#allocation2 + $0x34] sm:$0xf] %vm3081, %v3030
        %3096 = vst.msk [vmem:[#allocation2 + $0x38] sm:$0xf] %vm3081, %v3032
        %3097 = vst.msk [vmem:[#allocation2 + $0x3c] sm:$0xf] %vm3081, %v3034
        %3098 = vst.msk [vmem:[#allocation2 + $0x40] sm:$0xf] %vm3081, %v3036
        %3099 = vst.msk [vmem:[#allocation2 + $0x44] sm:$0xf] %vm3081, %v3038
        %3100 = vst.msk [vmem:[#allocation2 + $0x48] sm:$0xf] %vm3081, %v3040
        %3101 = vst.msk [vmem:[#allocation2 + $0x4c] sm:$0xf] %vm3081, %v3042
        %3102 = vst.msk [vmem:[#allocation2 + $0x50] sm:$0xf] %vm3081, %v3044
        %3103 = vst.msk [vmem:[#allocation2 + $0x54] sm:$0xf] %vm3081, %v3046
        %3104 = vst.msk [vmem:[#allocation2 + $0x58] sm:$0xf] %vm3081, %v3048
        %3105 = vst.msk [vmem:[#allocation2 + $0x5c] sm:$0xf] %vm3081, %v3050
        %3106 = vst.msk [vmem:[#allocation2 + $0x60] sm:$0xf] %vm3081, %v3052
        %vm3107 = vcmask 286976
        %3108 = vst.msk [vmem:[#allocation2 + $0x64] sm:$0x1] %vm3107, %v3054
        %v3109 = vld [vmem:[%s261] sm:$0xf]
        %v3110 = vld [vmem:[%s261 + $0x4] sm:$0xf]
        %v3111 = vld [vmem:[%s261 + $0x8] sm:$0xf]
        %v3112 = vld [vmem:[%s261 + $0xc] sm:$0xf]
        %v3113 = vld [vmem:[%s261 + $0x10] sm:$0x7]
        %v3119 = vrot.slane %v3109, 7
        %v3120 = vrot.slane %v3119, 4
        %v3121 = vrot.slane %v3110, 7
        %v3122 = vsel %vm2925, %v3120, %v3121
        %v3123 = vrot.slane %v3121, 4
        %v3124 = vrot.slane %v3111, 7
        %v3125 = vsel %vm2925, %v3123, %v3124
        %v3126 = vrot.slane %v3124, 4
        %v3127 = vrot.slane %v3112, 7
        %v3128 = vsel %vm2925, %v3126, %v3127
        %v3129 = vrot.slane %v3127, 4
        %v3130 = vrot.slane %v3113, 7
        %v3131 = vsel %vm2925, %v3129, %v3130
        %3132 = vrot.lane.b32.xlu0 %v3119, 32
        %v3133 = vpop.permute.xlu0 %3132
        %3134 = vrot.lane.b32.xlu0 %v3122, 32
        %v3135 = vpop.permute.xlu0 %3134
        %3136 = vrot.lane.b32.xlu0 %v3125, 32
        %v3137 = vpop.permute.xlu0 %3136
        %3138 = vrot.lane.b32.xlu0 %v3128, 32
        %v3139 = vpop.permute.xlu0 %3138
        %3140 = vrot.lane.b32.xlu0 %v3131, 32
        %v3141 = vpop.permute.xlu0 %3140
        %vm3147 = vcmask 290049
        %3148 = vst.msk [vmem:[#allocation2 + $0x64] sm:$0xe] %vm3147, %v3133
        %3149 = vst.msk [vmem:[#allocation2 + $0x68] sm:$0xf] %vm3081, %v3135
        %3150 = vst.msk [vmem:[#allocation2 + $0x6c] sm:$0xf] %vm3081, %v3137
        %3151 = vst.msk [vmem:[#allocation2 + $0x70] sm:$0xf] %vm3081, %v3139
        %3152 = vst.msk [vmem:[#allocation2 + $0x74] sm:$0xf] %vm3081, %v3141
        %v3153 = vld [vmem:[#allocation2] sm:$0xf]
        %v3154 = vld [vmem:[#allocation2 + $0x4] sm:$0xf]
        %v3155 = vld [vmem:[#allocation2 + $0x8] sm:$0xf]
        %v3156 = vld [vmem:[#allocation2 + $0xc] sm:$0xf]
        %v3157 = vld [vmem:[#allocation2 + $0x10] sm:$0xf]
        %v3158 = vld [vmem:[#allocation2 + $0x14] sm:$0xf]
        %v3159 = vld [vmem:[#allocation2 + $0x18] sm:$0xf]
        %v3160 = vld [vmem:[#allocation2 + $0x1c] sm:$0xf]
        %v3161 = vld [vmem:[#allocation2 + $0x20] sm:$0xf]
        %v3162 = vld [vmem:[#allocation2 + $0x24] sm:$0xf]
        %v3163 = vld [vmem:[#allocation2 + $0x28] sm:$0xf]
        %v3164 = vld [vmem:[#allocation2 + $0x2c] sm:$0xf]
        %v3165 = vld [vmem:[#allocation2 + $0x30] sm:$0xf]
        %v3166 = vld [vmem:[#allocation2 + $0x34] sm:$0xf]
        %v3167 = vld [vmem:[#allocation2 + $0x38] sm:$0xf]
        %v3168 = vld [vmem:[#allocation2 + $0x3c] sm:$0xf]
        %v3169 = vld [vmem:[#allocation2 + $0x40] sm:$0xf]
        %v3170 = vld [vmem:[#allocation2 + $0x44] sm:$0xf]
        %v3171 = vld [vmem:[#allocation2 + $0x48] sm:$0xf]
        %v3172 = vld [vmem:[#allocation2 + $0x4c] sm:$0xf]
        %v3173 = vld [vmem:[#allocation2 + $0x50] sm:$0xf]
        %v3174 = vld [vmem:[#allocation2 + $0x54] sm:$0xf]
        %v3175 = vld [vmem:[#allocation2 + $0x58] sm:$0xf]
        %v3176 = vld [vmem:[#allocation2 + $0x5c] sm:$0xf]
        %v3177 = vld [vmem:[#allocation2 + $0x60] sm:$0xf]
        %v3178 = vld [vmem:[#allocation2 + $0x64] sm:$0xf]
        %v3179 = vld [vmem:[#allocation2 + $0x68] sm:$0xf]
        %v3180 = vld [vmem:[#allocation2 + $0x6c] sm:$0xf]
        %v3181 = vld [vmem:[#allocation2 + $0x70] sm:$0xf]
        %v3182 = vld [vmem:[#allocation2 + $0x74] sm:$0xf]
        %v3183 = vld [vmem:[%s2] sm:$0xf]
        %v3184 = vld [vmem:[%s2 + $0x4] sm:$0xf]
        %v3185 = vld [vmem:[%s2 + $0x8] sm:$0xf]
        %v3186 = vld [vmem:[%s2 + $0xc] sm:$0xf]
        %v3187 = vld [vmem:[%s2 + $0x10] sm:$0x3]
        %v3218 = vunpack.c.l.b16 %v3153
        %v3219 = vunpack.c.l.b16 %v3154
        %v3220 = vunpack.c.l.b16 %v3155
        %v3221 = vunpack.c.l.b16 %v3156
        %v3222 = vunpack.c.l.b16 %v3157
        %v3223 = vunpack.c.l.b16 %v3158
        %v3224 = vunpack.c.l.b16 %v3159
        %v3225 = vunpack.c.l.b16 %v3160
        %v3226 = vunpack.c.l.b16 %v3161
        %v3227 = vunpack.c.l.b16 %v3162
        %v3228 = vunpack.c.l.b16 %v3163
        %v3229 = vunpack.c.l.b16 %v3164
        %v3230 = vunpack.c.l.b16 %v3165
        %v3231 = vunpack.c.l.b16 %v3166
        %v3232 = vunpack.c.l.b16 %v3167
        %v3233 = vunpack.c.l.b16 %v3168
        %v3234 = vunpack.c.l.b16 %v3169
        %v3235 = vunpack.c.l.b16 %v3170
        %v3236 = vunpack.c.l.b16 %v3171
        %v3237 = vunpack.c.l.b16 %v3172
        %v3238 = vunpack.c.l.b16 %v3173
        %v3239 = vunpack.c.l.b16 %v3174
        %v3240 = vunpack.c.l.b16 %v3175
        %v3241 = vunpack.c.l.b16 %v3176
        %v3242 = vunpack.c.l.b16 %v3177
        %v3243 = vunpack.c.l.b16 %v3178
        %v3244 = vunpack.c.l.b16 %v3179
        %v3245 = vunpack.c.l.b16 %v3180
        %v3246 = vunpack.c.l.b16 %v3181
        %v3247 = vunpack.c.l.b16 %v3182
        %v3248 = vpack.c.b16 %v3219, %v3218
        %v3249 = vpack.c.b16 %v3221, %v3220
        %v3250 = vpack.c.b16 %v3223, %v3222
        %v3251 = vpack.c.b16 %v3225, %v3224
        %v3252 = vpack.c.b16 %v3227, %v3226
        %v3253 = vpack.c.b16 %v3229, %v3228
        %v3254 = vpack.c.b16 %v3231, %v3230
        %v3255 = vpack.c.b16 %v3233, %v3232
        %v3256 = vpack.c.b16 %v3235, %v3234
        %v3257 = vpack.c.b16 %v3237, %v3236
        %v3258 = vpack.c.b16 %v3239, %v3238
        %v3259 = vpack.c.b16 %v3241, %v3240
        %v3260 = vpack.c.b16 %v3243, %v3242
        %v3261 = vpack.c.b16 %v3245, %v3244
        %v3262 = vpack.c.b16 %v3247, %v3246
        %v3268 = vunpack.c.l.b16 %v3183
        %v3269 = vunpack.c.l.b16 %v3184
        %v3270 = vunpack.c.l.b16 %v3185
        %v3271 = vunpack.c.l.b16 %v3186
        %v3272 = vunpack.c.l.b16 %v3187
        %v3273 = vpack.c.b16 %v3269, %v3268
        %v3274 = vpack.c.b16 %v3271, %v3270
        %v3275 = vpack.c.b16 %v3272, %v3272
        %vm3278 = vcmask 293888
        %v3280 = vsel %vm3278, %v3248, 0
        %v3283 = vsel %vm3278, %v3249, 0
        %v3286 = vsel %vm3278, %v3250, 0
        %v3289 = vsel %vm3278, %v3251, 0
        %v3292 = vsel %vm3278, %v3252, 0
        %v3295 = vsel %vm3278, %v3253, 0
        %v3298 = vsel %vm3278, %v3254, 0
        %v3301 = vsel %vm3278, %v3255, 0
        %v3304 = vsel %vm3278, %v3256, 0
        %v3307 = vsel %vm3278, %v3257, 0
        %v3310 = vsel %vm3278, %v3258, 0
        %v3313 = vsel %vm3278, %v3259, 0
        %v3316 = vsel %vm3278, %v3260, 0
        %v3319 = vsel %vm3278, %v3261, 0
        %v3322 = vsel %vm3278, %v3262, 0
        %vm3324 = vcmask 1041408
        %v3326 = vsel %vm3324, %v3275, 0
        %3328 = vmatprep.subr.bf16.mxu0 0
        %3329 = vmatpush1.bf16.msra.mxu0 0
        %3330 = vmatprep.subr.bf16.mxu0 0
        %3331 = vmatpush1.bf16.msra.mxu0 0
        %3332 = vmatprep.subr.bf16.mxu0 0
        %3333 = vmatpush1.bf16.msra.mxu0 0
        %3334 = vmatprep.subr.bf16.mxu0 0
        %3335 = vmatpush1.bf16.msra.mxu0 0
        %3336 = vmatprep.subr.bf16.mxu0 0
        %3337 = vmatpush1.bf16.msra.mxu0 0
        %3338 = vmatprep.subr.bf16.mxu0 0
        %3339 = vmatpush1.bf16.msra.mxu0 %v3326
        %3340 = vmatprep.subr.bf16.mxu0 0
        %3341 = vmatpush1.bf16.msra.mxu0 %v3274
        %3342 = vmatprep.subr.bf16.mxu0 0
        %3343 = vmatpush1.bf16.msra.mxu0 %v3273
        %3344 = vmatprep.subr.bf16.mxu0 0
        %3345 = vmatpush2.bf16.msra.mxu0 0
        %3346 = vmatprep.subr.bf16.mxu0 0
        %3347 = vmatpush2.bf16.msra.mxu0 0
        %3348 = vmatprep.subr.bf16.mxu0 0
        %3349 = vmatpush2.bf16.msra.mxu0 0
        %3350 = vmatprep.subr.bf16.mxu0 0
        %3351 = vmatpush2.bf16.msra.mxu0 0
        %3352 = vmatprep.subr.bf16.mxu0 0
        %3353 = vmatpush2.bf16.msra.mxu0 0
        %3354 = vmatprep.subr.bf16.mxu0 0
        %3355 = vmatpush2.bf16.msra.mxu0 0
        %3356 = vmatprep.subr.bf16.mxu0 0
        %3357 = vmatpush2.bf16.msra.mxu0 0
        %3358 = vmatprep.subr.bf16.mxu0 0
        %3359 = vmatpush2.bf16.msra.mxu0 0
        %3360 = vmatprep.mubr.bf16.mxu0 0
        %3361 = vmatmul.mubr.bf16.gmra.mxu0 %v3280
        %v3362 = vpop.f32.mrf.mxu0
        %v3363 = vadd.f32 0.0, %v3362
        %v3364 = vpop.f32.mrf.mxu0
        %v3365 = vpop.f32.mrf.mxu0
        %v3366 = vadd.f32 0.0, %v3365
        %v3367 = vpop.f32.mrf.mxu0
        %3368 = vmatprep.mubr.bf16.mxu0 0
        %3369 = vmatmul.mubr.bf16.gmra.mxu0 %v3283
        %v3370 = vpop.f32.mrf.mxu0
        %v3371 = vadd.f32 0.0, %v3370
        %v3372 = vpop.f32.mrf.mxu0
        %v3373 = vpop.f32.mrf.mxu0
        %v3374 = vadd.f32 0.0, %v3373
        %v3375 = vpop.f32.mrf.mxu0
        %3376 = vmatprep.mubr.bf16.mxu0 0
        %3377 = vmatmul.mubr.bf16.gmra.mxu0 %v3286
        %v3378 = vpop.f32.mrf.mxu0
        %v3379 = vadd.f32 0.0, %v3378
        %v3380 = vpop.f32.mrf.mxu0
        %v3381 = vpop.f32.mrf.mxu0
        %v3382 = vadd.f32 0.0, %v3381
        %v3383 = vpop.f32.mrf.mxu0
        %3384 = vmatprep.mubr.bf16.mxu0 0
        %3385 = vmatmul.mubr.bf16.gmra.mxu0 %v3289
        %v3386 = vpop.f32.mrf.mxu0
        %v3387 = vadd.f32 0.0, %v3386
        %v3388 = vpop.f32.mrf.mxu0
        %v3389 = vpop.f32.mrf.mxu0
        %v3390 = vadd.f32 0.0, %v3389
        %v3391 = vpop.f32.mrf.mxu0
        %3392 = vmatprep.mubr.bf16.mxu0 0
        %3393 = vmatmul.mubr.bf16.gmra.mxu0 %v3292
        %v3394 = vpop.f32.mrf.mxu0
        %v3395 = vadd.f32 0.0, %v3394
        %v3396 = vpop.f32.mrf.mxu0
        %v3397 = vpop.f32.mrf.mxu0
        %v3398 = vadd.f32 0.0, %v3397
        %v3399 = vpop.f32.mrf.mxu0
        %3400 = vmatprep.mubr.bf16.mxu0 0
        %3401 = vmatmul.mubr.bf16.gmra.mxu0 %v3295
        %v3402 = vpop.f32.mrf.mxu0
        %v3403 = vadd.f32 0.0, %v3402
        %v3404 = vpop.f32.mrf.mxu0
        %v3405 = vpop.f32.mrf.mxu0
        %v3406 = vadd.f32 0.0, %v3405
        %v3407 = vpop.f32.mrf.mxu0
        %3408 = vmatprep.mubr.bf16.mxu0 0
        %3409 = vmatmul.mubr.bf16.gmra.mxu0 %v3298
        %v3410 = vpop.f32.mrf.mxu0
        %v3411 = vadd.f32 0.0, %v3410
        %v3412 = vpop.f32.mrf.mxu0
        %v3413 = vpop.f32.mrf.mxu0
        %v3414 = vadd.f32 0.0, %v3413
        %v3415 = vpop.f32.mrf.mxu0
        %3416 = vmatprep.mubr.bf16.mxu0 0
        %3417 = vmatmul.mubr.bf16.gmra.mxu0 %v3301
        %v3418 = vpop.f32.mrf.mxu0
        %v3419 = vadd.f32 0.0, %v3418
        %v3420 = vpop.f32.mrf.mxu0
        %v3421 = vpop.f32.mrf.mxu0
        %v3422 = vadd.f32 0.0, %v3421
        %v3423 = vpop.f32.mrf.mxu0
        %3424 = vmatprep.mubr.bf16.mxu0 0
        %3425 = vmatmul.mubr.bf16.gmra.mxu0 %v3304
        %v3426 = vpop.f32.mrf.mxu0
        %v3427 = vadd.f32 0.0, %v3426
        %v3428 = vpop.f32.mrf.mxu0
        %v3429 = vpop.f32.mrf.mxu0
        %v3430 = vadd.f32 0.0, %v3429
        %v3431 = vpop.f32.mrf.mxu0
        %3432 = vmatprep.mubr.bf16.mxu0 0
        %3433 = vmatmul.mubr.bf16.gmra.mxu0 %v3307
        %v3434 = vpop.f32.mrf.mxu0
        %v3435 = vadd.f32 0.0, %v3434
        %v3436 = vpop.f32.mrf.mxu0
        %v3437 = vpop.f32.mrf.mxu0
        %v3438 = vadd.f32 0.0, %v3437
        %v3439 = vpop.f32.mrf.mxu0
        %3440 = vmatprep.mubr.bf16.mxu0 0
        %3441 = vmatmul.mubr.bf16.gmra.mxu0 %v3310
        %v3442 = vpop.f32.mrf.mxu0
        %v3443 = vadd.f32 0.0, %v3442
        %v3444 = vpop.f32.mrf.mxu0
        %v3445 = vpop.f32.mrf.mxu0
        %v3446 = vadd.f32 0.0, %v3445
        %v3447 = vpop.f32.mrf.mxu0
        %3448 = vmatprep.mubr.bf16.mxu0 0
        %3449 = vmatmul.mubr.bf16.gmra.mxu0 %v3313
        %v3450 = vpop.f32.mrf.mxu0
        %v3451 = vadd.f32 0.0, %v3450
        %v3452 = vpop.f32.mrf.mxu0
        %v3453 = vpop.f32.mrf.mxu0
        %v3454 = vadd.f32 0.0, %v3453
        %v3455 = vpop.f32.mrf.mxu0
        %3456 = vmatprep.mubr.bf16.mxu0 0
        %3457 = vmatmul.mubr.bf16.gmra.mxu0 %v3316
        %v3458 = vpop.f32.mrf.mxu0
        %v3459 = vadd.f32 0.0, %v3458
        %v3460 = vpop.f32.mrf.mxu0
        %v3461 = vpop.f32.mrf.mxu0
        %v3462 = vadd.f32 0.0, %v3461
        %v3463 = vpop.f32.mrf.mxu0
        %3464 = vmatprep.mubr.bf16.mxu0 0
        %3465 = vmatmul.mubr.bf16.gmra.mxu0 %v3319
        %v3466 = vpop.f32.mrf.mxu0
        %v3467 = vadd.f32 0.0, %v3466
        %v3468 = vpop.f32.mrf.mxu0
        %v3469 = vpop.f32.mrf.mxu0
        %v3470 = vadd.f32 0.0, %v3469
        %v3471 = vpop.f32.mrf.mxu0
        %3472 = vmatprep.mubr.bf16.mxu0 0
        %3473 = vmatmul.mubr.bf16.gmra.mxu0 %v3322
        %v3474 = vpop.f32.mrf.mxu0
        %v3475 = vadd.f32 0.0, %v3474
        %v3476 = vpop.f32.mrf.mxu0
        %v3477 = vpop.f32.mrf.mxu0
        %v3478 = vadd.f32 0.0, %v3477
        %v3479 = vpop.f32.mrf.mxu0
        %3480 = vdwg.mxu0
        %s3481 = smul.u32 %s22, 240
        %p3482 = scmp.lt.s32.totalorder %s3481, 0
        %s3483 = ssub.s32 0, %s3481
        %s3484 = scalar_select %p3482, %s3483, %s3481
        %s3485 = sdiv.u32.pop %s3484, 324
        %s3486 = srem.u32.pop %s3484, 324
        %s3487 = ssub.s32 0, %s3486
        %s3488 = scalar_select %p3482, %s3487, %s3486
        %v3489 = vlaneseq
        %v3490 = vshrl.u32 %v3489, 7
        %v3491 = vadd.s32 %v3490, 8
        %v3492 = vadd.s32 %v3490, 16
        %v3493 = vadd.s32 %v3490, 24
        %v3494 = vadd.s32 %v3490, 32
        %v3495 = vadd.s32 %v3490, 40
        %v3496 = vadd.s32 %v3490, 48
        %v3497 = vadd.s32 %v3490, 56
        %v3498 = vadd.s32 %v3490, 64
        %v3499 = vadd.s32 %v3490, 72
        %v3500 = vadd.s32 %v3490, 80
        %v3501 = vadd.s32 %v3490, 88
        %v3502 = vadd.s32 %v3490, 96
        %v3503 = vadd.s32 %v3490, 104
        %v3504 = vadd.s32 %v3490, 112
        %v3505 = vadd.s32 %v3490, 120
        %v3506 = vadd.s32 %v3490, 128
        %v3507 = vadd.s32 %v3490, 136
        %v3508 = vadd.s32 %v3490, 144
        %v3509 = vadd.s32 %v3490, 152
        %v3510 = vadd.s32 %v3490, 160
        %v3511 = vadd.s32 %v3490, 168
        %v3512 = vadd.s32 %v3490, 176
        %v3513 = vadd.s32 %v3490, 184
        %v3514 = vadd.s32 %v3490, 192
        %v3515 = vadd.s32 %v3490, 200
        %v3516 = vadd.s32 %v3490, 208
        %v3517 = vadd.s32 %v3490, 216
        %v3518 = vadd.s32 %v3490, 224
        %v3519 = vadd.s32 %v3490, 232
        %v3520 = vstv %s3481
        %v3521 = vadd.s32 %v3520, %v3490
        %v3522 = vadd.s32 %v3520, %v3491
        %v3523 = vadd.s32 %v3520, %v3492
        %v3524 = vadd.s32 %v3520, %v3493
        %v3525 = vadd.s32 %v3520, %v3494
        %v3526 = vadd.s32 %v3520, %v3495
        %v3527 = vadd.s32 %v3520, %v3496
        %v3528 = vadd.s32 %v3520, %v3497
        %v3529 = vadd.s32 %v3520, %v3498
        %v3530 = vadd.s32 %v3520, %v3499
        %v3531 = vadd.s32 %v3520, %v3500
        %v3532 = vadd.s32 %v3520, %v3501
        %v3533 = vadd.s32 %v3520, %v3502
        %v3534 = vadd.s32 %v3520, %v3503
        %v3535 = vadd.s32 %v3520, %v3504
        %v3536 = vadd.s32 %v3520, %v3505
        %v3537 = vadd.s32 %v3520, %v3506
        %v3538 = vadd.s32 %v3520, %v3507
        %v3539 = vadd.s32 %v3520, %v3508
        %v3540 = vadd.s32 %v3520, %v3509
        %v3541 = vadd.s32 %v3520, %v3510
        %v3542 = vadd.s32 %v3520, %v3511
        %v3543 = vadd.s32 %v3520, %v3512
        %v3544 = vadd.s32 %v3520, %v3513
        %v3545 = vadd.s32 %v3520, %v3514
        %v3546 = vadd.s32 %v3520, %v3515
        %v3547 = vadd.s32 %v3520, %v3516
        %v3548 = vadd.s32 %v3520, %v3517
        %v3549 = vadd.s32 %v3520, %v3518
        %v3550 = vadd.s32 %v3520, %v3519
        %v3551 = vstv %s3488
        %v3552 = vadd.s32 %v3551, %v3490
        %v3553 = vadd.s32 %v3551, %v3491
        %v3554 = vadd.s32 %v3551, %v3492
        %v3555 = vadd.s32 %v3551, %v3493
        %v3556 = vadd.s32 %v3551, %v3494
        %v3557 = vadd.s32 %v3551, %v3495
        %v3558 = vadd.s32 %v3551, %v3496
        %v3559 = vadd.s32 %v3551, %v3497
        %v3560 = vadd.s32 %v3551, %v3498
        %v3561 = vadd.s32 %v3551, %v3499
        %v3562 = vadd.s32 %v3551, %v3500
        %v3563 = vadd.s32 %v3551, %v3501
        %v3564 = vadd.s32 %v3551, %v3502
        %v3565 = vadd.s32 %v3551, %v3503
        %v3566 = vadd.s32 %v3551, %v3504
        %v3567 = vadd.s32 %v3551, %v3505
        %v3568 = vadd.s32 %v3551, %v3506
        %v3569 = vadd.s32 %v3551, %v3507
        %v3570 = vadd.s32 %v3551, %v3508
        %v3571 = vadd.s32 %v3551, %v3509
        %v3572 = vadd.s32 %v3551, %v3510
        %v3573 = vadd.s32 %v3551, %v3511
        %v3574 = vadd.s32 %v3551, %v3512
        %v3575 = vadd.s32 %v3551, %v3513
        %v3576 = vadd.s32 %v3551, %v3514
        %v3577 = vadd.s32 %v3551, %v3515
        %v3578 = vadd.s32 %v3551, %v3516
        %v3579 = vadd.s32 %v3551, %v3517
        %v3580 = vadd.s32 %v3551, %v3518
        %v3581 = vadd.s32 %v3551, %v3519
        %v3582 = vcvt.s32.f32 %v3552
        %v3583 = vcvt.s32.f32 %v3553
        %v3584 = vcvt.s32.f32 %v3554
        %v3585 = vcvt.s32.f32 %v3555
        %v3586 = vcvt.s32.f32 %v3556
        %v3587 = vcvt.s32.f32 %v3557
        %v3588 = vcvt.s32.f32 %v3558
        %v3589 = vcvt.s32.f32 %v3559
        %v3590 = vcvt.s32.f32 %v3560
        %v3591 = vcvt.s32.f32 %v3561
        %v3592 = vcvt.s32.f32 %v3562
        %v3593 = vcvt.s32.f32 %v3563
        %v3594 = vcvt.s32.f32 %v3564
        %v3595 = vcvt.s32.f32 %v3565
        %v3596 = vcvt.s32.f32 %v3566
        %v3597 = vcvt.s32.f32 %v3567
        %v3598 = vcvt.s32.f32 %v3568
        %v3599 = vcvt.s32.f32 %v3569
        %v3600 = vcvt.s32.f32 %v3570
        %v3601 = vcvt.s32.f32 %v3571
        %v3602 = vcvt.s32.f32 %v3572
        %v3603 = vcvt.s32.f32 %v3573
        %v3604 = vcvt.s32.f32 %v3574
        %v3605 = vcvt.s32.f32 %v3575
        %v3606 = vcvt.s32.f32 %v3576
        %v3607 = vcvt.s32.f32 %v3577
        %v3608 = vcvt.s32.f32 %v3578
        %v3609 = vcvt.s32.f32 %v3579
        %v3610 = vcvt.s32.f32 %v3580
        %v3611 = vcvt.s32.f32 %v3581
        %v3612 = vadd.f32 %v3582, 0.5
        %v3613 = vadd.f32 %v3583, 0.5
        %v3614 = vadd.f32 %v3584, 0.5
        %v3615 = vadd.f32 %v3585, 0.5
        %v3616 = vadd.f32 %v3586, 0.5
        %v3617 = vadd.f32 %v3587, 0.5
        %v3618 = vadd.f32 %v3588, 0.5
        %v3619 = vadd.f32 %v3589, 0.5
        %v3620 = vadd.f32 %v3590, 0.5
        %v3621 = vadd.f32 %v3591, 0.5
        %v3622 = vadd.f32 %v3592, 0.5
        %v3623 = vadd.f32 %v3593, 0.5
        %v3624 = vadd.f32 %v3594, 0.5
        %v3625 = vadd.f32 %v3595, 0.5
        %v3626 = vadd.f32 %v3596, 0.5
        %v3627 = vadd.f32 %v3597, 0.5
        %v3628 = vadd.f32 %v3598, 0.5
        %v3629 = vadd.f32 %v3599, 0.5
        %v3630 = vadd.f32 %v3600, 0.5
        %v3631 = vadd.f32 %v3601, 0.5
        %v3632 = vadd.f32 %v3602, 0.5
        %v3633 = vadd.f32 %v3603, 0.5
        %v3634 = vadd.f32 %v3604, 0.5
        %v3635 = vadd.f32 %v3605, 0.5
        %v3636 = vadd.f32 %v3606, 0.5
        %v3637 = vadd.f32 %v3607, 0.5
        %v3638 = vadd.f32 %v3608, 0.5
        %v3639 = vadd.f32 %v3609, 0.5
        %v3640 = vadd.f32 %v3610, 0.5
        %v3641 = vadd.f32 %v3611, 0.5
        %v3642 = vmul.f32 %v3612, 0.0030864198
        %v3643 = vmul.f32 %v3613, 0.0030864198
        %v3644 = vmul.f32 %v3614, 0.0030864198
        %v3645 = vmul.f32 %v3615, 0.0030864198
        %v3646 = vmul.f32 %v3616, 0.0030864198
        %v3647 = vmul.f32 %v3617, 0.0030864198
        %v3648 = vmul.f32 %v3618, 0.0030864198
        %v3649 = vmul.f32 %v3619, 0.0030864198
        %v3650 = vmul.f32 %v3620, 0.0030864198
        %v3651 = vmul.f32 %v3621, 0.0030864198
        %v3652 = vmul.f32 %v3622, 0.0030864198
        %v3653 = vmul.f32 %v3623, 0.0030864198
        %v3654 = vmul.f32 %v3624, 0.0030864198
        %v3655 = vmul.f32 %v3625, 0.0030864198
        %v3656 = vmul.f32 %v3626, 0.0030864198
        %v3657 = vmul.f32 %v3627, 0.0030864198
        %v3658 = vmul.f32 %v3628, 0.0030864198
        %v3659 = vmul.f32 %v3629, 0.0030864198
        %v3660 = vmul.f32 %v3630, 0.0030864198
        %v3661 = vmul.f32 %v3631, 0.0030864198
        %v3662 = vmul.f32 %v3632, 0.0030864198
        %v3663 = vmul.f32 %v3633, 0.0030864198
        %v3664 = vmul.f32 %v3634, 0.0030864198
        %v3665 = vmul.f32 %v3635, 0.0030864198
        %v3666 = vmul.f32 %v3636, 0.0030864198
        %v3667 = vmul.f32 %v3637, 0.0030864198
        %v3668 = vmul.f32 %v3638, 0.0030864198
        %v3669 = vmul.f32 %v3639, 0.0030864198
        %v3670 = vmul.f32 %v3640, 0.0030864198
        %v3671 = vmul.f32 %v3641, 0.0030864198
        %v3672 = vfloor.f32 %v3642
        %v3673 = vfloor.f32 %v3643
        %v3674 = vfloor.f32 %v3644
        %v3675 = vfloor.f32 %v3645
        %v3676 = vfloor.f32 %v3646
        %v3677 = vfloor.f32 %v3647
        %v3678 = vfloor.f32 %v3648
        %v3679 = vfloor.f32 %v3649
        %v3680 = vfloor.f32 %v3650
        %v3681 = vfloor.f32 %v3651
        %v3682 = vfloor.f32 %v3652
        %v3683 = vfloor.f32 %v3653
        %v3684 = vfloor.f32 %v3654
        %v3685 = vfloor.f32 %v3655
        %v3686 = vfloor.f32 %v3656
        %v3687 = vfloor.f32 %v3657
        %v3688 = vfloor.f32 %v3658
        %v3689 = vfloor.f32 %v3659
        %v3690 = vfloor.f32 %v3660
        %v3691 = vfloor.f32 %v3661
        %v3692 = vfloor.f32 %v3662
        %v3693 = vfloor.f32 %v3663
        %v3694 = vfloor.f32 %v3664
        %v3695 = vfloor.f32 %v3665
        %v3696 = vfloor.f32 %v3666
        %v3697 = vfloor.f32 %v3667
        %v3698 = vfloor.f32 %v3668
        %v3699 = vfloor.f32 %v3669
        %v3700 = vfloor.f32 %v3670
        %v3701 = vfloor.f32 %v3671
        %v3702 = vcvt.f32.s32.to.zero.pseudo %v3672
        %v3703 = vcvt.f32.s32.to.zero.pseudo %v3673
        %v3704 = vcvt.f32.s32.to.zero.pseudo %v3674
        %v3705 = vcvt.f32.s32.to.zero.pseudo %v3675
        %v3706 = vcvt.f32.s32.to.zero.pseudo %v3676
        %v3707 = vcvt.f32.s32.to.zero.pseudo %v3677
        %v3708 = vcvt.f32.s32.to.zero.pseudo %v3678
        %v3709 = vcvt.f32.s32.to.zero.pseudo %v3679
        %v3710 = vcvt.f32.s32.to.zero.pseudo %v3680
        %v3711 = vcvt.f32.s32.to.zero.pseudo %v3681
        %v3712 = vcvt.f32.s32.to.zero.pseudo %v3682
        %v3713 = vcvt.f32.s32.to.zero.pseudo %v3683
        %v3714 = vcvt.f32.s32.to.zero.pseudo %v3684
        %v3715 = vcvt.f32.s32.to.zero.pseudo %v3685
        %v3716 = vcvt.f32.s32.to.zero.pseudo %v3686
        %v3717 = vcvt.f32.s32.to.zero.pseudo %v3687
        %v3718 = vcvt.f32.s32.to.zero.pseudo %v3688
        %v3719 = vcvt.f32.s32.to.zero.pseudo %v3689
        %v3720 = vcvt.f32.s32.to.zero.pseudo %v3690
        %v3721 = vcvt.f32.s32.to.zero.pseudo %v3691
        %v3722 = vcvt.f32.s32.to.zero.pseudo %v3692
        %v3723 = vcvt.f32.s32.to.zero.pseudo %v3693
        %v3724 = vcvt.f32.s32.to.zero.pseudo %v3694
        %v3725 = vcvt.f32.s32.to.zero.pseudo %v3695
        %v3726 = vcvt.f32.s32.to.zero.pseudo %v3696
        %v3727 = vcvt.f32.s32.to.zero.pseudo %v3697
        %v3728 = vcvt.f32.s32.to.zero.pseudo %v3698
        %v3729 = vcvt.f32.s32.to.zero.pseudo %v3699
        %v3730 = vcvt.f32.s32.to.zero.pseudo %v3700
        %v3731 = vcvt.f32.s32.to.zero.pseudo %v3701
        %v3732 = vmul.u32 %v3702, 324
        %v3733 = vmul.u32 %v3703, 324
        %v3734 = vmul.u32 %v3704, 324
        %v3735 = vmul.u32 %v3705, 324
        %v3736 = vmul.u32 %v3706, 324
        %v3737 = vmul.u32 %v3707, 324
        %v3738 = vmul.u32 %v3708, 324
        %v3739 = vmul.u32 %v3709, 324
        %v3740 = vmul.u32 %v3710, 324
        %v3741 = vmul.u32 %v3711, 324
        %v3742 = vmul.u32 %v3712, 324
        %v3743 = vmul.u32 %v3713, 324
        %v3744 = vmul.u32 %v3714, 324
        %v3745 = vmul.u32 %v3715, 324
        %v3746 = vmul.u32 %v3716, 324
        %v3747 = vmul.u32 %v3717, 324
        %v3748 = vmul.u32 %v3718, 324
        %v3749 = vmul.u32 %v3719, 324
        %v3750 = vmul.u32 %v3720, 324
        %v3751 = vmul.u32 %v3721, 324
        %v3752 = vmul.u32 %v3722, 324
        %v3753 = vmul.u32 %v3723, 324
        %v3754 = vmul.u32 %v3724, 324
        %v3755 = vmul.u32 %v3725, 324
        %v3756 = vmul.u32 %v3726, 324
        %v3757 = vmul.u32 %v3727, 324
        %v3758 = vmul.u32 %v3728, 324
        %v3759 = vmul.u32 %v3729, 324
        %v3760 = vmul.u32 %v3730, 324
        %v3761 = vmul.u32 %v3731, 324
        %v3762 = vsub.s32 %v3552, %v3732
        %v3763 = vsub.s32 %v3553, %v3733
        %v3764 = vsub.s32 %v3554, %v3734
        %v3765 = vsub.s32 %v3555, %v3735
        %v3766 = vsub.s32 %v3556, %v3736
        %v3767 = vsub.s32 %v3557, %v3737
        %v3768 = vsub.s32 %v3558, %v3738
        %v3769 = vsub.s32 %v3559, %v3739
        %v3770 = vsub.s32 %v3560, %v3740
        %v3771 = vsub.s32 %v3561, %v3741
        %v3772 = vsub.s32 %v3562, %v3742
        %v3773 = vsub.s32 %v3563, %v3743
        %v3774 = vsub.s32 %v3564, %v3744
        %v3775 = vsub.s32 %v3565, %v3745
        %v3776 = vsub.s32 %v3566, %v3746
        %v3777 = vsub.s32 %v3567, %v3747
        %v3778 = vsub.s32 %v3568, %v3748
        %v3779 = vsub.s32 %v3569, %v3749
        %v3780 = vsub.s32 %v3570, %v3750
        %v3781 = vsub.s32 %v3571, %v3751
        %v3782 = vsub.s32 %v3572, %v3752
        %v3783 = vsub.s32 %v3573, %v3753
        %v3784 = vsub.s32 %v3574, %v3754
        %v3785 = vsub.s32 %v3575, %v3755
        %v3786 = vsub.s32 %v3576, %v3756
        %v3787 = vsub.s32 %v3577, %v3757
        %v3788 = vsub.s32 %v3578, %v3758
        %v3789 = vsub.s32 %v3579, %v3759
        %v3790 = vsub.s32 %v3580, %v3760
        %v3791 = vsub.s32 %v3581, %v3761
        %v3792 = vcvt.s32.f32 %v3762
        %v3793 = vcvt.s32.f32 %v3763
        %v3794 = vcvt.s32.f32 %v3764
        %v3795 = vcvt.s32.f32 %v3765
        %v3796 = vcvt.s32.f32 %v3766
        %v3797 = vcvt.s32.f32 %v3767
        %v3798 = vcvt.s32.f32 %v3768
        %v3799 = vcvt.s32.f32 %v3769
        %v3800 = vcvt.s32.f32 %v3770
        %v3801 = vcvt.s32.f32 %v3771
        %v3802 = vcvt.s32.f32 %v3772
        %v3803 = vcvt.s32.f32 %v3773
        %v3804 = vcvt.s32.f32 %v3774
        %v3805 = vcvt.s32.f32 %v3775
        %v3806 = vcvt.s32.f32 %v3776
        %v3807 = vcvt.s32.f32 %v3777
        %v3808 = vcvt.s32.f32 %v3778
        %v3809 = vcvt.s32.f32 %v3779
        %v3810 = vcvt.s32.f32 %v3780
        %v3811 = vcvt.s32.f32 %v3781
        %v3812 = vcvt.s32.f32 %v3782
        %v3813 = vcvt.s32.f32 %v3783
        %v3814 = vcvt.s32.f32 %v3784
        %v3815 = vcvt.s32.f32 %v3785
        %v3816 = vcvt.s32.f32 %v3786
        %v3817 = vcvt.s32.f32 %v3787
        %v3818 = vcvt.s32.f32 %v3788
        %v3819 = vcvt.s32.f32 %v3789
        %v3820 = vcvt.s32.f32 %v3790
        %v3821 = vcvt.s32.f32 %v3791
        %v3822 = vadd.f32 %v3792, 0.5
        %v3823 = vadd.f32 %v3793, 0.5
        %v3824 = vadd.f32 %v3794, 0.5
        %v3825 = vadd.f32 %v3795, 0.5
        %v3826 = vadd.f32 %v3796, 0.5
        %v3827 = vadd.f32 %v3797, 0.5
        %v3828 = vadd.f32 %v3798, 0.5
        %v3829 = vadd.f32 %v3799, 0.5
        %v3830 = vadd.f32 %v3800, 0.5
        %v3831 = vadd.f32 %v3801, 0.5
        %v3832 = vadd.f32 %v3802, 0.5
        %v3833 = vadd.f32 %v3803, 0.5
        %v3834 = vadd.f32 %v3804, 0.5
        %v3835 = vadd.f32 %v3805, 0.5
        %v3836 = vadd.f32 %v3806, 0.5
        %v3837 = vadd.f32 %v3807, 0.5
        %v3838 = vadd.f32 %v3808, 0.5
        %v3839 = vadd.f32 %v3809, 0.5
        %v3840 = vadd.f32 %v3810, 0.5
        %v3841 = vadd.f32 %v3811, 0.5
        %v3842 = vadd.f32 %v3812, 0.5
        %v3843 = vadd.f32 %v3813, 0.5
        %v3844 = vadd.f32 %v3814, 0.5
        %v3845 = vadd.f32 %v3815, 0.5
        %v3846 = vadd.f32 %v3816, 0.5
        %v3847 = vadd.f32 %v3817, 0.5
        %v3848 = vadd.f32 %v3818, 0.5
        %v3849 = vadd.f32 %v3819, 0.5
        %v3850 = vadd.f32 %v3820, 0.5
        %v3851 = vadd.f32 %v3821, 0.5
        %v3852 = vmul.f32 %v3822, 0.055555556
        %v3853 = vmul.f32 %v3823, 0.055555556
        %v3854 = vmul.f32 %v3824, 0.055555556
        %v3855 = vmul.f32 %v3825, 0.055555556
        %v3856 = vmul.f32 %v3826, 0.055555556
        %v3857 = vmul.f32 %v3827, 0.055555556
        %v3858 = vmul.f32 %v3828, 0.055555556
        %v3859 = vmul.f32 %v3829, 0.055555556
        %v3860 = vmul.f32 %v3830, 0.055555556
        %v3861 = vmul.f32 %v3831, 0.055555556
        %v3862 = vmul.f32 %v3832, 0.055555556
        %v3863 = vmul.f32 %v3833, 0.055555556
        %v3864 = vmul.f32 %v3834, 0.055555556
        %v3865 = vmul.f32 %v3835, 0.055555556
        %v3866 = vmul.f32 %v3836, 0.055555556
        %v3867 = vmul.f32 %v3837, 0.055555556
        %v3868 = vmul.f32 %v3838, 0.055555556
        %v3869 = vmul.f32 %v3839, 0.055555556
        %v3870 = vmul.f32 %v3840, 0.055555556
        %v3871 = vmul.f32 %v3841, 0.055555556
        %v3872 = vmul.f32 %v3842, 0.055555556
        %v3873 = vmul.f32 %v3843, 0.055555556
        %v3874 = vmul.f32 %v3844, 0.055555556
        %v3875 = vmul.f32 %v3845, 0.055555556
        %v3876 = vmul.f32 %v3846, 0.055555556
        %v3877 = vmul.f32 %v3847, 0.055555556
        %v3878 = vmul.f32 %v3848, 0.055555556
        %v3879 = vmul.f32 %v3849, 0.055555556
        %v3880 = vmul.f32 %v3850, 0.055555556
        %v3881 = vmul.f32 %v3851, 0.055555556
        %v3882 = vfloor.f32 %v3852
        %v3883 = vfloor.f32 %v3853
        %v3884 = vfloor.f32 %v3854
        %v3885 = vfloor.f32 %v3855
        %v3886 = vfloor.f32 %v3856
        %v3887 = vfloor.f32 %v3857
        %v3888 = vfloor.f32 %v3858
        %v3889 = vfloor.f32 %v3859
        %v3890 = vfloor.f32 %v3860
        %v3891 = vfloor.f32 %v3861
        %v3892 = vfloor.f32 %v3862
        %v3893 = vfloor.f32 %v3863
        %v3894 = vfloor.f32 %v3864
        %v3895 = vfloor.f32 %v3865
        %v3896 = vfloor.f32 %v3866
        %v3897 = vfloor.f32 %v3867
        %v3898 = vfloor.f32 %v3868
        %v3899 = vfloor.f32 %v3869
        %v3900 = vfloor.f32 %v3870
        %v3901 = vfloor.f32 %v3871
        %v3902 = vfloor.f32 %v3872
        %v3903 = vfloor.f32 %v3873
        %v3904 = vfloor.f32 %v3874
        %v3905 = vfloor.f32 %v3875
        %v3906 = vfloor.f32 %v3876
        %v3907 = vfloor.f32 %v3877
        %v3908 = vfloor.f32 %v3878
        %v3909 = vfloor.f32 %v3879
        %v3910 = vfloor.f32 %v3880
        %v3911 = vfloor.f32 %v3881
        %v3912 = vcvt.f32.s32.to.zero.pseudo %v3882
        %v3913 = vcvt.f32.s32.to.zero.pseudo %v3883
        %v3914 = vcvt.f32.s32.to.zero.pseudo %v3884
        %v3915 = vcvt.f32.s32.to.zero.pseudo %v3885
        %v3916 = vcvt.f32.s32.to.zero.pseudo %v3886
        %v3917 = vcvt.f32.s32.to.zero.pseudo %v3887
        %v3918 = vcvt.f32.s32.to.zero.pseudo %v3888
        %v3919 = vcvt.f32.s32.to.zero.pseudo %v3889
        %v3920 = vcvt.f32.s32.to.zero.pseudo %v3890
        %v3921 = vcvt.f32.s32.to.zero.pseudo %v3891
        %v3922 = vcvt.f32.s32.to.zero.pseudo %v3892
        %v3923 = vcvt.f32.s32.to.zero.pseudo %v3893
        %v3924 = vcvt.f32.s32.to.zero.pseudo %v3894
        %v3925 = vcvt.f32.s32.to.zero.pseudo %v3895
        %v3926 = vcvt.f32.s32.to.zero.pseudo %v3896
        %v3927 = vcvt.f32.s32.to.zero.pseudo %v3897
        %v3928 = vcvt.f32.s32.to.zero.pseudo %v3898
        %v3929 = vcvt.f32.s32.to.zero.pseudo %v3899
        %v3930 = vcvt.f32.s32.to.zero.pseudo %v3900
        %v3931 = vcvt.f32.s32.to.zero.pseudo %v3901
        %v3932 = vcvt.f32.s32.to.zero.pseudo %v3902
        %v3933 = vcvt.f32.s32.to.zero.pseudo %v3903
        %v3934 = vcvt.f32.s32.to.zero.pseudo %v3904
        %v3935 = vcvt.f32.s32.to.zero.pseudo %v3905
        %v3936 = vcvt.f32.s32.to.zero.pseudo %v3906
        %v3937 = vcvt.f32.s32.to.zero.pseudo %v3907
        %v3938 = vcvt.f32.s32.to.zero.pseudo %v3908
        %v3939 = vcvt.f32.s32.to.zero.pseudo %v3909
        %v3940 = vcvt.f32.s32.to.zero.pseudo %v3910
        %v3941 = vcvt.f32.s32.to.zero.pseudo %v3911
        %v3942 = vmul.u32 %v3912, 18
        %v3943 = vmul.u32 %v3913, 18
        %v3944 = vmul.u32 %v3914, 18
        %v3945 = vmul.u32 %v3915, 18
        %v3946 = vmul.u32 %v3916, 18
        %v3947 = vmul.u32 %v3917, 18
        %v3948 = vmul.u32 %v3918, 18
        %v3949 = vmul.u32 %v3919, 18
        %v3950 = vmul.u32 %v3920, 18
        %v3951 = vmul.u32 %v3921, 18
        %v3952 = vmul.u32 %v3922, 18
        %v3953 = vmul.u32 %v3923, 18
        %v3954 = vmul.u32 %v3924, 18
        %v3955 = vmul.u32 %v3925, 18
        %v3956 = vmul.u32 %v3926, 18
        %v3957 = vmul.u32 %v3927, 18
        %v3958 = vmul.u32 %v3928, 18
        %v3959 = vmul.u32 %v3929, 18
        %v3960 = vmul.u32 %v3930, 18
        %v3961 = vmul.u32 %v3931, 18
        %v3962 = vmul.u32 %v3932, 18
        %v3963 = vmul.u32 %v3933, 18
        %v3964 = vmul.u32 %v3934, 18
        %v3965 = vmul.u32 %v3935, 18
        %v3966 = vmul.u32 %v3936, 18
        %v3967 = vmul.u32 %v3937, 18
        %v3968 = vmul.u32 %v3938, 18
        %v3969 = vmul.u32 %v3939, 18
        %v3970 = vmul.u32 %v3940, 18
        %v3971 = vmul.u32 %v3941, 18
        %v3972 = vsub.s32 %v3762, %v3942
        %v3973 = vsub.s32 %v3763, %v3943
        %v3974 = vsub.s32 %v3764, %v3944
        %v3975 = vsub.s32 %v3765, %v3945
        %v3976 = vsub.s32 %v3766, %v3946
        %v3977 = vsub.s32 %v3767, %v3947
        %v3978 = vsub.s32 %v3768, %v3948
        %v3979 = vsub.s32 %v3769, %v3949
        %v3980 = vsub.s32 %v3770, %v3950
        %v3981 = vsub.s32 %v3771, %v3951
        %v3982 = vsub.s32 %v3772, %v3952
        %v3983 = vsub.s32 %v3773, %v3953
        %v3984 = vsub.s32 %v3774, %v3954
        %v3985 = vsub.s32 %v3775, %v3955
        %v3986 = vsub.s32 %v3776, %v3956
        %v3987 = vsub.s32 %v3777, %v3957
        %v3988 = vsub.s32 %v3778, %v3958
        %v3989 = vsub.s32 %v3779, %v3959
        %v3990 = vsub.s32 %v3780, %v3960
        %v3991 = vsub.s32 %v3781, %v3961
        %v3992 = vsub.s32 %v3782, %v3962
        %v3993 = vsub.s32 %v3783, %v3963
        %v3994 = vsub.s32 %v3784, %v3964
        %v3995 = vsub.s32 %v3785, %v3965
        %v3996 = vsub.s32 %v3786, %v3966
        %v3997 = vsub.s32 %v3787, %v3967
        %v3998 = vsub.s32 %v3788, %v3968
        %v3999 = vsub.s32 %v3789, %v3969
        %v4000 = vsub.s32 %v3790, %v3970
        %v4001 = vsub.s32 %v3791, %v3971
        %vm4002 = vcmp.lt.s32.totalorder %v3521, 648
        %vm4003 = vcmp.lt.s32.totalorder %v3522, 648
        %vm4004 = vcmp.lt.s32.totalorder %v3523, 648
        %vm4005 = vcmp.lt.s32.totalorder %v3524, 648
        %vm4006 = vcmp.lt.s32.totalorder %v3525, 648
        %vm4007 = vcmp.lt.s32.totalorder %v3526, 648
        %vm4008 = vcmp.lt.s32.totalorder %v3527, 648
        %vm4009 = vcmp.lt.s32.totalorder %v3528, 648
        %vm4010 = vcmp.lt.s32.totalorder %v3529, 648
        %vm4011 = vcmp.lt.s32.totalorder %v3530, 648
        %vm4012 = vcmp.lt.s32.totalorder %v3531, 648
        %vm4013 = vcmp.lt.s32.totalorder %v3532, 648
        %vm4014 = vcmp.lt.s32.totalorder %v3533, 648
        %vm4015 = vcmp.lt.s32.totalorder %v3534, 648
        %vm4016 = vcmp.lt.s32.totalorder %v3535, 648
        %vm4017 = vcmp.lt.s32.totalorder %v3536, 648
        %vm4018 = vcmp.lt.s32.totalorder %v3537, 648
        %vm4019 = vcmp.lt.s32.totalorder %v3538, 648
        %vm4020 = vcmp.lt.s32.totalorder %v3539, 648
        %vm4021 = vcmp.lt.s32.totalorder %v3540, 648
        %vm4022 = vcmp.lt.s32.totalorder %v3541, 648
        %vm4023 = vcmp.lt.s32.totalorder %v3542, 648
        %vm4024 = vcmp.lt.s32.totalorder %v3543, 648
        %vm4025 = vcmp.lt.s32.totalorder %v3544, 648
        %vm4026 = vcmp.lt.s32.totalorder %v3545, 648
        %vm4027 = vcmp.lt.s32.totalorder %v3546, 648
        %vm4028 = vcmp.lt.s32.totalorder %v3547, 648
        %vm4029 = vcmp.lt.s32.totalorder %v3548, 648
        %vm4030 = vcmp.lt.s32.totalorder %v3549, 648
        %vm4031 = vcmp.lt.s32.totalorder %v3550, 648
        %vm4032 = vcmp.lt.s32.totalorder %v3912, 16
        %vm4033 = vcmp.lt.s32.totalorder %v3913, 16
        %vm4034 = vcmp.lt.s32.totalorder %v3914, 16
        %vm4035 = vcmp.lt.s32.totalorder %v3915, 16
        %vm4036 = vcmp.lt.s32.totalorder %v3916, 16
        %vm4037 = vcmp.lt.s32.totalorder %v3917, 16
        %vm4038 = vcmp.lt.s32.totalorder %v3918, 16
        %vm4039 = vcmp.lt.s32.totalorder %v3919, 16
        %vm4040 = vcmp.lt.s32.totalorder %v3920, 16
        %vm4041 = vcmp.lt.s32.totalorder %v3921, 16
        %vm4042 = vcmp.lt.s32.totalorder %v3922, 16
        %vm4043 = vcmp.lt.s32.totalorder %v3923, 16
        %vm4044 = vcmp.lt.s32.totalorder %v3924, 16
        %vm4045 = vcmp.lt.s32.totalorder %v3925, 16
        %vm4046 = vcmp.lt.s32.totalorder %v3926, 16
        %vm4047 = vcmp.lt.s32.totalorder %v3927, 16
        %vm4048 = vcmp.lt.s32.totalorder %v3928, 16
        %vm4049 = vcmp.lt.s32.totalorder %v3929, 16
        %vm4050 = vcmp.lt.s32.totalorder %v3930, 16
        %vm4051 = vcmp.lt.s32.totalorder %v3931, 16
        %vm4052 = vcmp.lt.s32.totalorder %v3932, 16
        %vm4053 = vcmp.lt.s32.totalorder %v3933, 16
        %vm4054 = vcmp.lt.s32.totalorder %v3934, 16
        %vm4055 = vcmp.lt.s32.totalorder %v3935, 16
        %vm4056 = vcmp.lt.s32.totalorder %v3936, 16
        %vm4057 = vcmp.lt.s32.totalorder %v3937, 16
        %vm4058 = vcmp.lt.s32.totalorder %v3938, 16
        %vm4059 = vcmp.lt.s32.totalorder %v3939, 16
        %vm4060 = vcmp.lt.s32.totalorder %v3940, 16
        %vm4061 = vcmp.lt.s32.totalorder %v3941, 16
        %vm4062 = vmand %vm4002, %vm4032
        %vm4063 = vmand %vm4003, %vm4033
        %vm4064 = vmand %vm4004, %vm4034
        %vm4065 = vmand %vm4005, %vm4035
        %vm4066 = vmand %vm4006, %vm4036
        %vm4067 = vmand %vm4007, %vm4037
        %vm4068 = vmand %vm4008, %vm4038
        %vm4069 = vmand %vm4009, %vm4039
        %vm4070 = vmand %vm4010, %vm4040
        %vm4071 = vmand %vm4011, %vm4041
        %vm4072 = vmand %vm4012, %vm4042
        %vm4073 = vmand %vm4013, %vm4043
        %vm4074 = vmand %vm4014, %vm4044
        %vm4075 = vmand %vm4015, %vm4045
        %vm4076 = vmand %vm4016, %vm4046
        %vm4077 = vmand %vm4017, %vm4047
        %vm4078 = vmand %vm4018, %vm4048
        %vm4079 = vmand %vm4019, %vm4049
        %vm4080 = vmand %vm4020, %vm4050
        %vm4081 = vmand %vm4021, %vm4051
        %vm4082 = vmand %vm4022, %vm4052
        %vm4083 = vmand %vm4023, %vm4053
        %vm4084 = vmand %vm4024, %vm4054
        %vm4085 = vmand %vm4025, %vm4055
        %vm4086 = vmand %vm4026, %vm4056
        %vm4087 = vmand %vm4027, %vm4057
        %vm4088 = vmand %vm4028, %vm4058
        %vm4089 = vmand %vm4029, %vm4059
        %vm4090 = vmand %vm4030, %vm4060
        %vm4091 = vmand %vm4031, %vm4061
        %vm4092 = vcmp.lt.s32.totalorder %v3972, 16
        %vm4093 = vcmp.lt.s32.totalorder %v3973, 16
        %vm4094 = vcmp.lt.s32.totalorder %v3974, 16
        %vm4095 = vcmp.lt.s32.totalorder %v3975, 16
        %vm4096 = vcmp.lt.s32.totalorder %v3976, 16
        %vm4097 = vcmp.lt.s32.totalorder %v3977, 16
        %vm4098 = vcmp.lt.s32.totalorder %v3978, 16
        %vm4099 = vcmp.lt.s32.totalorder %v3979, 16
        %vm4100 = vcmp.lt.s32.totalorder %v3980, 16
        %vm4101 = vcmp.lt.s32.totalorder %v3981, 16
        %vm4102 = vcmp.lt.s32.totalorder %v3982, 16
        %vm4103 = vcmp.lt.s32.totalorder %v3983, 16
        %vm4104 = vcmp.lt.s32.totalorder %v3984, 16
        %vm4105 = vcmp.lt.s32.totalorder %v3985, 16
        %vm4106 = vcmp.lt.s32.totalorder %v3986, 16
        %vm4107 = vcmp.lt.s32.totalorder %v3987, 16
        %vm4108 = vcmp.lt.s32.totalorder %v3988, 16
        %vm4109 = vcmp.lt.s32.totalorder %v3989, 16
        %vm4110 = vcmp.lt.s32.totalorder %v3990, 16
        %vm4111 = vcmp.lt.s32.totalorder %v3991, 16
        %vm4112 = vcmp.lt.s32.totalorder %v3992, 16
        %vm4113 = vcmp.lt.s32.totalorder %v3993, 16
        %vm4114 = vcmp.lt.s32.totalorder %v3994, 16
        %vm4115 = vcmp.lt.s32.totalorder %v3995, 16
        %vm4116 = vcmp.lt.s32.totalorder %v3996, 16
        %vm4117 = vcmp.lt.s32.totalorder %v3997, 16
        %vm4118 = vcmp.lt.s32.totalorder %v3998, 16
        %vm4119 = vcmp.lt.s32.totalorder %v3999, 16
        %vm4120 = vcmp.lt.s32.totalorder %v4000, 16
        %vm4121 = vcmp.lt.s32.totalorder %v4001, 16
        %vm4122 = vmand %vm4062, %vm4092
        %vm4123 = vmand %vm4063, %vm4093
        %vm4124 = vmand %vm4064, %vm4094
        %vm4125 = vmand %vm4065, %vm4095
        %vm4126 = vmand %vm4066, %vm4096
        %vm4127 = vmand %vm4067, %vm4097
        %vm4128 = vmand %vm4068, %vm4098
        %vm4129 = vmand %vm4069, %vm4099
        %vm4130 = vmand %vm4070, %vm4100
        %vm4131 = vmand %vm4071, %vm4101
        %vm4132 = vmand %vm4072, %vm4102
        %vm4133 = vmand %vm4073, %vm4103
        %vm4134 = vmand %vm4074, %vm4104
        %vm4135 = vmand %vm4075, %vm4105
        %vm4136 = vmand %vm4076, %vm4106
        %vm4137 = vmand %vm4077, %vm4107
        %vm4138 = vmand %vm4078, %vm4108
        %vm4139 = vmand %vm4079, %vm4109
        %vm4140 = vmand %vm4080, %vm4110
        %vm4141 = vmand %vm4081, %vm4111
        %vm4142 = vmand %vm4082, %vm4112
        %vm4143 = vmand %vm4083, %vm4113
        %vm4144 = vmand %vm4084, %vm4114
        %vm4145 = vmand %vm4085, %vm4115
        %vm4146 = vmand %vm4086, %vm4116
        %vm4147 = vmand %vm4087, %vm4117
        %vm4148 = vmand %vm4088, %vm4118
        %vm4149 = vmand %vm4089, %vm4119
        %vm4150 = vmand %vm4090, %vm4120
        %vm4151 = vmand %vm4091, %vm4121
        %v4152 = vsel %vm4122, 1, 0
        %v4153 = vsel %vm4123, 1, 0
        %v4154 = vsel %vm4124, 1, 0
        %v4155 = vsel %vm4125, 1, 0
        %v4156 = vsel %vm4126, 1, 0
        %v4157 = vsel %vm4127, 1, 0
        %v4158 = vsel %vm4128, 1, 0
        %v4159 = vsel %vm4129, 1, 0
        %v4160 = vsel %vm4130, 1, 0
        %v4161 = vsel %vm4131, 1, 0
        %v4162 = vsel %vm4132, 1, 0
        %v4163 = vsel %vm4133, 1, 0
        %v4164 = vsel %vm4134, 1, 0
        %v4165 = vsel %vm4135, 1, 0
        %v4166 = vsel %vm4136, 1, 0
        %v4167 = vsel %vm4137, 1, 0
        %v4168 = vsel %vm4138, 1, 0
        %v4169 = vsel %vm4139, 1, 0
        %v4170 = vsel %vm4140, 1, 0
        %v4171 = vsel %vm4141, 1, 0
        %v4172 = vsel %vm4142, 1, 0
        %v4173 = vsel %vm4143, 1, 0
        %v4174 = vsel %vm4144, 1, 0
        %v4175 = vsel %vm4145, 1, 0
        %v4176 = vsel %vm4146, 1, 0
        %v4177 = vsel %vm4147, 1, 0
        %v4178 = vsel %vm4148, 1, 0
        %v4179 = vsel %vm4149, 1, 0
        %v4180 = vsel %vm4150, 1, 0
        %v4181 = vsel %vm4151, 1, 0
        %v4182 = vcvt.s32.f32 %v4152
        %v4183 = vcvt.s32.f32 %v4153
        %v4184 = vcvt.s32.f32 %v4154
        %v4185 = vcvt.s32.f32 %v4155
        %v4186 = vcvt.s32.f32 %v4156
        %v4187 = vcvt.s32.f32 %v4157
        %v4188 = vcvt.s32.f32 %v4158
        %v4189 = vcvt.s32.f32 %v4159
        %v4190 = vcvt.s32.f32 %v4160
        %v4191 = vcvt.s32.f32 %v4161
        %v4192 = vcvt.s32.f32 %v4162
        %v4193 = vcvt.s32.f32 %v4163
        %v4194 = vcvt.s32.f32 %v4164
        %v4195 = vcvt.s32.f32 %v4165
        %v4196 = vcvt.s32.f32 %v4166
        %v4197 = vcvt.s32.f32 %v4167
        %v4198 = vcvt.s32.f32 %v4168
        %v4199 = vcvt.s32.f32 %v4169
        %v4200 = vcvt.s32.f32 %v4170
        %v4201 = vcvt.s32.f32 %v4171
        %v4202 = vcvt.s32.f32 %v4172
        %v4203 = vcvt.s32.f32 %v4173
        %v4204 = vcvt.s32.f32 %v4174
        %v4205 = vcvt.s32.f32 %v4175
        %v4206 = vcvt.s32.f32 %v4176
        %v4207 = vcvt.s32.f32 %v4177
        %v4208 = vcvt.s32.f32 %v4178
        %v4209 = vcvt.s32.f32 %v4179
        %v4210 = vcvt.s32.f32 %v4180
        %v4211 = vcvt.s32.f32 %v4181
        %v4212 = vmul.f32 %v3363, %v4182
        %v4213 = vmul.f32 %v3366, %v4183
        %v4214 = vmul.f32 %v3371, %v4184
        %v4215 = vmul.f32 %v3374, %v4185
        %v4216 = vmul.f32 %v3379, %v4186
        %v4217 = vmul.f32 %v3382, %v4187
        %v4218 = vmul.f32 %v3387, %v4188
        %v4219 = vmul.f32 %v3390, %v4189
        %v4220 = vmul.f32 %v3395, %v4190
        %v4221 = vmul.f32 %v3398, %v4191
        %v4222 = vmul.f32 %v3403, %v4192
        %v4223 = vmul.f32 %v3406, %v4193
        %v4224 = vmul.f32 %v3411, %v4194
        %v4225 = vmul.f32 %v3414, %v4195
        %v4226 = vmul.f32 %v3419, %v4196
        %v4227 = vmul.f32 %v3422, %v4197
        %v4228 = vmul.f32 %v3427, %v4198
        %v4229 = vmul.f32 %v3430, %v4199
        %v4230 = vmul.f32 %v3435, %v4200
        %v4231 = vmul.f32 %v3438, %v4201
        %v4232 = vmul.f32 %v3443, %v4202
        %v4233 = vmul.f32 %v3446, %v4203
        %v4234 = vmul.f32 %v3451, %v4204
        %v4235 = vmul.f32 %v3454, %v4205
        %v4236 = vmul.f32 %v3459, %v4206
        %v4237 = vmul.f32 %v3462, %v4207
        %v4238 = vmul.f32 %v3467, %v4208
        %v4239 = vmul.f32 %v3470, %v4209
        %v4240 = vmul.f32 %v3475, %v4210
        %v4241 = vmul.f32 %v3478, %v4211
        %v4242 = vadd.f32 %v4212, %v4213
        %v4243 = vadd.f32 %v4242, %v4214
        %v4244 = vadd.f32 %v4243, %v4215
        %v4245 = vadd.f32 %v4244, %v4216
        %v4246 = vadd.f32 %v4245, %v4217
        %v4247 = vadd.f32 %v4246, %v4218
        %v4248 = vadd.f32 %v4247, %v4219
        %v4249 = vadd.f32 %v4248, %v4220
        %v4250 = vadd.f32 %v4249, %v4221
        %v4251 = vadd.f32 %v4250, %v4222
        %v4252 = vadd.f32 %v4251, %v4223
        %v4253 = vadd.f32 %v4252, %v4224
        %v4254 = vadd.f32 %v4253, %v4225
        %v4255 = vadd.f32 %v4254, %v4226
        %v4256 = vadd.f32 %v4255, %v4227
        %v4257 = vadd.f32 %v4256, %v4228
        %v4258 = vadd.f32 %v4257, %v4229
        %v4259 = vadd.f32 %v4258, %v4230
        %v4260 = vadd.f32 %v4259, %v4231
        %v4261 = vadd.f32 %v4260, %v4232
        %v4262 = vadd.f32 %v4261, %v4233
        %v4263 = vadd.f32 %v4262, %v4234
        %v4264 = vadd.f32 %v4263, %v4235
        %v4265 = vadd.f32 %v4264, %v4236
        %v4266 = vadd.f32 %v4265, %v4237
        %v4267 = vadd.f32 %v4266, %v4238
        %v4268 = vadd.f32 %v4267, %v4239
        %v4269 = vadd.f32 %v4268, %v4240
        %v4270 = vadd.f32 %v4269, %v4241
        %v4271 = vrot.slane %v4270, 4
        %v4272 = vadd.f32 %v4270, %v4271
        %v4273 = vrot.slane %v4272, 2
        %v4274 = vadd.f32 %v4272, %v4273
        %v4275 = vrot.slane %v4274, 1
        %v4276 = vadd.f32 %v4274, %v4275
        %v4277 = vmul.f32 %v4212, %v4212
        %v4278 = vmul.f32 %v4213, %v4213
        %v4279 = vmul.f32 %v4214, %v4214
        %v4280 = vmul.f32 %v4215, %v4215
        %v4281 = vmul.f32 %v4216, %v4216
        %v4282 = vmul.f32 %v4217, %v4217
        %v4283 = vmul.f32 %v4218, %v4218
        %v4284 = vmul.f32 %v4219, %v4219
        %v4285 = vmul.f32 %v4220, %v4220
        %v4286 = vmul.f32 %v4221, %v4221
        %v4287 = vmul.f32 %v4222, %v4222
        %v4288 = vmul.f32 %v4223, %v4223
        %v4289 = vmul.f32 %v4224, %v4224
        %v4290 = vmul.f32 %v4225, %v4225
        %v4291 = vmul.f32 %v4226, %v4226
        %v4292 = vmul.f32 %v4227, %v4227
        %v4293 = vmul.f32 %v4228, %v4228
        %v4294 = vmul.f32 %v4229, %v4229
        %v4295 = vmul.f32 %v4230, %v4230
        %v4296 = vmul.f32 %v4231, %v4231
        %v4297 = vmul.f32 %v4232, %v4232
        %v4298 = vmul.f32 %v4233, %v4233
        %v4299 = vmul.f32 %v4234, %v4234
        %v4300 = vmul.f32 %v4235, %v4235
        %v4301 = vmul.f32 %v4236, %v4236
        %v4302 = vmul.f32 %v4237, %v4237
        %v4303 = vmul.f32 %v4238, %v4238
        %v4304 = vmul.f32 %v4239, %v4239
        %v4305 = vmul.f32 %v4240, %v4240
        %v4306 = vmul.f32 %v4241, %v4241
        %v4307 = vadd.f32 %v4277, %v4278
        %v4308 = vadd.f32 %v4307, %v4279
        %v4309 = vadd.f32 %v4308, %v4280
        %v4310 = vadd.f32 %v4309, %v4281
        %v4311 = vadd.f32 %v4310, %v4282
        %v4312 = vadd.f32 %v4311, %v4283
        %v4313 = vadd.f32 %v4312, %v4284
        %v4314 = vadd.f32 %v4313, %v4285
        %v4315 = vadd.f32 %v4314, %v4286
        %v4316 = vadd.f32 %v4315, %v4287
        %v4317 = vadd.f32 %v4316, %v4288
        %v4318 = vadd.f32 %v4317, %v4289
        %v4319 = vadd.f32 %v4318, %v4290
        %v4320 = vadd.f32 %v4319, %v4291
        %v4321 = vadd.f32 %v4320, %v4292
        %v4322 = vadd.f32 %v4321, %v4293
        %v4323 = vadd.f32 %v4322, %v4294
        %v4324 = vadd.f32 %v4323, %v4295
        %v4325 = vadd.f32 %v4324, %v4296
        %v4326 = vadd.f32 %v4325, %v4297
        %v4327 = vadd.f32 %v4326, %v4298
        %v4328 = vadd.f32 %v4327, %v4299
        %v4329 = vadd.f32 %v4328, %v4300
        %v4330 = vadd.f32 %v4329, %v4301
        %v4331 = vadd.f32 %v4330, %v4302
        %v4332 = vadd.f32 %v4331, %v4303
        %v4333 = vadd.f32 %v4332, %v4304
        %v4334 = vadd.f32 %v4333, %v4305
        %v4335 = vadd.f32 %v4334, %v4306
        %v4336 = vrot.slane %v4335, 4
        %v4337 = vadd.f32 %v4335, %v4336
        %v4338 = vrot.slane %v4337, 2
        %v4339 = vadd.f32 %v4337, %v4338
        %v4340 = vrot.slane %v4339, 1
        %v4341 = vadd.f32 %v4339, %v4340
        %vm4342 = vcmask 7168
        %v4343 = vsel %vm4342, %v4182, 0.0
        %v4344 = vsel %vm4342, %v4183, 0.0
        %v4345 = vadd.f32 %v4343, %v4344
        %v4346 = vsel %vm4342, %v4184, 0.0
        %v4347 = vadd.f32 %v4345, %v4346
        %v4348 = vsel %vm4342, %v4185, 0.0
        %v4349 = vadd.f32 %v4347, %v4348
        %v4350 = vsel %vm4342, %v4186, 0.0
        %v4351 = vadd.f32 %v4349, %v4350
        %v4352 = vsel %vm4342, %v4187, 0.0
        %v4353 = vadd.f32 %v4351, %v4352
        %v4354 = vsel %vm4342, %v4188, 0.0
        %v4355 = vadd.f32 %v4353, %v4354
        %v4356 = vsel %vm4342, %v4189, 0.0
        %v4357 = vadd.f32 %v4355, %v4356
        %v4358 = vsel %vm4342, %v4190, 0.0
        %v4359 = vadd.f32 %v4357, %v4358
        %v4360 = vsel %vm4342, %v4191, 0.0
        %v4361 = vadd.f32 %v4359, %v4360
        %v4362 = vsel %vm4342, %v4192, 0.0
        %v4363 = vadd.f32 %v4361, %v4362
        %v4364 = vsel %vm4342, %v4193, 0.0
        %v4365 = vadd.f32 %v4363, %v4364
        %v4366 = vsel %vm4342, %v4194, 0.0
        %v4367 = vadd.f32 %v4365, %v4366
        %v4368 = vsel %vm4342, %v4195, 0.0
        %v4369 = vadd.f32 %v4367, %v4368
        %v4370 = vsel %vm4342, %v4196, 0.0
        %v4371 = vadd.f32 %v4369, %v4370
        %v4372 = vsel %vm4342, %v4197, 0.0
        %v4373 = vadd.f32 %v4371, %v4372
        %v4374 = vsel %vm4342, %v4198, 0.0
        %v4375 = vadd.f32 %v4373, %v4374
        %v4376 = vsel %vm4342, %v4199, 0.0
        %v4377 = vadd.f32 %v4375, %v4376
        %v4378 = vsel %vm4342, %v4200, 0.0
        %v4379 = vadd.f32 %v4377, %v4378
        %v4380 = vsel %vm4342, %v4201, 0.0
        %v4381 = vadd.f32 %v4379, %v4380
        %v4382 = vsel %vm4342, %v4202, 0.0
        %v4383 = vadd.f32 %v4381, %v4382
        %v4384 = vsel %vm4342, %v4203, 0.0
        %v4385 = vadd.f32 %v4383, %v4384
        %v4386 = vsel %vm4342, %v4204, 0.0
        %v4387 = vadd.f32 %v4385, %v4386
        %v4388 = vsel %vm4342, %v4205, 0.0
        %v4389 = vadd.f32 %v4387, %v4388
        %v4390 = vsel %vm4342, %v4206, 0.0
        %v4391 = vadd.f32 %v4389, %v4390
        %v4392 = vsel %vm4342, %v4207, 0.0
        %v4393 = vadd.f32 %v4391, %v4392
        %v4394 = vsel %vm4342, %v4208, 0.0
        %v4395 = vadd.f32 %v4393, %v4394
        %v4396 = vsel %vm4342, %v4209, 0.0
        %v4397 = vadd.f32 %v4395, %v4396
        %v4398 = vsel %vm4342, %v4210, 0.0
        %v4399 = vadd.f32 %v4397, %v4398
        %v4400 = vsel %vm4342, %v4211, 0.0
        %v4401 = vadd.f32 %v4399, %v4400
        %4402 = vadd.xlane.f32.xlu0 %v4401
        %v4403 = vpop.xlane.xlu0 %4402
        %v4404 = vrot.slane %v4403, 4
        %v4405 = vadd.f32 %v4403, %v4404
        %v4406 = vrot.slane %v4405, 2
        %v4407 = vadd.f32 %v4405, %v4406
        %v4408 = vrot.slane %v4407, 1
        %v4409 = vadd.f32 %v4407, %v4408
        %s4410 = vtos %v4409
        %v4411 = vpack.c.bf16 %v3366, %v3363
        %v4412 = vpack.c.bf16 %v3374, %v3371
        %v4413 = vpack.c.bf16 %v3382, %v3379
        %v4414 = vpack.c.bf16 %v3390, %v3387
        %v4415 = vpack.c.bf16 %v3398, %v3395
        %v4416 = vpack.c.bf16 %v3406, %v3403
        %v4417 = vpack.c.bf16 %v3414, %v3411
        %v4418 = vpack.c.bf16 %v3422, %v3419
        %v4419 = vpack.c.bf16 %v3430, %v3427
        %v4420 = vpack.c.bf16 %v3438, %v3435
        %v4421 = vpack.c.bf16 %v3446, %v3443
        %v4422 = vpack.c.bf16 %v3454, %v3451
        %v4423 = vpack.c.bf16 %v3462, %v3459
        %v4424 = vpack.c.bf16 %v3470, %v3467
        %v4425 = vpack.c.bf16 %v3478, %v3475
        %v4441 = vunpack.c.l.b16 %v4411
        %v4442 = vunpack.c.h.b16 %v4411
        %v4443 = vunpack.c.l.b16 %v4412
        %v4444 = vunpack.c.h.b16 %v4412
        %v4445 = vunpack.c.l.b16 %v4413
        %v4446 = vunpack.c.h.b16 %v4413
        %v4447 = vunpack.c.l.b16 %v4414
        %v4448 = vunpack.c.h.b16 %v4414
        %v4449 = vunpack.c.l.b16 %v4415
        %v4450 = vunpack.c.h.b16 %v4415
        %v4451 = vunpack.c.l.b16 %v4416
        %v4452 = vunpack.c.h.b16 %v4416
        %v4453 = vunpack.c.l.b16 %v4417
        %v4454 = vunpack.c.h.b16 %v4417
        %v4455 = vunpack.c.l.b16 %v4418
        %v4456 = vunpack.c.h.b16 %v4418
        %v4457 = vunpack.c.l.b16 %v4419
        %v4458 = vunpack.c.h.b16 %v4419
        %v4459 = vunpack.c.l.b16 %v4420
        %v4460 = vunpack.c.h.b16 %v4420
        %v4461 = vunpack.c.l.b16 %v4421
        %v4462 = vunpack.c.h.b16 %v4421
        %v4463 = vunpack.c.l.b16 %v4422
        %v4464 = vunpack.c.h.b16 %v4422
        %v4465 = vunpack.c.l.b16 %v4423
        %v4466 = vunpack.c.h.b16 %v4423
        %v4467 = vunpack.c.l.b16 %v4424
        %v4468 = vunpack.c.h.b16 %v4424
        %v4469 = vunpack.c.l.b16 %v4425
        %v4470 = vunpack.c.h.b16 %v4425
        %v4471 = vpack.c.b16 %v4441, %v4441
        %v4472 = vpack.c.b16 %v4442, %v4442
        %v4473 = vpack.c.b16 %v4443, %v4443
        %v4474 = vpack.c.b16 %v4444, %v4444
        %v4475 = vpack.c.b16 %v4445, %v4445
        %v4476 = vpack.c.b16 %v4446, %v4446
        %v4477 = vpack.c.b16 %v4447, %v4447
        %v4478 = vpack.c.b16 %v4448, %v4448
        %v4479 = vpack.c.b16 %v4449, %v4449
        %v4480 = vpack.c.b16 %v4450, %v4450
        %v4481 = vpack.c.b16 %v4451, %v4451
        %v4482 = vpack.c.b16 %v4452, %v4452
        %v4483 = vpack.c.b16 %v4453, %v4453
        %v4484 = vpack.c.b16 %v4454, %v4454
        %v4485 = vpack.c.b16 %v4455, %v4455
        %v4486 = vpack.c.b16 %v4456, %v4456
        %v4487 = vpack.c.b16 %v4457, %v4457
        %v4488 = vpack.c.b16 %v4458, %v4458
        %v4489 = vpack.c.b16 %v4459, %v4459
        %v4490 = vpack.c.b16 %v4460, %v4460
        %v4491 = vpack.c.b16 %v4461, %v4461
        %v4492 = vpack.c.b16 %v4462, %v4462
        %v4493 = vpack.c.b16 %v4463, %v4463
        %v4494 = vpack.c.b16 %v4464, %v4464
        %v4495 = vpack.c.b16 %v4465, %v4465
        %v4496 = vpack.c.b16 %v4466, %v4466
        %v4497 = vpack.c.b16 %v4467, %v4467
        %v4498 = vpack.c.b16 %v4468, %v4468
        %v4499 = vpack.c.b16 %v4469, %v4469
        %v4500 = vpack.c.b16 %v4470, %v4470
        %4531 = vst [vmem:[%s233] sm:$0xf] %v4471
        %4532 = vst [vmem:[%s233 + $0x4] sm:$0xf] %v4472
        %4533 = vst [vmem:[%s233 + $0x8] sm:$0xf] %v4473
        %4534 = vst [vmem:[%s233 + $0xc] sm:$0xf] %v4474
        %4535 = vst [vmem:[%s233 + $0x10] sm:$0xf] %v4475
        %4536 = vst [vmem:[%s233 + $0x14] sm:$0xf] %v4476
        %4537 = vst [vmem:[%s233 + $0x18] sm:$0xf] %v4477
        %4538 = vst [vmem:[%s233 + $0x1c] sm:$0xf] %v4478
        %4539 = vst [vmem:[%s233 + $0x20] sm:$0xf] %v4479
        %4540 = vst [vmem:[%s233 + $0x24] sm:$0xf] %v4480
        %4541 = vst [vmem:[%s233 + $0x28] sm:$0xf] %v4481
        %4542 = vst [vmem:[%s233 + $0x2c] sm:$0xf] %v4482
        %4543 = vst [vmem:[%s233 + $0x30] sm:$0xf] %v4483
        %4544 = vst [vmem:[%s233 + $0x34] sm:$0xf] %v4484
        %4545 = vst [vmem:[%s233 + $0x38] sm:$0xf] %v4485
        %4546 = vst [vmem:[%s233 + $0x3c] sm:$0xf] %v4486
        %4547 = vst [vmem:[%s233 + $0x40] sm:$0xf] %v4487
        %4548 = vst [vmem:[%s233 + $0x44] sm:$0xf] %v4488
        %4549 = vst [vmem:[%s233 + $0x48] sm:$0xf] %v4489
        %4550 = vst [vmem:[%s233 + $0x4c] sm:$0xf] %v4490
        %4551 = vst [vmem:[%s233 + $0x50] sm:$0xf] %v4491
        %4552 = vst [vmem:[%s233 + $0x54] sm:$0xf] %v4492
        %4553 = vst [vmem:[%s233 + $0x58] sm:$0xf] %v4493
        %4554 = vst [vmem:[%s233 + $0x5c] sm:$0xf] %v4494
        %4555 = vst [vmem:[%s233 + $0x60] sm:$0xf] %v4495
        %4556 = vst [vmem:[%s233 + $0x64] sm:$0xf] %v4496
        %4557 = vst [vmem:[%s233 + $0x68] sm:$0xf] %v4497
        %4558 = vst [vmem:[%s233 + $0x6c] sm:$0xf] %v4498
        %4559 = vst [vmem:[%s233 + $0x70] sm:$0xf] %v4499
        %4560 = vst [vmem:[%s233 + $0x74] sm:$0xf] %v4500
        %4561 = vst [vmem:[%s240] sm:$0x1] %v4276
        %4562 = vst [vmem:[%s240 + $0x1] sm:$0x1] %v4341
        %v4563 = vstv %s4410
        %v4564 = vadd.f32 %v4563, 0.0
        %4565 = vst [vmem:[%s240 + $0x2] sm:$0x1] %v4564
        %4566 = vst [vmem:[%s240 + $0x3] sm:$0x1f] 0.0
        %s4567 = sand.u32 %s107, 1
        %s4568 = scalar_lea.sflag [#allocation4], %s4567
        %s4569 = sand.u32 %s107, 1
        %s4570 = smul.addr %s4569, 120
        %s4571 = scalar_lea.vmem [#allocation3], %s4570
        %s4572 = sand.u32 %s133, 1
        %s4573 = scalar_lea.sflag [#allocation6], %s4572
        %s4574 = sand.u32 %s133, 1
        %s4575 = smul.addr %s4574, 8
        %s4576 = scalar_lea.vmem [#allocation5], %s4575
        // Predicated region
        $region33: #{tpu_custom_call.1} parent=31 // pred_check
          %p4577 = pneg %p117
        $region34: #{tpu_custom_call.1} parent=31 // pred_check_branch
          %4579 = sbr.rel (%p4577) target = $region36
        $region35: #{tpu_custom_call.1} parent=31 // pred_region
          %s4580 = smul.u32 30, %s22
          %s4582 = ssub.s32 1920, 1920
          %4583 = vsyncadd %s4568, %s4582
          %s4584 = smul.addr %s4580, 64
          %s4585 = scalar_lea.hbm %s3, %s4584
          %s4586 = sshll.u32 %s4571, 4
          %s4587 = int_to_ptr.vmem [resolvable:$true] %s4586
          %4592 = dma.vmem_to_hbm [thread:$0]  %s4587, 1920, %s4585, %s4568, 64, 64, 4
        $region36: #{tpu_custom_call.1} parent=31 // pred_fallthru
          _
        // Predicated region
        $region37: #{tpu_custom_call.1} parent=31 // pred_check
          %p4593 = pneg %p143
        $region38: #{tpu_custom_call.1} parent=31 // pred_check_branch
          %4595 = sbr.rel (%p4593) target = $region40
        $region39: #{tpu_custom_call.1} parent=31 // pred_region
          %s4597 = ssub.s32 128, 128
          %4598 = vsyncadd %s4573, %s4597
          %s4599 = smul.addr %s22, 128
          %s4600 = scalar_lea.hbm %s4, %s4599
          %s4602 = sshll.u32 %s4576, 4
          %s4603 = int_to_ptr.vmem [resolvable:$true] %s4602
          %4605 = dma.vmem_to_hbm [thread:$0]  %s4603, 128, %s4600, %s4573
        $region40: #{tpu_custom_call.1} parent=31 // pred_fallthru
          _
      $region32: #{tpu_custom_call.1} parent=5 // pred_fallthru
        _
      %p4606 = scmp.le.s32.totalorder 2, %s17
      // Predicated region
      $region41: #{tpu_custom_call.1} parent=5 // pred_check
        %p4607 = pneg %p4606
      $region42: #{tpu_custom_call.1} parent=5 // pred_check_branch
        %4609 = sbr.rel (%p4607) target = $region44
      $region43: #{tpu_custom_call.1} parent=5 // pred_region
        %s4610 = ssub.s32 %s17, 2
        // Predicated region
        $region45: #{tpu_custom_call.1} parent=43 // pred_check
          %p4611 = pneg %p123
        $region46: #{tpu_custom_call.1} parent=43 // pred_check_branch
          %4613 = sbr.rel (%p4611) target = $region48
        $region47: #{tpu_custom_call.1} parent=43 // pred_region
          %s4614 = sand.u32 %s108, 1
          %s4615 = scalar_lea.sflag [#allocation4], %s4614
          %s4616 = sand.u32 %s108, 1
          %s4617 = smul.addr %s4616, 120
          %s4618 = scalar_lea.vmem [#allocation3], %s4617
          %4619 = dma.done %s4615, 1920
        $region48: #{tpu_custom_call.1} parent=43 // pred_fallthru
          _
        // Predicated region
        $region49: #{tpu_custom_call.1} parent=43 // pred_check
          %p4620 = pneg %p149
        $region50: #{tpu_custom_call.1} parent=43 // pred_check_branch
          %4622 = sbr.rel (%p4620) target = $region52
        $region51: #{tpu_custom_call.1} parent=43 // pred_region
          %s4623 = sand.u32 %s134, 1
          %s4624 = scalar_lea.sflag [#allocation6], %s4623
          %s4625 = sand.u32 %s134, 1
          %s4626 = smul.addr %s4625, 8
          %s4627 = scalar_lea.vmem [#allocation5], %s4626
          %4628 = dma.done %s4624, 128
        $region52: #{tpu_custom_call.1} parent=43 // pred_fallthru
          _
      $region44: #{tpu_custom_call.1} parent=5 // pred_fallthru
        _
    $region6: #{tpu_custom_call.1} parent=1 // loop_footer
      %s21 = sadd.s32 1, %s17
    $region7: #{tpu_custom_call.1} parent=1 // loop_footer_branch
      %16 = sbr.rel target = $region3
    $region8: #{tpu_custom_call.1} parent=1 // loop_exit
      _
    %4629 = vsyncpa [#allocation4], 1
    %s4630 = scalar_lea.sflag [#allocation4], 1
    %4631 = vsyncpa %s4630, 1
    %4632 = vsyncpa [#allocation6], 1
    %s4633 = scalar_lea.sflag [#allocation6], 1
    %4634 = vsyncpa %s4633, 1

</llo_original>
